<compile_context>
chip_gen: v7x
topology: tpu7x:2x2x1
jax: 0.10.0
libtpu: 0.0.40
codegen_flags: <defaults>
</compile_context>

<pallas_src>
import jax
import jax.numpy as jnp
from jax import lax
from jax.experimental import pallas as pl
from jax.experimental.pallas import tpu as pltpu


# ----------------------------- configuration -----------------------------
EMB_SIZE = 64          # emb_size
MLP_LAYERS = [64]      # layers='[64]' default -> single Linear(128 -> 64)
USER_NUM = 10
ITEM_NUM = 20

_HIGH = lax.Precision.HIGHEST   # keep true f32 matmul precision everywhere


def _round_up(x, m):
    return (x + m - 1) // m * m


def _pad_rows(t, mult=8):
    r = t.shape[0]
    rp = _round_up(r, mult)
    if rp != r:
        t = jnp.pad(t, ((0, rp - r), (0, 0)))
    return t


# ------------------------------- kernel ----------------------------------
def neumf_kernel(uid_ref, iid_ref,
                 u_tab_ref, i_tab_ref,
                 w1u_ref, w1i_ref, b1_ref, wp_mf_ref, wp_h_ref,
                 out_ref):
    tm = uid_ref.shape[0]

    def one_hot(ids_col, num_rows):
        # ids_col: (tm, 1) int32 -> (tm, num_rows) f32 one-hot selector
        row_iota = lax.broadcasted_iota(jnp.int32, (tm, num_rows), 1)
        return (ids_col == row_iota).astype(jnp.float32)

    oh_u = one_hot(uid_ref[...], u_tab_ref.shape[0])       # (tm, U_pad)
    oh_i = one_hot(iid_ref[...], i_tab_ref.shape[0])       # (tm, I_pad)

    # In-VMEM embedding gathers as exact one-hot matmuls (tables are tiny).
    # Each table row is the fused [mf_emb | mlp_emb] vector (2E = 128 lanes),
    # so one matmul per entity gathers both branches at once.
    u_comb = jnp.dot(oh_u, u_tab_ref[...], precision=_HIGH,
                     preferred_element_type=jnp.float32)    # (tm, 2E)
    i_comb = jnp.dot(oh_i, i_tab_ref[...], precision=_HIGH,
                     preferred_element_type=jnp.float32)    # (tm, 2E)

    # GMF branch: elementwise product; wp_mf is zero on the mlp lanes, so a
    # single VPU multiply + lane reduce gives the GMF prediction term.
    gmf = jnp.sum(u_comb * i_comb * wp_mf_ref[...], axis=-1)   # (tm,)

    # MLP branch: concat-free Linear(2E -> L) + ReLU.  w1u/w1i are zero-padded
    # on the mf lanes, so the fused activations multiply them directly:
    #   concat([mlp_u, mlp_i]) @ W1 == u_comb @ w1u_pad + i_comb @ w1i_pad
    h = jnp.dot(u_comb, w1u_ref[...], precision=_HIGH,
                preferred_element_type=jnp.float32)
    h = h + jnp.dot(i_comb, w1i_ref[...], precision=_HIGH,
                    preferred_element_type=jnp.float32)
    h = jnp.maximum(h + b1_ref[...], 0.0)                      # (tm, L)
    # TODO(synk): dropout is identity at inference; training-mode dropout
    # would draw a mask via pltpu.prng_seed / pltpu.stateful_bernoulli here.

    mlp = jnp.sum(h * wp_h_ref[...], axis=-1)                  # (tm,)

    out_ref[...] = (gmf + mlp)[None, :]                        # (1, tm)


# ------------------------------- wrapper ----------------------------------
def neumf_forward(user_id, item_id, params, *, tm=1024):
    """user_id: (B,) int; item_id: (B, N) int -> prediction (B, N) f32."""
    B = user_id.shape[0]
    N = item_id.shape[1]
    E = params["mf_u_emb"].shape[1]
    L = params["mlp_b1"].shape[1]
    M = B * N

    # Row tile: one large lane-dense block per step; tiny problems run as a
    # single grid step covering all (padded) rows.  TM is a lane multiple so
    # the output store is never lane-masked.
    if M <= tm:
        TM = _round_up(max(M, 1), 128)
    else:
        TM = _round_up(tm, 128)
    M_pad = _round_up(M, TM)
    num_tiles = M_pad // TM

    # Flatten ids (u_ids.unsqueeze(-1).repeat((1, N)) equivalent) and pad.
    # Pad rows use id 0; their outputs are discarded after the kernel.
    u_ids = jnp.broadcast_to(user_id[:, None], (B, N)).reshape(M).astype(jnp.int32)
    i_ids = item_id.reshape(M).astype(jnp.int32)
    pad = M_pad - M
    if pad:
        zeros = jnp.zeros((pad,), jnp.int32)
        u_ids = jnp.concatenate([u_ids, zeros])
        i_ids = jnp.concatenate([i_ids, zeros])
    u_ids = u_ids.reshape(M_pad, 1)
    i_ids = i_ids.reshape(M_pad, 1)

    # Fused per-entity feature tables [mf_emb | mlp_emb] (rows padded to a
    # sublane multiple) stay resident in VMEM across the whole grid.
    u_tab = _pad_rows(jnp.concatenate(
        [params["mf_u_emb"], params["mlp_u_emb"]], axis=1))     # (U_pad, 2E)
    i_tab = _pad_rows(jnp.concatenate(
        [params["mf_i_emb"], params["mlp_i_emb"]], axis=1))     # (I_pad, 2E)

    # Zero-pad weights so the kernel never concatenates or slices lanes.
    w1 = params["mlp_w1"]                              # (2E, L)
    zeros_el = jnp.zeros((E, L), jnp.float32)
    w1u = jnp.concatenate([zeros_el, w1[:E]], axis=0)  # (2E, L): mf rows zeroed
    w1i = jnp.concatenate([zeros_el, w1[E:]], axis=0)  # (2E, L): mf rows zeroed
    b1 = params["mlp_b1"]                              # (1, L)
    wp = params["pred_w"]                              # (E + L, 1)
    wp_mf = jnp.concatenate(
        [wp[:E, 0], jnp.zeros((E,), jnp.float32)])[None, :]     # (1, 2E)
    wp_h = wp[E:, 0][None, :]                                   # (1, L)

    def rows_spec(cols):
        return pl.BlockSpec((TM, cols), lambda i: (i, 0))

    def const_spec(shape):
        nd = len(shape)
        return pl.BlockSpec(shape, lambda i, _nd=nd: (0,) * _nd)

    out = pl.pallas_call(
        neumf_kernel,
        out_shape=jax.ShapeDtypeStruct((num_tiles, TM), jnp.float32),
        grid_spec=pltpu.PrefetchScalarGridSpec(
            num_scalar_prefetch=0,
            grid=(num_tiles,),
            in_specs=[
                rows_spec(1),                 # u_ids (streamed per step)
                rows_spec(1),                 # i_ids (streamed per step)
                const_spec(u_tab.shape),      # fused user table   (resident)
                const_spec(i_tab.shape),      # fused item table   (resident)
                const_spec(w1u.shape),        # W1 user half, zero-padded
                const_spec(w1i.shape),        # W1 item half, zero-padded
                const_spec(b1.shape),         # b1
                const_spec(wp_mf.shape),      # prediction weight, GMF lanes
                const_spec(wp_h.shape),       # prediction weight, MLP lanes
            ],
            out_specs=pl.BlockSpec((1, TM), lambda i: (i, 0)),
        ),
        compiler_params=pltpu.CompilerParams(
            dimension_semantics=("parallel",)),
    )(u_ids, i_ids, u_tab, i_tab, w1u, w1i, b1, wp_mf, wp_h)

    return out.reshape(M_pad)[:M].reshape(B, N)


# ------------------------- deterministic params ----------------------------
def init_params(key):
    E = EMB_SIZE
    L = MLP_LAYERS[-1]
    ks = jax.random.split(key, 7)
    std = 0.01
    return {
        "mf_u_emb": std * jax.random.normal(ks[0], (USER_NUM, E), jnp.float32),
        "mf_i_emb": std * jax.random.normal(ks[1], (ITEM_NUM, E), jnp.float32),
        "mlp_u_emb": std * jax.random.normal(ks[2], (USER_NUM, E), jnp.float32),
        "mlp_i_emb": std * jax.random.normal(ks[3], (ITEM_NUM, E), jnp.float32),
        # stored transposed relative to torch.nn.Linear.weight
        "mlp_w1": std * jax.random.normal(ks[4], (2 * E, L), jnp.float32),
        "mlp_b1": std * jax.random.normal(ks[5], (1, L), jnp.float32),
        "pred_w": std * jax.random.normal(ks[6], (E + L, 1), jnp.float32),
    }


def neumf_reference(user_id, item_id, params):
    """Pure-JAX reference for correctness checking."""
    B, N = item_id.shape
    u_ids = jnp.broadcast_to(user_id[:, None], (B, N))
    mf_u = params["mf_u_emb"][u_ids]
    mf_i = params["mf_i_emb"][item_id]
    mlp_u = params["mlp_u_emb"][u_ids]
    mlp_i = params["mlp_i_emb"][item_id]
    mf_vec = mf_u * mf_i
    mlp_vec = jnp.concatenate([mlp_u, mlp_i], axis=-1)
    h = jnp.maximum(
        jnp.dot(mlp_vec, params["mlp_w1"], precision=_HIGH)
        + params["mlp_b1"][0], 0.0)
    out_vec = jnp.concatenate([mf_vec, h], axis=-1)
    return jnp.dot(out_vec, params["pred_w"], precision=_HIGH)[..., 0]


# --------------------------------- main -------------------------------------
if __name__ == "__main__":
    key = jax.random.PRNGKey(0)
    pkey, ukey, ikey = jax.random.split(key, 3)

    params = init_params(pkey)

    B, N = 2, 8   # batch_size=2, 8 candidate items per user  (B*N = 16 rows)
    user_id = jax.random.randint(ukey, (B,), 0, USER_NUM, dtype=jnp.int32)
    item_id = jax.random.randint(ikey, (B, N), 0, ITEM_NUM, dtype=jnp.int32)

    pred = neumf_forward(user_id, item_id, params)
    pred = jax.block_until_ready(pred)

    ref = neumf_reference(user_id, item_id, params)
    assert pred.shape == (B, N)
    assert jnp.allclose(pred, ref, atol=1e-5, rtol=1e-5)

    print("KERNEL_OK")
</pallas_src>

<mosaic_0001>
module attributes {stable_mosaic.version = 11 : i64} {
  func.func @neumf_kernel(%arg0: i32, %arg1: memref<128x1xi32, #tpu.memory_space<vmem>>, %arg2: memref<128x1xi32, #tpu.memory_space<vmem>>, %arg3: memref<16x128xf32, #tpu.memory_space<vmem>>, %arg4: memref<24x128xf32, #tpu.memory_space<vmem>>, %arg5: memref<128x64xf32, #tpu.memory_space<vmem>>, %arg6: memref<128x64xf32, #tpu.memory_space<vmem>>, %arg7: memref<1x64xf32, #tpu.memory_space<vmem>>, %arg8: memref<1x128xf32, #tpu.memory_space<vmem>>, %arg9: memref<1x64xf32, #tpu.memory_space<vmem>>, %arg10: memref<1x128xf32, #tpu.memory_space<vmem>>) attributes {dimension_semantics = [#tpu.dimension_semantics<parallel>], iteration_bounds = array<i64: 1>, scalar_prefetch = 0 : i64, scratch_operands = 0 : i64, tpu.core_type = #tpu.core_type<tc>, window_params = [{transform_indices = @transform_0, window_bounds = array<i64: 128, 1>}, {transform_indices = @transform_1, window_bounds = array<i64: 128, 1>}, {pipeline_mode = #tpu.pipeline_mode<synchronous>, transform_indices = @transform_2, window_bounds = array<i64: 16, 128>}, {pipeline_mode = #tpu.pipeline_mode<synchronous>, transform_indices = @transform_3, window_bounds = array<i64: 24, 128>}, {pipeline_mode = #tpu.pipeline_mode<synchronous>, transform_indices = @transform_4, window_bounds = array<i64: 128, 64>}, {pipeline_mode = #tpu.pipeline_mode<synchronous>, transform_indices = @transform_5, window_bounds = array<i64: 128, 64>}, {pipeline_mode = #tpu.pipeline_mode<synchronous>, transform_indices = @transform_6, window_bounds = array<i64: 1, 64>}, {pipeline_mode = #tpu.pipeline_mode<synchronous>, transform_indices = @transform_7, window_bounds = array<i64: 1, 128>}, {pipeline_mode = #tpu.pipeline_mode<synchronous>, transform_indices = @transform_8, window_bounds = array<i64: 1, 64>}, {transform_indices = @transform_9, window_bounds = array<i64: 1, 128>}]} {
    %c0 = arith.constant 0 : index
    %c0_0 = arith.constant 0 : index
    %0 = vector.load %arg1[%c0, %c0_0] : memref<128x1xi32, #tpu.memory_space<vmem>>, vector<128x1xi32>
    %1 = tpu.iota {dimensions = array<i32: 1>} : vector<128x16xi32>
    %2 = vector.broadcast %0 : vector<128x1xi32> to vector<128x16xi32>
    %3 = arith.cmpi eq, %2, %1 : vector<128x16xi32>
    %4 = arith.extui %3 : vector<128x16xi1> to vector<128x16xi32>
    %5 = arith.sitofp %4 : vector<128x16xi32> to vector<128x16xf32>
    %c0_1 = arith.constant 0 : index
    %c0_2 = arith.constant 0 : index
    %6 = vector.load %arg2[%c0_1, %c0_2] : memref<128x1xi32, #tpu.memory_space<vmem>>, vector<128x1xi32>
    %7 = tpu.iota {dimensions = array<i32: 1>} : vector<128x24xi32>
    %8 = vector.broadcast %6 : vector<128x1xi32> to vector<128x24xi32>
    %9 = arith.cmpi eq, %8, %7 : vector<128x24xi32>
    %10 = arith.extui %9 : vector<128x24xi1> to vector<128x24xi32>
    %11 = arith.sitofp %10 : vector<128x24xi32> to vector<128x24xf32>
    %c0_3 = arith.constant 0 : index
    %c0_4 = arith.constant 0 : index
    %12 = vector.load %arg3[%c0_3, %c0_4] : memref<16x128xf32, #tpu.memory_space<vmem>>, vector<16x128xf32>
    %cst = arith.constant dense<0.000000e+00> : vector<128x128xf32>
    %13 = tpu.matmul %5, %12, %cst {dimension_numbers = #tpu.dot_dimension_numbers<[1], [0], [0], [1], [0, 0, 1, 1], [], []>, precision = #tpu.contract_precision<fp32>} : vector<128x16xf32>, vector<16x128xf32>, vector<128x128xf32> -> vector<128x128xf32>
    %c0_5 = arith.constant 0 : index
    %c0_6 = arith.constant 0 : index
    %14 = vector.load %arg4[%c0_5, %c0_6] : memref<24x128xf32, #tpu.memory_space<vmem>>, vector<24x128xf32>
    %cst_7 = arith.constant dense<0.000000e+00> : vector<128x128xf32>
    %15 = tpu.matmul %11, %14, %cst_7 {dimension_numbers = #tpu.dot_dimension_numbers<[1], [0], [0], [1], [0, 0, 1, 1], [], []>, precision = #tpu.contract_precision<fp32>} : vector<128x24xf32>, vector<24x128xf32>, vector<128x128xf32> -> vector<128x128xf32>
    %16 = arith.mulf %13, %15 : vector<128x128xf32>
    %c0_8 = arith.constant 0 : index
    %c0_9 = arith.constant 0 : index
    %17 = vector.load %arg8[%c0_8, %c0_9] : memref<1x128xf32, #tpu.memory_space<vmem>>, vector<1x128xf32>
    %18 = vector.broadcast %17 : vector<1x128xf32> to vector<128x128xf32>
    %19 = arith.mulf %16, %18 : vector<128x128xf32>
    %cst_10 = arith.constant dense<0.000000e+00> : vector<128xf32>
    %20 = vector.multi_reduction <add>, %19, %cst_10 [1] : vector<128x128xf32> to vector<128xf32>
    %c0_11 = arith.constant 0 : index
    %c0_12 = arith.constant 0 : index
    %21 = vector.load %arg5[%c0_11, %c0_12] : memref<128x64xf32, #tpu.memory_space<vmem>>, vector<128x64xf32>
    %cst_13 = arith.constant dense<0.000000e+00> : vector<128x64xf32>
    %22 = tpu.matmul %13, %21, %cst_13 {dimension_numbers = #tpu.dot_dimension_numbers<[1], [0], [0], [1], [0, 0, 1, 1], [], []>, precision = #tpu.contract_precision<fp32>} : vector<128x128xf32>, vector<128x64xf32>, vector<128x64xf32> -> vector<128x64xf32>
    %c0_14 = arith.constant 0 : index
    %c0_15 = arith.constant 0 : index
    %23 = vector.load %arg6[%c0_14, %c0_15] : memref<128x64xf32, #tpu.memory_space<vmem>>, vector<128x64xf32>
    %cst_16 = arith.constant dense<0.000000e+00> : vector<128x64xf32>
    %24 = tpu.matmul %15, %23, %cst_16 {dimension_numbers = #tpu.dot_dimension_numbers<[1], [0], [0], [1], [0, 0, 1, 1], [], []>, precision = #tpu.contract_precision<fp32>} : vector<128x128xf32>, vector<128x64xf32>, vector<128x64xf32> -> vector<128x64xf32>
    %25 = arith.addf %22, %24 : vector<128x64xf32>
    %c0_17 = arith.constant 0 : index
    %c0_18 = arith.constant 0 : index
    %26 = vector.load %arg7[%c0_17, %c0_18] : memref<1x64xf32, #tpu.memory_space<vmem>>, vector<1x64xf32>
    %27 = vector.broadcast %26 : vector<1x64xf32> to vector<128x64xf32>
    %28 = arith.addf %25, %27 : vector<128x64xf32>
    %cst_19 = arith.constant 0.000000e+00 : f32
    %29 = vector.broadcast %cst_19 : f32 to vector<128x64xf32>
    %30 = arith.maximumf %28, %29 : vector<128x64xf32>
    %c0_20 = arith.constant 0 : index
    %c0_21 = arith.constant 0 : index
    %31 = vector.load %arg9[%c0_20, %c0_21] : memref<1x64xf32, #tpu.memory_space<vmem>>, vector<1x64xf32>
    %32 = vector.broadcast %31 : vector<1x64xf32> to vector<128x64xf32>
    %33 = arith.mulf %30, %32 : vector<128x64xf32>
    %cst_22 = arith.constant dense<0.000000e+00> : vector<128xf32>
    %34 = vector.multi_reduction <add>, %33, %cst_22 [1] : vector<128x64xf32> to vector<128xf32>
    %35 = arith.addf %20, %34 : vector<128xf32>
    %36 = vector.shape_cast %35 : vector<128xf32> to vector<1x128xf32>
    %c0_23 = arith.constant 0 : index
    %c0_24 = arith.constant 0 : index
    %37 = vector.load %arg10[%c0_23, %c0_24] : memref<1x128xf32, #tpu.memory_space<vmem>>, vector<1x128xf32>
    tpu.vector_store %arg10[%c0_23, %c0_24], %36 {strides = array<i32>} : memref<1x128xf32, #tpu.memory_space<vmem>>, vector<1x128xf32>,
    return
  }
  func.func @transform_0(%arg0: i32) -> (i32, i32) {
    %c0_i32 = arith.constant 0 : i32
    %c0_i32_0 = arith.constant 0 : i32
    return %arg0, %c0_i32 : i32, i32
  }
  func.func @transform_1(%arg0: i32) -> (i32, i32) {
    %c0_i32 = arith.constant 0 : i32
    %c0_i32_0 = arith.constant 0 : i32
    return %arg0, %c0_i32 : i32, i32
  }
  func.func @transform_2(%arg0: i32) -> (i32, i32) {
    %c0_i32 = arith.constant 0 : i32
    %c0_i32_0 = arith.constant 0 : i32
    %c0_i32_1 = arith.constant 0 : i32
    return %c0_i32, %c0_i32_0 : i32, i32
  }
  func.func @transform_3(%arg0: i32) -> (i32, i32) {
    %c0_i32 = arith.constant 0 : i32
    %c0_i32_0 = arith.constant 0 : i32
    %c0_i32_1 = arith.constant 0 : i32
    return %c0_i32, %c0_i32_0 : i32, i32
  }
  func.func @transform_4(%arg0: i32) -> (i32, i32) {
    %c0_i32 = arith.constant 0 : i32
    %c0_i32_0 = arith.constant 0 : i32
    %c0_i32_1 = arith.constant 0 : i32
    return %c0_i32, %c0_i32_0 : i32, i32
  }
  func.func @transform_5(%arg0: i32) -> (i32, i32) {
    %c0_i32 = arith.constant 0 : i32
    %c0_i32_0 = arith.constant 0 : i32
    %c0_i32_1 = arith.constant 0 : i32
    return %c0_i32, %c0_i32_0 : i32, i32
  }
  func.func @transform_6(%arg0: i32) -> (i32, i32) {
    %c0_i32 = arith.constant 0 : i32
    %c0_i32_0 = arith.constant 0 : i32
    %c0_i32_1 = arith.constant 0 : i32
    return %c0_i32, %c0_i32_0 : i32, i32
  }
  func.func @transform_7(%arg0: i32) -> (i32, i32) {
    %c0_i32 = arith.constant 0 : i32
    %c0_i32_0 = arith.constant 0 : i32
    %c0_i32_1 = arith.constant 0 : i32
    return %c0_i32, %c0_i32_0 : i32, i32
  }
  func.func @transform_8(%arg0: i32) -> (i32, i32) {
    %c0_i32 = arith.constant 0 : i32
    %c0_i32_0 = arith.constant 0 : i32
    %c0_i32_1 = arith.constant 0 : i32
    return %c0_i32, %c0_i32_0 : i32, i32
  }
  func.func @transform_9(%arg0: i32) -> (i32, i32) {
    %c0_i32 = arith.constant 0 : i32
    %c0_i32_0 = arith.constant 0 : i32
    return %arg0, %c0_i32 : i32, i32
  }
}

</mosaic_0001>

<llo_original>
// kernel: tpu_custom_call.1
$region0: #{tpu_custom_call.1}
  #allocation0 [shape = 'u32[]', space=smem, size = 0x4, offset = 0x4, fixed_abs, tag = 'smem constant byte address 0x4 - core index']
  #allocation1 [shape = 'u32[144,128]{1,0:T(1,128)}', space=vmem, size = 0x12000, scoped, tag = 'internal scratch']
  %s0 = inlined_call_operand.vmem [shape: s32[128,1], index: 0, kind: input, shape index: {}]
  %s1 = inlined_call_operand.vmem [shape: s32[128,1], index: 1, kind: input, shape index: {}]
  %s2 = inlined_call_operand.vmem [shape: f32[16,128], index: 2, kind: input, shape index: {}]
  %s3 = inlined_call_operand.vmem [shape: f32[24,128], index: 3, kind: input, shape index: {}]
  %s4 = inlined_call_operand.vmem [shape: f32[128,64], index: 4, kind: input, shape index: {}]
  %s5 = inlined_call_operand.vmem [shape: f32[128,64], index: 5, kind: input, shape index: {}]
  %s6 = inlined_call_operand.vmem [shape: f32[1,64], index: 6, kind: input, shape index: {}]
  %s7 = inlined_call_operand.vmem [shape: f32[1,128], index: 7, kind: input, shape index: {}]
  %s8 = inlined_call_operand.vmem [shape: f32[1,64], index: 8, kind: input, shape index: {}]
  %s9 = inlined_call_operand.hbm [shape: f32[1,128], index: 9, kind: output, shape index: {}]
  %s10 = sld [smem:[#allocation0]]
  $region46: #{tpu_custom_call.1} parent=0
    _
  %s12 = ssub.s32 1, %s10
  %s13 = scalar_select 0, %s12, %s10
  $region1: #{tpu_custom_call.1} parent=0
    #allocation2 [shape = 'u8[512]{0}', space=vmem, size = 0x400, scoped, tag = 'output window, operand 0, single buffered']
    #allocation3 [shape = 's32[1]{0}', space=sflag, size = 0x4, scoped, tag = 'scoped memory for tpu_custom_call.1']
    %14 = vsyncpa [#allocation3], 0
    // Predicated region
    $region2: #{tpu_custom_call.1} parent=1 // pred_check
      _
    $region3: #{tpu_custom_call.1} parent=1 // pred_check_branch
      %16 = sbr.rel (0) target = $region5
    $region4: #{tpu_custom_call.1} parent=1 // pred_region
      _
    $region5: #{tpu_custom_call.1} parent=1 // pred_fallthru
      _
    // Predicated region
    $region6: #{tpu_custom_call.1} parent=1 // pred_check
      _
    $region7: #{tpu_custom_call.1} parent=1 // pred_check_branch
      %18 = sbr.rel (0) target = $region9
    $region8: #{tpu_custom_call.1} parent=1 // pred_region
      _
    $region9: #{tpu_custom_call.1} parent=1 // pred_fallthru
      _
    // Predicated region
    $region10: #{tpu_custom_call.1} parent=1 // pred_check
      _
    $region11: #{tpu_custom_call.1} parent=1 // pred_check_branch
      %20 = sbr.rel (0) target = $region13
    $region12: #{tpu_custom_call.1} parent=1 // pred_region
      _
    $region13: #{tpu_custom_call.1} parent=1 // pred_fallthru
      _
    // Predicated region
    $region14: #{tpu_custom_call.1} parent=1 // pred_check
      _
    $region15: #{tpu_custom_call.1} parent=1 // pred_check_branch
      %22 = sbr.rel (0) target = $region17
    $region16: #{tpu_custom_call.1} parent=1 // pred_region
      _
    $region17: #{tpu_custom_call.1} parent=1 // pred_fallthru
      _
    // Predicated region
    $region18: #{tpu_custom_call.1} parent=1 // pred_check
      _
    $region19: #{tpu_custom_call.1} parent=1 // pred_check_branch
      %24 = sbr.rel (0) target = $region21
    $region20: #{tpu_custom_call.1} parent=1 // pred_region
      _
    $region21: #{tpu_custom_call.1} parent=1 // pred_fallthru
      _
    // Predicated region
    $region22: #{tpu_custom_call.1} parent=1 // pred_check
      _
    $region23: #{tpu_custom_call.1} parent=1 // pred_check_branch
      %26 = sbr.rel (0) target = $region25
    $region24: #{tpu_custom_call.1} parent=1 // pred_region
      _
    $region25: #{tpu_custom_call.1} parent=1 // pred_fallthru
      _
    // Predicated region
    $region26: #{tpu_custom_call.1} parent=1 // pred_check
      _
    $region27: #{tpu_custom_call.1} parent=1 // pred_check_branch
      %28 = sbr.rel (0) target = $region29
    $region28: #{tpu_custom_call.1} parent=1 // pred_region
      _
    $region29: #{tpu_custom_call.1} parent=1 // pred_fallthru
      _
    // Predicated region
    $region30: #{tpu_custom_call.1} parent=1 // pred_check
      _
    $region31: #{tpu_custom_call.1} parent=1 // pred_check_branch
      %30 = sbr.rel (0) target = $region33
    $region32: #{tpu_custom_call.1} parent=1 // pred_region
      _
    $region33: #{tpu_custom_call.1} parent=1 // pred_fallthru
      _
    // Predicated region
    $region34: #{tpu_custom_call.1} parent=1 // pred_check
      _
    $region35: #{tpu_custom_call.1} parent=1 // pred_check_branch
      %32 = sbr.rel (0) target = $region37
    $region36: #{tpu_custom_call.1} parent=1 // pred_region
      _
    $region37: #{tpu_custom_call.1} parent=1 // pred_fallthru
      _
    %v33 = vld [vmem:[%s0] sm:$0xff]
    %v34 = vld [vmem:[%s0 + $0x8] sm:$0xff]
    %v35 = vld [vmem:[%s0 + $0x10] sm:$0xff]
    %v36 = vld [vmem:[%s0 + $0x18] sm:$0xff]
    %v37 = vld [vmem:[%s0 + $0x20] sm:$0xff]
    %v38 = vld [vmem:[%s0 + $0x28] sm:$0xff]
    %v39 = vld [vmem:[%s0 + $0x30] sm:$0xff]
    %v40 = vld [vmem:[%s0 + $0x38] sm:$0xff]
    %v41 = vld [vmem:[%s0 + $0x40] sm:$0xff]
    %v42 = vld [vmem:[%s0 + $0x48] sm:$0xff]
    %v43 = vld [vmem:[%s0 + $0x50] sm:$0xff]
    %v44 = vld [vmem:[%s0 + $0x58] sm:$0xff]
    %v45 = vld [vmem:[%s0 + $0x60] sm:$0xff]
    %v46 = vld [vmem:[%s0 + $0x68] sm:$0xff]
    %v47 = vld [vmem:[%s0 + $0x70] sm:$0xff]
    %v48 = vld [vmem:[%s0 + $0x78] sm:$0xff]
    %v49 = vlaneseq
    %v50 = vand.u32 %v49, 127
    %51 = vset.pattern.permute.xlu0 0
    %52 = vperm.xlu0 %51, %v33
    %v53 = vpop.permute.xlu0 %52
    %54 = vset.pattern.permute.xlu0 0
    %55 = vperm.xlu0 %54, %v34
    %v56 = vpop.permute.xlu0 %55
    %57 = vset.pattern.permute.xlu0 0
    %58 = vperm.xlu0 %57, %v35
    %v59 = vpop.permute.xlu0 %58
    %60 = vset.pattern.permute.xlu0 0
    %61 = vperm.xlu0 %60, %v36
    %v62 = vpop.permute.xlu0 %61
    %63 = vset.pattern.permute.xlu0 0
    %64 = vperm.xlu0 %63, %v37
    %v65 = vpop.permute.xlu0 %64
    %66 = vset.pattern.permute.xlu0 0
    %67 = vperm.xlu0 %66, %v38
    %v68 = vpop.permute.xlu0 %67
    %69 = vset.pattern.permute.xlu0 0
    %70 = vperm.xlu0 %69, %v39
    %v71 = vpop.permute.xlu0 %70
    %72 = vset.pattern.permute.xlu0 0
    %73 = vperm.xlu0 %72, %v40
    %v74 = vpop.permute.xlu0 %73
    %75 = vset.pattern.permute.xlu0 0
    %76 = vperm.xlu0 %75, %v41
    %v77 = vpop.permute.xlu0 %76
    %78 = vset.pattern.permute.xlu0 0
    %79 = vperm.xlu0 %78, %v42
    %v80 = vpop.permute.xlu0 %79
    %81 = vset.pattern.permute.xlu0 0
    %82 = vperm.xlu0 %81, %v43
    %v83 = vpop.permute.xlu0 %82
    %84 = vset.pattern.permute.xlu0 0
    %85 = vperm.xlu0 %84, %v44
    %v86 = vpop.permute.xlu0 %85
    %87 = vset.pattern.permute.xlu0 0
    %88 = vperm.xlu0 %87, %v45
    %v89 = vpop.permute.xlu0 %88
    %90 = vset.pattern.permute.xlu0 0
    %91 = vperm.xlu0 %90, %v46
    %v92 = vpop.permute.xlu0 %91
    %93 = vset.pattern.permute.xlu0 0
    %94 = vperm.xlu0 %93, %v47
    %v95 = vpop.permute.xlu0 %94
    %96 = vset.pattern.permute.xlu0 0
    %97 = vperm.xlu0 %96, %v48
    %v98 = vpop.permute.xlu0 %97
    %vm99 = vcmp.eq.s32.totalorder %v53, %v50
    %vm100 = vcmp.eq.s32.totalorder %v56, %v50
    %vm101 = vcmp.eq.s32.totalorder %v59, %v50
    %vm102 = vcmp.eq.s32.totalorder %v62, %v50
    %vm103 = vcmp.eq.s32.totalorder %v65, %v50
    %vm104 = vcmp.eq.s32.totalorder %v68, %v50
    %vm105 = vcmp.eq.s32.totalorder %v71, %v50
    %vm106 = vcmp.eq.s32.totalorder %v74, %v50
    %vm107 = vcmp.eq.s32.totalorder %v77, %v50
    %vm108 = vcmp.eq.s32.totalorder %v80, %v50
    %vm109 = vcmp.eq.s32.totalorder %v83, %v50
    %vm110 = vcmp.eq.s32.totalorder %v86, %v50
    %vm111 = vcmp.eq.s32.totalorder %v89, %v50
    %vm112 = vcmp.eq.s32.totalorder %v92, %v50
    %vm113 = vcmp.eq.s32.totalorder %v95, %v50
    %vm114 = vcmp.eq.s32.totalorder %v98, %v50
    %v115 = vsel %vm99, 1, 0
    %v116 = vsel %vm100, 1, 0
    %v117 = vsel %vm101, 1, 0
    %v118 = vsel %vm102, 1, 0
    %v119 = vsel %vm103, 1, 0
    %v120 = vsel %vm104, 1, 0
    %v121 = vsel %vm105, 1, 0
    %v122 = vsel %vm106, 1, 0
    %v123 = vsel %vm107, 1, 0
    %v124 = vsel %vm108, 1, 0
    %v125 = vsel %vm109, 1, 0
    %v126 = vsel %vm110, 1, 0
    %v127 = vsel %vm111, 1, 0
    %v128 = vsel %vm112, 1, 0
    %v129 = vsel %vm113, 1, 0
    %v130 = vsel %vm114, 1, 0
    %v131 = vcvt.s32.f32 %v115
    %v132 = vcvt.s32.f32 %v116
    %v133 = vcvt.s32.f32 %v117
    %v134 = vcvt.s32.f32 %v118
    %v135 = vcvt.s32.f32 %v119
    %v136 = vcvt.s32.f32 %v120
    %v137 = vcvt.s32.f32 %v121
    %v138 = vcvt.s32.f32 %v122
    %v139 = vcvt.s32.f32 %v123
    %v140 = vcvt.s32.f32 %v124
    %v141 = vcvt.s32.f32 %v125
    %v142 = vcvt.s32.f32 %v126
    %v143 = vcvt.s32.f32 %v127
    %v144 = vcvt.s32.f32 %v128
    %v145 = vcvt.s32.f32 %v129
    %v146 = vcvt.s32.f32 %v130
    %v147 = vld [vmem:[%s1] sm:$0xff]
    %v148 = vld [vmem:[%s1 + $0x8] sm:$0xff]
    %v149 = vld [vmem:[%s1 + $0x10] sm:$0xff]
    %v150 = vld [vmem:[%s1 + $0x18] sm:$0xff]
    %v151 = vld [vmem:[%s1 + $0x20] sm:$0xff]
    %v152 = vld [vmem:[%s1 + $0x28] sm:$0xff]
    %v153 = vld [vmem:[%s1 + $0x30] sm:$0xff]
    %v154 = vld [vmem:[%s1 + $0x38] sm:$0xff]
    %v155 = vld [vmem:[%s1 + $0x40] sm:$0xff]
    %v156 = vld [vmem:[%s1 + $0x48] sm:$0xff]
    %v157 = vld [vmem:[%s1 + $0x50] sm:$0xff]
    %v158 = vld [vmem:[%s1 + $0x58] sm:$0xff]
    %v159 = vld [vmem:[%s1 + $0x60] sm:$0xff]
    %v160 = vld [vmem:[%s1 + $0x68] sm:$0xff]
    %v161 = vld [vmem:[%s1 + $0x70] sm:$0xff]
    %v162 = vld [vmem:[%s1 + $0x78] sm:$0xff]
    %163 = vset.pattern.permute.xlu0 0
    %164 = vperm.xlu0 %163, %v147
    %v165 = vpop.permute.xlu0 %164
    %166 = vset.pattern.permute.xlu0 0
    %167 = vperm.xlu0 %166, %v148
    %v168 = vpop.permute.xlu0 %167
    %169 = vset.pattern.permute.xlu0 0
    %170 = vperm.xlu0 %169, %v149
    %v171 = vpop.permute.xlu0 %170
    %172 = vset.pattern.permute.xlu0 0
    %173 = vperm.xlu0 %172, %v150
    %v174 = vpop.permute.xlu0 %173
    %175 = vset.pattern.permute.xlu0 0
    %176 = vperm.xlu0 %175, %v151
    %v177 = vpop.permute.xlu0 %176
    %178 = vset.pattern.permute.xlu0 0
    %179 = vperm.xlu0 %178, %v152
    %v180 = vpop.permute.xlu0 %179
    %181 = vset.pattern.permute.xlu0 0
    %182 = vperm.xlu0 %181, %v153
    %v183 = vpop.permute.xlu0 %182
    %184 = vset.pattern.permute.xlu0 0
    %185 = vperm.xlu0 %184, %v154
    %v186 = vpop.permute.xlu0 %185
    %187 = vset.pattern.permute.xlu0 0
    %188 = vperm.xlu0 %187, %v155
    %v189 = vpop.permute.xlu0 %188
    %190 = vset.pattern.permute.xlu0 0
    %191 = vperm.xlu0 %190, %v156
    %v192 = vpop.permute.xlu0 %191
    %193 = vset.pattern.permute.xlu0 0
    %194 = vperm.xlu0 %193, %v157
    %v195 = vpop.permute.xlu0 %194
    %196 = vset.pattern.permute.xlu0 0
    %197 = vperm.xlu0 %196, %v158
    %v198 = vpop.permute.xlu0 %197
    %199 = vset.pattern.permute.xlu0 0
    %200 = vperm.xlu0 %199, %v159
    %v201 = vpop.permute.xlu0 %200
    %202 = vset.pattern.permute.xlu0 0
    %203 = vperm.xlu0 %202, %v160
    %v204 = vpop.permute.xlu0 %203
    %205 = vset.pattern.permute.xlu0 0
    %206 = vperm.xlu0 %205, %v161
    %v207 = vpop.permute.xlu0 %206
    %208 = vset.pattern.permute.xlu0 0
    %209 = vperm.xlu0 %208, %v162
    %v210 = vpop.permute.xlu0 %209
    %vm211 = vcmp.eq.s32.totalorder %v165, %v50
    %vm212 = vcmp.eq.s32.totalorder %v168, %v50
    %vm213 = vcmp.eq.s32.totalorder %v171, %v50
    %vm214 = vcmp.eq.s32.totalorder %v174, %v50
    %vm215 = vcmp.eq.s32.totalorder %v177, %v50
    %vm216 = vcmp.eq.s32.totalorder %v180, %v50
    %vm217 = vcmp.eq.s32.totalorder %v183, %v50
    %vm218 = vcmp.eq.s32.totalorder %v186, %v50
    %vm219 = vcmp.eq.s32.totalorder %v189, %v50
    %vm220 = vcmp.eq.s32.totalorder %v192, %v50
    %vm221 = vcmp.eq.s32.totalorder %v195, %v50
    %vm222 = vcmp.eq.s32.totalorder %v198, %v50
    %vm223 = vcmp.eq.s32.totalorder %v201, %v50
    %vm224 = vcmp.eq.s32.totalorder %v204, %v50
    %vm225 = vcmp.eq.s32.totalorder %v207, %v50
    %vm226 = vcmp.eq.s32.totalorder %v210, %v50
    %v227 = vsel %vm211, 1, 0
    %v228 = vsel %vm212, 1, 0
    %v229 = vsel %vm213, 1, 0
    %v230 = vsel %vm214, 1, 0
    %v231 = vsel %vm215, 1, 0
    %v232 = vsel %vm216, 1, 0
    %v233 = vsel %vm217, 1, 0
    %v234 = vsel %vm218, 1, 0
    %v235 = vsel %vm219, 1, 0
    %v236 = vsel %vm220, 1, 0
    %v237 = vsel %vm221, 1, 0
    %v238 = vsel %vm222, 1, 0
    %v239 = vsel %vm223, 1, 0
    %v240 = vsel %vm224, 1, 0
    %v241 = vsel %vm225, 1, 0
    %v242 = vsel %vm226, 1, 0
    %v243 = vcvt.s32.f32 %v227
    %v244 = vcvt.s32.f32 %v228
    %v245 = vcvt.s32.f32 %v229
    %v246 = vcvt.s32.f32 %v230
    %v247 = vcvt.s32.f32 %v231
    %v248 = vcvt.s32.f32 %v232
    %v249 = vcvt.s32.f32 %v233
    %v250 = vcvt.s32.f32 %v234
    %v251 = vcvt.s32.f32 %v235
    %v252 = vcvt.s32.f32 %v236
    %v253 = vcvt.s32.f32 %v237
    %v254 = vcvt.s32.f32 %v238
    %v255 = vcvt.s32.f32 %v239
    %v256 = vcvt.s32.f32 %v240
    %v257 = vcvt.s32.f32 %v241
    %v258 = vcvt.s32.f32 %v242
    %v259 = vld [vmem:[%s2] sm:$0xff]
    %v260 = vld [vmem:[%s2 + $0x8] sm:$0xff]
    %vm261 = vcmask 130048
    %v263 = vsel %vm261, %v131, 0
    %v266 = vsel %vm261, %v132, 0
    %v269 = vsel %vm261, %v133, 0
    %v272 = vsel %vm261, %v134, 0
    %v275 = vsel %vm261, %v135, 0
    %v278 = vsel %vm261, %v136, 0
    %v281 = vsel %vm261, %v137, 0
    %v284 = vsel %vm261, %v138, 0
    %v287 = vsel %vm261, %v139, 0
    %v290 = vsel %vm261, %v140, 0
    %v293 = vsel %vm261, %v141, 0
    %v296 = vsel %vm261, %v142, 0
    %v299 = vsel %vm261, %v143, 0
    %v302 = vsel %vm261, %v144, 0
    %v305 = vsel %vm261, %v145, 0
    %v308 = vsel %vm261, %v146, 0
    %310 = vmatprep.subr.mxu0 0.0
    %v311 = vand.u32 %v259, 4294901760
    %312 = vmatpush1.msra.mxu0 %v311
    %313 = vmatprep.subr.mxu0 0.0
    %v314 = vand.u32 %v260, 4294901760
    %315 = vmatpush1.msra.mxu0 %v314
    %316 = vmatprep.subr.mxu0 0.0
    %317 = vmatpush1.msra.mxu0 0.0
    %318 = vmatprep.subr.mxu0 0.0
    %319 = vmatpush1.msra.mxu0 0.0
    %320 = vmatprep.subr.mxu0 0.0
    %321 = vmatpush1.msra.mxu0 0.0
    %322 = vmatprep.subr.mxu0 0.0
    %323 = vmatpush1.msra.mxu0 0.0
    %324 = vmatprep.subr.mxu0 0.0
    %325 = vmatpush1.msra.mxu0 0.0
    %326 = vmatprep.subr.mxu0 0.0
    %327 = vmatpush1.msra.mxu0 0.0
    %328 = vmatprep.subr.mxu0 0.0
    %329 = vmatpush1.msra.mxu0 0.0
    %330 = vmatprep.subr.mxu0 0.0
    %331 = vmatpush1.msra.mxu0 0.0
    %332 = vmatprep.subr.mxu0 0.0
    %333 = vmatpush1.msra.mxu0 0.0
    %334 = vmatprep.subr.mxu0 0.0
    %335 = vmatpush1.msra.mxu0 0.0
    %336 = vmatprep.subr.mxu0 0.0
    %337 = vmatpush1.msra.mxu0 0.0
    %338 = vmatprep.subr.mxu0 0.0
    %339 = vmatpush1.msra.mxu0 0.0
    %340 = vmatprep.subr.mxu0 0.0
    %341 = vmatpush1.msra.mxu0 0.0
    %342 = vmatprep.subr.mxu0 0.0
    %343 = vmatpush1.msra.mxu0 0.0
    %344 = vmatprep.subr.mxu0 0.0
    %345 = vmatpush1.msra.mxu0 0.0
    %346 = vmatprep.subr.mxu0 0.0
    %347 = vmatpush1.msra.mxu0 0.0
    %348 = vmatprep.subr.mxu0 0.0
    %349 = vmatpush1.msra.mxu0 0.0
    %350 = vmatprep.subr.mxu0 0.0
    %351 = vmatpush1.msra.mxu0 0.0
    %352 = vmatprep.subr.mxu0 0.0
    %353 = vmatpush1.msra.mxu0 0.0
    %354 = vmatprep.subr.mxu0 0.0
    %355 = vmatpush1.msra.mxu0 0.0
    %356 = vmatprep.subr.mxu0 0.0
    %357 = vmatpush1.msra.mxu0 0.0
    %358 = vmatprep.subr.mxu0 0.0
    %359 = vmatpush1.msra.mxu0 0.0
    %360 = vmatprep.subr.mxu0 0.0
    %361 = vmatpush1.msra.mxu0 0.0
    %362 = vmatprep.subr.mxu0 0.0
    %363 = vmatpush1.msra.mxu0 0.0
    %364 = vmatprep.subr.mxu0 0.0
    %365 = vmatpush1.msra.mxu0 0.0
    %366 = vmatprep.subr.mxu0 0.0
    %367 = vmatpush1.msra.mxu0 0.0
    %368 = vmatprep.subr.mxu0 0.0
    %369 = vmatpush1.msra.mxu0 0.0
    %370 = vmatprep.subr.mxu0 0.0
    %371 = vmatpush1.msra.mxu0 0.0
    %372 = vmatprep.subr.mxu0 0.0
    %373 = vmatpush1.msra.mxu0 0.0
    %374 = vmatprep.subr.mxu0 0.0
    %375 = vmatpush1.msra.mxu0 0.0
    %376 = vmatprep.mubr.f32.mxu0 0.0
    %v377 = vand.u32 %v263, 4294901760
    %v378 = vsub.f32 %v263, %v377
    %v379 = vand.u32 %v378, 4294901760
    %v380 = vsub.f32 %v378, %v379
    %v381 = vand.u32 %v380, 4294901760
    %382 = vmatmul.mubr.f32.gmra.mrb[0].mxu0 %v381
    %v383 = vpop.f32.mrb[0].mxu0
    %v384 = vadd.f32 0.0, %v383
    %v385 = vpop.f32.mrb[0].mxu0
    %386 = vmatprep.mubr.f32.mxu0 0.0
    %v387 = vand.u32 %v266, 4294901760
    %v388 = vsub.f32 %v266, %v387
    %v389 = vand.u32 %v388, 4294901760
    %v390 = vsub.f32 %v388, %v389
    %v391 = vand.u32 %v390, 4294901760
    %392 = vmatmul.mubr.f32.gmra.mrb[0].mxu0 %v391
    %v393 = vpop.f32.mrb[0].mxu0
    %v394 = vadd.f32 0.0, %v393
    %v395 = vpop.f32.mrb[0].mxu0
    %396 = vmatprep.mubr.f32.mxu0 0.0
    %v397 = vand.u32 %v269, 4294901760
    %v398 = vsub.f32 %v269, %v397
    %v399 = vand.u32 %v398, 4294901760
    %v400 = vsub.f32 %v398, %v399
    %v401 = vand.u32 %v400, 4294901760
    %402 = vmatmul.mubr.f32.gmra.mrb[0].mxu0 %v401
    %v403 = vpop.f32.mrb[0].mxu0
    %v404 = vadd.f32 0.0, %v403
    %v405 = vpop.f32.mrb[0].mxu0
    %406 = vmatprep.mubr.f32.mxu0 0.0
    %v407 = vand.u32 %v272, 4294901760
    %v408 = vsub.f32 %v272, %v407
    %v409 = vand.u32 %v408, 4294901760
    %v410 = vsub.f32 %v408, %v409
    %v411 = vand.u32 %v410, 4294901760
    %412 = vmatmul.mubr.f32.gmra.mrb[0].mxu0 %v411
    %v413 = vpop.f32.mrb[0].mxu0
    %v414 = vadd.f32 0.0, %v413
    %v415 = vpop.f32.mrb[0].mxu0
    %416 = vmatprep.mubr.f32.mxu0 0.0
    %v417 = vand.u32 %v275, 4294901760
    %v418 = vsub.f32 %v275, %v417
    %v419 = vand.u32 %v418, 4294901760
    %v420 = vsub.f32 %v418, %v419
    %v421 = vand.u32 %v420, 4294901760
    %422 = vmatmul.mubr.f32.gmra.mrb[0].mxu0 %v421
    %v423 = vpop.f32.mrb[0].mxu0
    %v424 = vadd.f32 0.0, %v423
    %v425 = vpop.f32.mrb[0].mxu0
    %426 = vmatprep.mubr.f32.mxu0 0.0
    %v427 = vand.u32 %v278, 4294901760
    %v428 = vsub.f32 %v278, %v427
    %v429 = vand.u32 %v428, 4294901760
    %v430 = vsub.f32 %v428, %v429
    %v431 = vand.u32 %v430, 4294901760
    %432 = vmatmul.mubr.f32.gmra.mrb[0].mxu0 %v431
    %v433 = vpop.f32.mrb[0].mxu0
    %v434 = vadd.f32 0.0, %v433
    %v435 = vpop.f32.mrb[0].mxu0
    %436 = vmatprep.mubr.f32.mxu0 0.0
    %v437 = vand.u32 %v281, 4294901760
    %v438 = vsub.f32 %v281, %v437
    %v439 = vand.u32 %v438, 4294901760
    %v440 = vsub.f32 %v438, %v439
    %v441 = vand.u32 %v440, 4294901760
    %442 = vmatmul.mubr.f32.gmra.mrb[0].mxu0 %v441
    %v443 = vpop.f32.mrb[0].mxu0
    %v444 = vadd.f32 0.0, %v443
    %v445 = vpop.f32.mrb[0].mxu0
    %446 = vmatprep.mubr.f32.mxu0 0.0
    %v447 = vand.u32 %v284, 4294901760
    %v448 = vsub.f32 %v284, %v447
    %v449 = vand.u32 %v448, 4294901760
    %v450 = vsub.f32 %v448, %v449
    %v451 = vand.u32 %v450, 4294901760
    %452 = vmatmul.mubr.f32.gmra.mrb[0].mxu0 %v451
    %v453 = vpop.f32.mrb[0].mxu0
    %v454 = vadd.f32 0.0, %v453
    %v455 = vpop.f32.mrb[0].mxu0
    %456 = vmatprep.mubr.f32.mxu0 0.0
    %v457 = vand.u32 %v287, 4294901760
    %v458 = vsub.f32 %v287, %v457
    %v459 = vand.u32 %v458, 4294901760
    %v460 = vsub.f32 %v458, %v459
    %v461 = vand.u32 %v460, 4294901760
    %462 = vmatmul.mubr.f32.gmra.mrb[0].mxu0 %v461
    %v463 = vpop.f32.mrb[0].mxu0
    %v464 = vadd.f32 0.0, %v463
    %v465 = vpop.f32.mrb[0].mxu0
    %466 = vmatprep.mubr.f32.mxu0 0.0
    %v467 = vand.u32 %v290, 4294901760
    %v468 = vsub.f32 %v290, %v467
    %v469 = vand.u32 %v468, 4294901760
    %v470 = vsub.f32 %v468, %v469
    %v471 = vand.u32 %v470, 4294901760
    %472 = vmatmul.mubr.f32.gmra.mrb[0].mxu0 %v471
    %v473 = vpop.f32.mrb[0].mxu0
    %v474 = vadd.f32 0.0, %v473
    %v475 = vpop.f32.mrb[0].mxu0
    %476 = vmatprep.mubr.f32.mxu0 0.0
    %v477 = vand.u32 %v293, 4294901760
    %v478 = vsub.f32 %v293, %v477
    %v479 = vand.u32 %v478, 4294901760
    %v480 = vsub.f32 %v478, %v479
    %v481 = vand.u32 %v480, 4294901760
    %482 = vmatmul.mubr.f32.gmra.mrb[0].mxu0 %v481
    %v483 = vpop.f32.mrb[0].mxu0
    %v484 = vadd.f32 0.0, %v483
    %v485 = vpop.f32.mrb[0].mxu0
    %486 = vmatprep.mubr.f32.mxu0 0.0
    %v487 = vand.u32 %v296, 4294901760
    %v488 = vsub.f32 %v296, %v487
    %v489 = vand.u32 %v488, 4294901760
    %v490 = vsub.f32 %v488, %v489
    %v491 = vand.u32 %v490, 4294901760
    %492 = vmatmul.mubr.f32.gmra.mrb[0].mxu0 %v491
    %v493 = vpop.f32.mrb[0].mxu0
    %v494 = vadd.f32 0.0, %v493
    %v495 = vpop.f32.mrb[0].mxu0
    %496 = vmatprep.mubr.f32.mxu0 0.0
    %v497 = vand.u32 %v299, 4294901760
    %v498 = vsub.f32 %v299, %v497
    %v499 = vand.u32 %v498, 4294901760
    %v500 = vsub.f32 %v498, %v499
    %v501 = vand.u32 %v500, 4294901760
    %502 = vmatmul.mubr.f32.gmra.mrb[0].mxu0 %v501
    %v503 = vpop.f32.mrb[0].mxu0
    %v504 = vadd.f32 0.0, %v503
    %v505 = vpop.f32.mrb[0].mxu0
    %506 = vmatprep.mubr.f32.mxu0 0.0
    %v507 = vand.u32 %v302, 4294901760
    %v508 = vsub.f32 %v302, %v507
    %v509 = vand.u32 %v508, 4294901760
    %v510 = vsub.f32 %v508, %v509
    %v511 = vand.u32 %v510, 4294901760
    %512 = vmatmul.mubr.f32.gmra.mrb[0].mxu0 %v511
    %v513 = vpop.f32.mrb[0].mxu0
    %v514 = vadd.f32 0.0, %v513
    %v515 = vpop.f32.mrb[0].mxu0
    %516 = vmatprep.mubr.f32.mxu0 0.0
    %v517 = vand.u32 %v305, 4294901760
    %v518 = vsub.f32 %v305, %v517
    %v519 = vand.u32 %v518, 4294901760
    %v520 = vsub.f32 %v518, %v519
    %v521 = vand.u32 %v520, 4294901760
    %522 = vmatmul.mubr.f32.gmra.mrb[0].mxu0 %v521
    %v523 = vpop.f32.mrb[0].mxu0
    %v524 = vadd.f32 0.0, %v523
    %v525 = vpop.f32.mrb[0].mxu0
    %526 = vmatprep.mubr.f32.mxu0 0.0
    %v527 = vand.u32 %v308, 4294901760
    %v528 = vsub.f32 %v308, %v527
    %v529 = vand.u32 %v528, 4294901760
    %v530 = vsub.f32 %v528, %v529
    %v531 = vand.u32 %v530, 4294901760
    %532 = vmatmul.mubr.f32.gmra.mrb[0].mxu0 %v531
    %v533 = vpop.f32.mrb[0].mxu0
    %v534 = vadd.f32 0.0, %v533
    %v535 = vpop.f32.mrb[0].mxu0
    %536 = vdwg.mxu0
    %537 = vmatprep.subr.mxu0 0.0
    %v538 = vand.u32 %v259, 4294901760
    %v539 = vsub.f32 %v259, %v538
    %v540 = vand.u32 %v539, 4294901760
    %v541 = vsub.f32 %v539, %v540
    %v542 = vand.u32 %v541, 4294901760
    %543 = vmatpush1.msra.mxu0 %v542
    %544 = vmatprep.subr.mxu0 0.0
    %v545 = vand.u32 %v260, 4294901760
    %v546 = vsub.f32 %v260, %v545
    %v547 = vand.u32 %v546, 4294901760
    %v548 = vsub.f32 %v546, %v547
    %v549 = vand.u32 %v548, 4294901760
    %550 = vmatpush1.msra.mxu0 %v549
    %551 = vmatprep.subr.mxu0 0.0
    %552 = vmatpush1.msra.mxu0 0.0
    %553 = vmatprep.subr.mxu0 0.0
    %554 = vmatpush1.msra.mxu0 0.0
    %555 = vmatprep.subr.mxu0 0.0
    %556 = vmatpush1.msra.mxu0 0.0
    %557 = vmatprep.subr.mxu0 0.0
    %558 = vmatpush1.msra.mxu0 0.0
    %559 = vmatprep.subr.mxu0 0.0
    %560 = vmatpush1.msra.mxu0 0.0
    %561 = vmatprep.subr.mxu0 0.0
    %562 = vmatpush1.msra.mxu0 0.0
    %563 = vmatprep.subr.mxu0 0.0
    %564 = vmatpush1.msra.mxu0 0.0
    %565 = vmatprep.subr.mxu0 0.0
    %566 = vmatpush1.msra.mxu0 0.0
    %567 = vmatprep.subr.mxu0 0.0
    %568 = vmatpush1.msra.mxu0 0.0
    %569 = vmatprep.subr.mxu0 0.0
    %570 = vmatpush1.msra.mxu0 0.0
    %571 = vmatprep.subr.mxu0 0.0
    %572 = vmatpush1.msra.mxu0 0.0
    %573 = vmatprep.subr.mxu0 0.0
    %574 = vmatpush1.msra.mxu0 0.0
    %575 = vmatprep.subr.mxu0 0.0
    %576 = vmatpush1.msra.mxu0 0.0
    %577 = vmatprep.subr.mxu0 0.0
    %578 = vmatpush1.msra.mxu0 0.0
    %579 = vmatprep.subr.mxu0 0.0
    %580 = vmatpush1.msra.mxu0 0.0
    %581 = vmatprep.subr.mxu0 0.0
    %582 = vmatpush1.msra.mxu0 0.0
    %583 = vmatprep.subr.mxu0 0.0
    %584 = vmatpush1.msra.mxu0 0.0
    %585 = vmatprep.subr.mxu0 0.0
    %586 = vmatpush1.msra.mxu0 0.0
    %587 = vmatprep.subr.mxu0 0.0
    %588 = vmatpush1.msra.mxu0 0.0
    %589 = vmatprep.subr.mxu0 0.0
    %590 = vmatpush1.msra.mxu0 0.0
    %591 = vmatprep.subr.mxu0 0.0
    %592 = vmatpush1.msra.mxu0 0.0
    %593 = vmatprep.subr.mxu0 0.0
    %594 = vmatpush1.msra.mxu0 0.0
    %595 = vmatprep.subr.mxu0 0.0
    %596 = vmatpush1.msra.mxu0 0.0
    %597 = vmatprep.subr.mxu0 0.0
    %598 = vmatpush1.msra.mxu0 0.0
    %599 = vmatprep.subr.mxu0 0.0
    %600 = vmatpush1.msra.mxu0 0.0
    %601 = vmatprep.subr.mxu0 0.0
    %602 = vmatpush1.msra.mxu0 0.0
    %603 = vmatprep.subr.mxu0 0.0
    %604 = vmatpush1.msra.mxu0 0.0
    %605 = vmatprep.subr.mxu0 0.0
    %606 = vmatpush1.msra.mxu0 0.0
    %607 = vmatprep.subr.mxu0 0.0
    %608 = vmatpush1.msra.mxu0 0.0
    %609 = vmatprep.subr.mxu0 0.0
    %610 = vmatpush1.msra.mxu0 0.0
    %611 = vmatprep.mubr.f32.mxu0 0.0
    %v612 = vand.u32 %v263, 4294901760
    %613 = vmatmul.mubr.f32.gmra.mrb[0].mxu0 %v612
    %v614 = vpop.f32.mrb[0].mxu0
    %v615 = vadd.f32 %v384, %v614
    %v616 = vpop.f32.mrb[0].mxu0
    %617 = vmatprep.mubr.f32.mxu0 0.0
    %v618 = vand.u32 %v266, 4294901760
    %619 = vmatmul.mubr.f32.gmra.mrb[0].mxu0 %v618
    %v620 = vpop.f32.mrb[0].mxu0
    %v621 = vadd.f32 %v394, %v620
    %v622 = vpop.f32.mrb[0].mxu0
    %623 = vmatprep.mubr.f32.mxu0 0.0
    %v624 = vand.u32 %v269, 4294901760
    %625 = vmatmul.mubr.f32.gmra.mrb[0].mxu0 %v624
    %v626 = vpop.f32.mrb[0].mxu0
    %v627 = vadd.f32 %v404, %v626
    %v628 = vpop.f32.mrb[0].mxu0
    %629 = vmatprep.mubr.f32.mxu0 0.0
    %v630 = vand.u32 %v272, 4294901760
    %631 = vmatmul.mubr.f32.gmra.mrb[0].mxu0 %v630
    %v632 = vpop.f32.mrb[0].mxu0
    %v633 = vadd.f32 %v414, %v632
    %v634 = vpop.f32.mrb[0].mxu0
    %635 = vmatprep.mubr.f32.mxu0 0.0
    %v636 = vand.u32 %v275, 4294901760
    %637 = vmatmul.mubr.f32.gmra.mrb[0].mxu0 %v636
    %v638 = vpop.f32.mrb[0].mxu0
    %v639 = vadd.f32 %v424, %v638
    %v640 = vpop.f32.mrb[0].mxu0
    %641 = vmatprep.mubr.f32.mxu0 0.0
    %v642 = vand.u32 %v278, 4294901760
    %643 = vmatmul.mubr.f32.gmra.mrb[0].mxu0 %v642
    %v644 = vpop.f32.mrb[0].mxu0
    %v645 = vadd.f32 %v434, %v644
    %v646 = vpop.f32.mrb[0].mxu0
    %647 = vmatprep.mubr.f32.mxu0 0.0
    %v648 = vand.u32 %v281, 4294901760
    %649 = vmatmul.mubr.f32.gmra.mrb[0].mxu0 %v648
    %v650 = vpop.f32.mrb[0].mxu0
    %v651 = vadd.f32 %v444, %v650
    %v652 = vpop.f32.mrb[0].mxu0
    %653 = vmatprep.mubr.f32.mxu0 0.0
    %v654 = vand.u32 %v284, 4294901760
    %655 = vmatmul.mubr.f32.gmra.mrb[0].mxu0 %v654
    %v656 = vpop.f32.mrb[0].mxu0
    %v657 = vadd.f32 %v454, %v656
    %v658 = vpop.f32.mrb[0].mxu0
    %659 = vmatprep.mubr.f32.mxu0 0.0
    %v660 = vand.u32 %v287, 4294901760
    %661 = vmatmul.mubr.f32.gmra.mrb[0].mxu0 %v660
    %v662 = vpop.f32.mrb[0].mxu0
    %v663 = vadd.f32 %v464, %v662
    %v664 = vpop.f32.mrb[0].mxu0
    %665 = vmatprep.mubr.f32.mxu0 0.0
    %v666 = vand.u32 %v290, 4294901760
    %667 = vmatmul.mubr.f32.gmra.mrb[0].mxu0 %v666
    %v668 = vpop.f32.mrb[0].mxu0
    %v669 = vadd.f32 %v474, %v668
    %v670 = vpop.f32.mrb[0].mxu0
    %671 = vmatprep.mubr.f32.mxu0 0.0
    %v672 = vand.u32 %v293, 4294901760
    %673 = vmatmul.mubr.f32.gmra.mrb[0].mxu0 %v672
    %v674 = vpop.f32.mrb[0].mxu0
    %v675 = vadd.f32 %v484, %v674
    %v676 = vpop.f32.mrb[0].mxu0
    %677 = vmatprep.mubr.f32.mxu0 0.0
    %v678 = vand.u32 %v296, 4294901760
    %679 = vmatmul.mubr.f32.gmra.mrb[0].mxu0 %v678
    %v680 = vpop.f32.mrb[0].mxu0
    %v681 = vadd.f32 %v494, %v680
    %v682 = vpop.f32.mrb[0].mxu0
    %683 = vmatprep.mubr.f32.mxu0 0.0
    %v684 = vand.u32 %v299, 4294901760
    %685 = vmatmul.mubr.f32.gmra.mrb[0].mxu0 %v684
    %v686 = vpop.f32.mrb[0].mxu0
    %v687 = vadd.f32 %v504, %v686
    %v688 = vpop.f32.mrb[0].mxu0
    %689 = vmatprep.mubr.f32.mxu0 0.0
    %v690 = vand.u32 %v302, 4294901760
    %691 = vmatmul.mubr.f32.gmra.mrb[0].mxu0 %v690
    %v692 = vpop.f32.mrb[0].mxu0
    %v693 = vadd.f32 %v514, %v692
    %v694 = vpop.f32.mrb[0].mxu0
    %695 = vmatprep.mubr.f32.mxu0 0.0
    %v696 = vand.u32 %v305, 4294901760
    %697 = vmatmul.mubr.f32.gmra.mrb[0].mxu0 %v696
    %v698 = vpop.f32.mrb[0].mxu0
    %v699 = vadd.f32 %v524, %v698
    %v700 = vpop.f32.mrb[0].mxu0
    %701 = vmatprep.mubr.f32.mxu0 0.0
    %v702 = vand.u32 %v308, 4294901760
    %703 = vmatmul.mubr.f32.gmra.mrb[0].mxu0 %v702
    %v704 = vpop.f32.mrb[0].mxu0
    %v705 = vadd.f32 %v534, %v704
    %v706 = vpop.f32.mrb[0].mxu0
    %707 = vdwg.mxu0
    %708 = vmatprep.subr.mxu0 0.0
    %v709 = vand.u32 %v259, 4294901760
    %v710 = vsub.f32 %v259, %v709
    %711 = vmatpush1.msra.mxu0 %v710
    %712 = vmatprep.subr.mxu0 0.0
    %v713 = vand.u32 %v260, 4294901760
    %v714 = vsub.f32 %v260, %v713
    %715 = vmatpush1.msra.mxu0 %v714
    %716 = vmatprep.subr.mxu0 0.0
    %717 = vmatpush1.msra.mxu0 0.0
    %718 = vmatprep.subr.mxu0 0.0
    %719 = vmatpush1.msra.mxu0 0.0
    %720 = vmatprep.subr.mxu0 0.0
    %721 = vmatpush1.msra.mxu0 0.0
    %722 = vmatprep.subr.mxu0 0.0
    %723 = vmatpush1.msra.mxu0 0.0
    %724 = vmatprep.subr.mxu0 0.0
    %725 = vmatpush1.msra.mxu0 0.0
    %726 = vmatprep.subr.mxu0 0.0
    %727 = vmatpush1.msra.mxu0 0.0
    %728 = vmatprep.subr.mxu0 0.0
    %729 = vmatpush1.msra.mxu0 0.0
    %730 = vmatprep.subr.mxu0 0.0
    %731 = vmatpush1.msra.mxu0 0.0
    %732 = vmatprep.subr.mxu0 0.0
    %733 = vmatpush1.msra.mxu0 0.0
    %734 = vmatprep.subr.mxu0 0.0
    %735 = vmatpush1.msra.mxu0 0.0
    %736 = vmatprep.subr.mxu0 0.0
    %737 = vmatpush1.msra.mxu0 0.0
    %738 = vmatprep.subr.mxu0 0.0
    %739 = vmatpush1.msra.mxu0 0.0
    %740 = vmatprep.subr.mxu0 0.0
    %741 = vmatpush1.msra.mxu0 0.0
    %742 = vmatprep.subr.mxu0 0.0
    %743 = vmatpush1.msra.mxu0 0.0
    %744 = vmatprep.subr.mxu0 0.0
    %745 = vmatpush1.msra.mxu0 0.0
    %746 = vmatprep.subr.mxu0 0.0
    %747 = vmatpush1.msra.mxu0 0.0
    %748 = vmatprep.subr.mxu0 0.0
    %749 = vmatpush1.msra.mxu0 0.0
    %750 = vmatprep.subr.mxu0 0.0
    %751 = vmatpush1.msra.mxu0 0.0
    %752 = vmatprep.subr.mxu0 0.0
    %753 = vmatpush1.msra.mxu0 0.0
    %754 = vmatprep.subr.mxu0 0.0
    %755 = vmatpush1.msra.mxu0 0.0
    %756 = vmatprep.subr.mxu0 0.0
    %757 = vmatpush1.msra.mxu0 0.0
    %758 = vmatprep.subr.mxu0 0.0
    %759 = vmatpush1.msra.mxu0 0.0
    %760 = vmatprep.subr.mxu0 0.0
    %761 = vmatpush1.msra.mxu0 0.0
    %762 = vmatprep.subr.mxu0 0.0
    %763 = vmatpush1.msra.mxu0 0.0
    %764 = vmatprep.subr.mxu0 0.0
    %765 = vmatpush1.msra.mxu0 0.0
    %766 = vmatprep.subr.mxu0 0.0
    %767 = vmatpush1.msra.mxu0 0.0
    %768 = vmatprep.subr.mxu0 0.0
    %769 = vmatpush1.msra.mxu0 0.0
    %770 = vmatprep.subr.mxu0 0.0
    %771 = vmatpush1.msra.mxu0 0.0
    %772 = vmatprep.subr.mxu0 0.0
    %773 = vmatpush1.msra.mxu0 0.0
    %774 = vmatprep.subr.mxu0 0.0
    %775 = vmatpush1.msra.mxu0 0.0
    %776 = vmatprep.mubr.f32.mxu0 0.0
    %v777 = vand.u32 %v263, 4294901760
    %v778 = vsub.f32 %v263, %v777
    %779 = vmatmul.mubr.f32.gmra.mrb[0].mxu0 %v778
    %v780 = vpop.f32.mrb[0].mxu0
    %v781 = vadd.f32 %v615, %v780
    %v782 = vpop.f32.mrb[0].mxu0
    %783 = vmatprep.mubr.f32.mxu0 0.0
    %v784 = vand.u32 %v266, 4294901760
    %v785 = vsub.f32 %v266, %v784
    %786 = vmatmul.mubr.f32.gmra.mrb[0].mxu0 %v785
    %v787 = vpop.f32.mrb[0].mxu0
    %v788 = vadd.f32 %v621, %v787
    %v789 = vpop.f32.mrb[0].mxu0
    %790 = vmatprep.mubr.f32.mxu0 0.0
    %v791 = vand.u32 %v269, 4294901760
    %v792 = vsub.f32 %v269, %v791
    %793 = vmatmul.mubr.f32.gmra.mrb[0].mxu0 %v792
    %v794 = vpop.f32.mrb[0].mxu0
    %v795 = vadd.f32 %v627, %v794
    %v796 = vpop.f32.mrb[0].mxu0
    %797 = vmatprep.mubr.f32.mxu0 0.0
    %v798 = vand.u32 %v272, 4294901760
    %v799 = vsub.f32 %v272, %v798
    %800 = vmatmul.mubr.f32.gmra.mrb[0].mxu0 %v799
    %v801 = vpop.f32.mrb[0].mxu0
    %v802 = vadd.f32 %v633, %v801
    %v803 = vpop.f32.mrb[0].mxu0
    %804 = vmatprep.mubr.f32.mxu0 0.0
    %v805 = vand.u32 %v275, 4294901760
    %v806 = vsub.f32 %v275, %v805
    %807 = vmatmul.mubr.f32.gmra.mrb[0].mxu0 %v806
    %v808 = vpop.f32.mrb[0].mxu0
    %v809 = vadd.f32 %v639, %v808
    %v810 = vpop.f32.mrb[0].mxu0
    %811 = vmatprep.mubr.f32.mxu0 0.0
    %v812 = vand.u32 %v278, 4294901760
    %v813 = vsub.f32 %v278, %v812
    %814 = vmatmul.mubr.f32.gmra.mrb[0].mxu0 %v813
    %v815 = vpop.f32.mrb[0].mxu0
    %v816 = vadd.f32 %v645, %v815
    %v817 = vpop.f32.mrb[0].mxu0
    %818 = vmatprep.mubr.f32.mxu0 0.0
    %v819 = vand.u32 %v281, 4294901760
    %v820 = vsub.f32 %v281, %v819
    %821 = vmatmul.mubr.f32.gmra.mrb[0].mxu0 %v820
    %v822 = vpop.f32.mrb[0].mxu0
    %v823 = vadd.f32 %v651, %v822
    %v824 = vpop.f32.mrb[0].mxu0
    %825 = vmatprep.mubr.f32.mxu0 0.0
    %v826 = vand.u32 %v284, 4294901760
    %v827 = vsub.f32 %v284, %v826
    %828 = vmatmul.mubr.f32.gmra.mrb[0].mxu0 %v827
    %v829 = vpop.f32.mrb[0].mxu0
    %v830 = vadd.f32 %v657, %v829
    %v831 = vpop.f32.mrb[0].mxu0
    %832 = vmatprep.mubr.f32.mxu0 0.0
    %v833 = vand.u32 %v287, 4294901760
    %v834 = vsub.f32 %v287, %v833
    %835 = vmatmul.mubr.f32.gmra.mrb[0].mxu0 %v834
    %v836 = vpop.f32.mrb[0].mxu0
    %v837 = vadd.f32 %v663, %v836
    %v838 = vpop.f32.mrb[0].mxu0
    %839 = vmatprep.mubr.f32.mxu0 0.0
    %v840 = vand.u32 %v290, 4294901760
    %v841 = vsub.f32 %v290, %v840
    %842 = vmatmul.mubr.f32.gmra.mrb[0].mxu0 %v841
    %v843 = vpop.f32.mrb[0].mxu0
    %v844 = vadd.f32 %v669, %v843
    %v845 = vpop.f32.mrb[0].mxu0
    %846 = vmatprep.mubr.f32.mxu0 0.0
    %v847 = vand.u32 %v293, 4294901760
    %v848 = vsub.f32 %v293, %v847
    %849 = vmatmul.mubr.f32.gmra.mrb[0].mxu0 %v848
    %v850 = vpop.f32.mrb[0].mxu0
    %v851 = vadd.f32 %v675, %v850
    %v852 = vpop.f32.mrb[0].mxu0
    %853 = vmatprep.mubr.f32.mxu0 0.0
    %v854 = vand.u32 %v296, 4294901760
    %v855 = vsub.f32 %v296, %v854
    %856 = vmatmul.mubr.f32.gmra.mrb[0].mxu0 %v855
    %v857 = vpop.f32.mrb[0].mxu0
    %v858 = vadd.f32 %v681, %v857
    %v859 = vpop.f32.mrb[0].mxu0
    %860 = vmatprep.mubr.f32.mxu0 0.0
    %v861 = vand.u32 %v299, 4294901760
    %v862 = vsub.f32 %v299, %v861
    %863 = vmatmul.mubr.f32.gmra.mrb[0].mxu0 %v862
    %v864 = vpop.f32.mrb[0].mxu0
    %v865 = vadd.f32 %v687, %v864
    %v866 = vpop.f32.mrb[0].mxu0
    %867 = vmatprep.mubr.f32.mxu0 0.0
    %v868 = vand.u32 %v302, 4294901760
    %v869 = vsub.f32 %v302, %v868
    %870 = vmatmul.mubr.f32.gmra.mrb[0].mxu0 %v869
    %v871 = vpop.f32.mrb[0].mxu0
    %v872 = vadd.f32 %v693, %v871
    %v873 = vpop.f32.mrb[0].mxu0
    %874 = vmatprep.mubr.f32.mxu0 0.0
    %v875 = vand.u32 %v305, 4294901760
    %v876 = vsub.f32 %v305, %v875
    %877 = vmatmul.mubr.f32.gmra.mrb[0].mxu0 %v876
    %v878 = vpop.f32.mrb[0].mxu0
    %v879 = vadd.f32 %v699, %v878
    %v880 = vpop.f32.mrb[0].mxu0
    %881 = vmatprep.mubr.f32.mxu0 0.0
    %v882 = vand.u32 %v308, 4294901760
    %v883 = vsub.f32 %v308, %v882
    %884 = vmatmul.mubr.f32.gmra.mrb[0].mxu0 %v883
    %v885 = vpop.f32.mrb[0].mxu0
    %v886 = vadd.f32 %v705, %v885
    %v887 = vpop.f32.mrb[0].mxu0
    %888 = vdwg.mxu0
    %889 = vmatprep.subr.mxu0 0.0
    %v890 = vand.u32 %v259, 4294901760
    %891 = vmatpush1.msra.mxu0 %v890
    %892 = vmatprep.subr.mxu0 0.0
    %v893 = vand.u32 %v260, 4294901760
    %894 = vmatpush1.msra.mxu0 %v893
    %895 = vmatprep.subr.mxu0 0.0
    %896 = vmatpush1.msra.mxu0 0.0
    %897 = vmatprep.subr.mxu0 0.0
    %898 = vmatpush1.msra.mxu0 0.0
    %899 = vmatprep.subr.mxu0 0.0
    %900 = vmatpush1.msra.mxu0 0.0
    %901 = vmatprep.subr.mxu0 0.0
    %902 = vmatpush1.msra.mxu0 0.0
    %903 = vmatprep.subr.mxu0 0.0
    %904 = vmatpush1.msra.mxu0 0.0
    %905 = vmatprep.subr.mxu0 0.0
    %906 = vmatpush1.msra.mxu0 0.0
    %907 = vmatprep.subr.mxu0 0.0
    %908 = vmatpush1.msra.mxu0 0.0
    %909 = vmatprep.subr.mxu0 0.0
    %910 = vmatpush1.msra.mxu0 0.0
    %911 = vmatprep.subr.mxu0 0.0
    %912 = vmatpush1.msra.mxu0 0.0
    %913 = vmatprep.subr.mxu0 0.0
    %914 = vmatpush1.msra.mxu0 0.0
    %915 = vmatprep.subr.mxu0 0.0
    %916 = vmatpush1.msra.mxu0 0.0
    %917 = vmatprep.subr.mxu0 0.0
    %918 = vmatpush1.msra.mxu0 0.0
    %919 = vmatprep.subr.mxu0 0.0
    %920 = vmatpush1.msra.mxu0 0.0
    %921 = vmatprep.subr.mxu0 0.0
    %922 = vmatpush1.msra.mxu0 0.0
    %923 = vmatprep.subr.mxu0 0.0
    %924 = vmatpush1.msra.mxu0 0.0
    %925 = vmatprep.subr.mxu0 0.0
    %926 = vmatpush1.msra.mxu0 0.0
    %927 = vmatprep.subr.mxu0 0.0
    %928 = vmatpush1.msra.mxu0 0.0
    %929 = vmatprep.subr.mxu0 0.0
    %930 = vmatpush1.msra.mxu0 0.0
    %931 = vmatprep.subr.mxu0 0.0
    %932 = vmatpush1.msra.mxu0 0.0
    %933 = vmatprep.subr.mxu0 0.0
    %934 = vmatpush1.msra.mxu0 0.0
    %935 = vmatprep.subr.mxu0 0.0
    %936 = vmatpush1.msra.mxu0 0.0
    %937 = vmatprep.subr.mxu0 0.0
    %938 = vmatpush1.msra.mxu0 0.0
    %939 = vmatprep.subr.mxu0 0.0
    %940 = vmatpush1.msra.mxu0 0.0
    %941 = vmatprep.subr.mxu0 0.0
    %942 = vmatpush1.msra.mxu0 0.0
    %943 = vmatprep.subr.mxu0 0.0
    %944 = vmatpush1.msra.mxu0 0.0
    %945 = vmatprep.subr.mxu0 0.0
    %946 = vmatpush1.msra.mxu0 0.0
    %947 = vmatprep.subr.mxu0 0.0
    %948 = vmatpush1.msra.mxu0 0.0
    %949 = vmatprep.subr.mxu0 0.0
    %950 = vmatpush1.msra.mxu0 0.0
    %951 = vmatprep.subr.mxu0 0.0
    %952 = vmatpush1.msra.mxu0 0.0
    %953 = vmatprep.subr.mxu0 0.0
    %954 = vmatpush1.msra.mxu0 0.0
    %955 = vmatprep.mubr.f32.mxu0 0.0
    %v956 = vand.u32 %v263, 4294901760
    %v957 = vsub.f32 %v263, %v956
    %v958 = vand.u32 %v957, 4294901760
    %959 = vmatmul.mubr.f32.gmra.mrb[0].mxu0 %v958
    %v960 = vpop.f32.mrb[0].mxu0
    %v961 = vadd.f32 %v781, %v960
    %v962 = vpop.f32.mrb[0].mxu0
    %963 = vmatprep.mubr.f32.mxu0 0.0
    %v964 = vand.u32 %v266, 4294901760
    %v965 = vsub.f32 %v266, %v964
    %v966 = vand.u32 %v965, 4294901760
    %967 = vmatmul.mubr.f32.gmra.mrb[0].mxu0 %v966
    %v968 = vpop.f32.mrb[0].mxu0
    %v969 = vadd.f32 %v788, %v968
    %v970 = vpop.f32.mrb[0].mxu0
    %971 = vmatprep.mubr.f32.mxu0 0.0
    %v972 = vand.u32 %v269, 4294901760
    %v973 = vsub.f32 %v269, %v972
    %v974 = vand.u32 %v973, 4294901760
    %975 = vmatmul.mubr.f32.gmra.mrb[0].mxu0 %v974
    %v976 = vpop.f32.mrb[0].mxu0
    %v977 = vadd.f32 %v795, %v976
    %v978 = vpop.f32.mrb[0].mxu0
    %979 = vmatprep.mubr.f32.mxu0 0.0
    %v980 = vand.u32 %v272, 4294901760
    %v981 = vsub.f32 %v272, %v980
    %v982 = vand.u32 %v981, 4294901760
    %983 = vmatmul.mubr.f32.gmra.mrb[0].mxu0 %v982
    %v984 = vpop.f32.mrb[0].mxu0
    %v985 = vadd.f32 %v802, %v984
    %v986 = vpop.f32.mrb[0].mxu0
    %987 = vmatprep.mubr.f32.mxu0 0.0
    %v988 = vand.u32 %v275, 4294901760
    %v989 = vsub.f32 %v275, %v988
    %v990 = vand.u32 %v989, 4294901760
    %991 = vmatmul.mubr.f32.gmra.mrb[0].mxu0 %v990
    %v992 = vpop.f32.mrb[0].mxu0
    %v993 = vadd.f32 %v809, %v992
    %v994 = vpop.f32.mrb[0].mxu0
    %995 = vmatprep.mubr.f32.mxu0 0.0
    %v996 = vand.u32 %v278, 4294901760
    %v997 = vsub.f32 %v278, %v996
    %v998 = vand.u32 %v997, 4294901760
    %999 = vmatmul.mubr.f32.gmra.mrb[0].mxu0 %v998
    %v1000 = vpop.f32.mrb[0].mxu0
    %v1001 = vadd.f32 %v816, %v1000
    %v1002 = vpop.f32.mrb[0].mxu0
    %1003 = vmatprep.mubr.f32.mxu0 0.0
    %v1004 = vand.u32 %v281, 4294901760
    %v1005 = vsub.f32 %v281, %v1004
    %v1006 = vand.u32 %v1005, 4294901760
    %1007 = vmatmul.mubr.f32.gmra.mrb[0].mxu0 %v1006
    %v1008 = vpop.f32.mrb[0].mxu0
    %v1009 = vadd.f32 %v823, %v1008
    %v1010 = vpop.f32.mrb[0].mxu0
    %1011 = vmatprep.mubr.f32.mxu0 0.0
    %v1012 = vand.u32 %v284, 4294901760
    %v1013 = vsub.f32 %v284, %v1012
    %v1014 = vand.u32 %v1013, 4294901760
    %1015 = vmatmul.mubr.f32.gmra.mrb[0].mxu0 %v1014
    %v1016 = vpop.f32.mrb[0].mxu0
    %v1017 = vadd.f32 %v830, %v1016
    %v1018 = vpop.f32.mrb[0].mxu0
    %1019 = vmatprep.mubr.f32.mxu0 0.0
    %v1020 = vand.u32 %v287, 4294901760
    %v1021 = vsub.f32 %v287, %v1020
    %v1022 = vand.u32 %v1021, 4294901760
    %1023 = vmatmul.mubr.f32.gmra.mrb[0].mxu0 %v1022
    %v1024 = vpop.f32.mrb[0].mxu0
    %v1025 = vadd.f32 %v837, %v1024
    %v1026 = vpop.f32.mrb[0].mxu0
    %1027 = vmatprep.mubr.f32.mxu0 0.0
    %v1028 = vand.u32 %v290, 4294901760
    %v1029 = vsub.f32 %v290, %v1028
    %v1030 = vand.u32 %v1029, 4294901760
    %1031 = vmatmul.mubr.f32.gmra.mrb[0].mxu0 %v1030
    %v1032 = vpop.f32.mrb[0].mxu0
    %v1033 = vadd.f32 %v844, %v1032
    %v1034 = vpop.f32.mrb[0].mxu0
    %1035 = vmatprep.mubr.f32.mxu0 0.0
    %v1036 = vand.u32 %v293, 4294901760
    %v1037 = vsub.f32 %v293, %v1036
    %v1038 = vand.u32 %v1037, 4294901760
    %1039 = vmatmul.mubr.f32.gmra.mrb[0].mxu0 %v1038
    %v1040 = vpop.f32.mrb[0].mxu0
    %v1041 = vadd.f32 %v851, %v1040
    %v1042 = vpop.f32.mrb[0].mxu0
    %1043 = vmatprep.mubr.f32.mxu0 0.0
    %v1044 = vand.u32 %v296, 4294901760
    %v1045 = vsub.f32 %v296, %v1044
    %v1046 = vand.u32 %v1045, 4294901760
    %1047 = vmatmul.mubr.f32.gmra.mrb[0].mxu0 %v1046
    %v1048 = vpop.f32.mrb[0].mxu0
    %v1049 = vadd.f32 %v858, %v1048
    %v1050 = vpop.f32.mrb[0].mxu0
    %1051 = vmatprep.mubr.f32.mxu0 0.0
    %v1052 = vand.u32 %v299, 4294901760
    %v1053 = vsub.f32 %v299, %v1052
    %v1054 = vand.u32 %v1053, 4294901760
    %1055 = vmatmul.mubr.f32.gmra.mrb[0].mxu0 %v1054
    %v1056 = vpop.f32.mrb[0].mxu0
    %v1057 = vadd.f32 %v865, %v1056
    %v1058 = vpop.f32.mrb[0].mxu0
    %1059 = vmatprep.mubr.f32.mxu0 0.0
    %v1060 = vand.u32 %v302, 4294901760
    %v1061 = vsub.f32 %v302, %v1060
    %v1062 = vand.u32 %v1061, 4294901760
    %1063 = vmatmul.mubr.f32.gmra.mrb[0].mxu0 %v1062
    %v1064 = vpop.f32.mrb[0].mxu0
    %v1065 = vadd.f32 %v872, %v1064
    %v1066 = vpop.f32.mrb[0].mxu0
    %1067 = vmatprep.mubr.f32.mxu0 0.0
    %v1068 = vand.u32 %v305, 4294901760
    %v1069 = vsub.f32 %v305, %v1068
    %v1070 = vand.u32 %v1069, 4294901760
    %1071 = vmatmul.mubr.f32.gmra.mrb[0].mxu0 %v1070
    %v1072 = vpop.f32.mrb[0].mxu0
    %v1073 = vadd.f32 %v879, %v1072
    %v1074 = vpop.f32.mrb[0].mxu0
    %1075 = vmatprep.mubr.f32.mxu0 0.0
    %v1076 = vand.u32 %v308, 4294901760
    %v1077 = vsub.f32 %v308, %v1076
    %v1078 = vand.u32 %v1077, 4294901760
    %1079 = vmatmul.mubr.f32.gmra.mrb[0].mxu0 %v1078
    %v1080 = vpop.f32.mrb[0].mxu0
    %v1081 = vadd.f32 %v886, %v1080
    %v1082 = vpop.f32.mrb[0].mxu0
    %1083 = vdwg.mxu0
    %1084 = vmatprep.subr.mxu0 0.0
    %v1085 = vand.u32 %v259, 4294901760
    %v1086 = vsub.f32 %v259, %v1085
    %v1087 = vand.u32 %v1086, 4294901760
    %1088 = vmatpush1.msra.mxu0 %v1087
    %1089 = vmatprep.subr.mxu0 0.0
    %v1090 = vand.u32 %v260, 4294901760
    %v1091 = vsub.f32 %v260, %v1090
    %v1092 = vand.u32 %v1091, 4294901760
    %1093 = vmatpush1.msra.mxu0 %v1092
    %1094 = vmatprep.subr.mxu0 0.0
    %1095 = vmatpush1.msra.mxu0 0.0
    %1096 = vmatprep.subr.mxu0 0.0
    %1097 = vmatpush1.msra.mxu0 0.0
    %1098 = vmatprep.subr.mxu0 0.0
    %1099 = vmatpush1.msra.mxu0 0.0
    %1100 = vmatprep.subr.mxu0 0.0
    %1101 = vmatpush1.msra.mxu0 0.0
    %1102 = vmatprep.subr.mxu0 0.0
    %1103 = vmatpush1.msra.mxu0 0.0
    %1104 = vmatprep.subr.mxu0 0.0
    %1105 = vmatpush1.msra.mxu0 0.0
    %1106 = vmatprep.subr.mxu0 0.0
    %1107 = vmatpush1.msra.mxu0 0.0
    %1108 = vmatprep.subr.mxu0 0.0
    %1109 = vmatpush1.msra.mxu0 0.0
    %1110 = vmatprep.subr.mxu0 0.0
    %1111 = vmatpush1.msra.mxu0 0.0
    %1112 = vmatprep.subr.mxu0 0.0
    %1113 = vmatpush1.msra.mxu0 0.0
    %1114 = vmatprep.subr.mxu0 0.0
    %1115 = vmatpush1.msra.mxu0 0.0
    %1116 = vmatprep.subr.mxu0 0.0
    %1117 = vmatpush1.msra.mxu0 0.0
    %1118 = vmatprep.subr.mxu0 0.0
    %1119 = vmatpush1.msra.mxu0 0.0
    %1120 = vmatprep.subr.mxu0 0.0
    %1121 = vmatpush1.msra.mxu0 0.0
    %1122 = vmatprep.subr.mxu0 0.0
    %1123 = vmatpush1.msra.mxu0 0.0
    %1124 = vmatprep.subr.mxu0 0.0
    %1125 = vmatpush1.msra.mxu0 0.0
    %1126 = vmatprep.subr.mxu0 0.0
    %1127 = vmatpush1.msra.mxu0 0.0
    %1128 = vmatprep.subr.mxu0 0.0
    %1129 = vmatpush1.msra.mxu0 0.0
    %1130 = vmatprep.subr.mxu0 0.0
    %1131 = vmatpush1.msra.mxu0 0.0
    %1132 = vmatprep.subr.mxu0 0.0
    %1133 = vmatpush1.msra.mxu0 0.0
    %1134 = vmatprep.subr.mxu0 0.0
    %1135 = vmatpush1.msra.mxu0 0.0
    %1136 = vmatprep.subr.mxu0 0.0
    %1137 = vmatpush1.msra.mxu0 0.0
    %1138 = vmatprep.subr.mxu0 0.0
    %1139 = vmatpush1.msra.mxu0 0.0
    %1140 = vmatprep.subr.mxu0 0.0
    %1141 = vmatpush1.msra.mxu0 0.0
    %1142 = vmatprep.subr.mxu0 0.0
    %1143 = vmatpush1.msra.mxu0 0.0
    %1144 = vmatprep.subr.mxu0 0.0
    %1145 = vmatpush1.msra.mxu0 0.0
    %1146 = vmatprep.subr.mxu0 0.0
    %1147 = vmatpush1.msra.mxu0 0.0
    %1148 = vmatprep.subr.mxu0 0.0
    %1149 = vmatpush1.msra.mxu0 0.0
    %1150 = vmatprep.subr.mxu0 0.0
    %1151 = vmatpush1.msra.mxu0 0.0
    %1152 = vmatprep.subr.mxu0 0.0
    %1153 = vmatpush1.msra.mxu0 0.0
    %1154 = vmatprep.mubr.f32.mxu0 0.0
    %v1155 = vand.u32 %v263, 4294901760
    %1156 = vmatmul.mubr.f32.gmra.mrb[0].mxu0 %v1155
    %v1157 = vpop.f32.mrb[0].mxu0
    %v1158 = vadd.f32 %v961, %v1157
    %v1159 = vpop.f32.mrb[0].mxu0
    %1160 = vmatprep.mubr.f32.mxu0 0.0
    %v1161 = vand.u32 %v266, 4294901760
    %1162 = vmatmul.mubr.f32.gmra.mrb[0].mxu0 %v1161
    %v1163 = vpop.f32.mrb[0].mxu0
    %v1164 = vadd.f32 %v969, %v1163
    %v1165 = vpop.f32.mrb[0].mxu0
    %1166 = vmatprep.mubr.f32.mxu0 0.0
    %v1167 = vand.u32 %v269, 4294901760
    %1168 = vmatmul.mubr.f32.gmra.mrb[0].mxu0 %v1167
    %v1169 = vpop.f32.mrb[0].mxu0
    %v1170 = vadd.f32 %v977, %v1169
    %v1171 = vpop.f32.mrb[0].mxu0
    %1172 = vmatprep.mubr.f32.mxu0 0.0
    %v1173 = vand.u32 %v272, 4294901760
    %1174 = vmatmul.mubr.f32.gmra.mrb[0].mxu0 %v1173
    %v1175 = vpop.f32.mrb[0].mxu0
    %v1176 = vadd.f32 %v985, %v1175
    %v1177 = vpop.f32.mrb[0].mxu0
    %1178 = vmatprep.mubr.f32.mxu0 0.0
    %v1179 = vand.u32 %v275, 4294901760
    %1180 = vmatmul.mubr.f32.gmra.mrb[0].mxu0 %v1179
    %v1181 = vpop.f32.mrb[0].mxu0
    %v1182 = vadd.f32 %v993, %v1181
    %v1183 = vpop.f32.mrb[0].mxu0
    %1184 = vmatprep.mubr.f32.mxu0 0.0
    %v1185 = vand.u32 %v278, 4294901760
    %1186 = vmatmul.mubr.f32.gmra.mrb[0].mxu0 %v1185
    %v1187 = vpop.f32.mrb[0].mxu0
    %v1188 = vadd.f32 %v1001, %v1187
    %v1189 = vpop.f32.mrb[0].mxu0
    %1190 = vmatprep.mubr.f32.mxu0 0.0
    %v1191 = vand.u32 %v281, 4294901760
    %1192 = vmatmul.mubr.f32.gmra.mrb[0].mxu0 %v1191
    %v1193 = vpop.f32.mrb[0].mxu0
    %v1194 = vadd.f32 %v1009, %v1193
    %v1195 = vpop.f32.mrb[0].mxu0
    %1196 = vmatprep.mubr.f32.mxu0 0.0
    %v1197 = vand.u32 %v284, 4294901760
    %1198 = vmatmul.mubr.f32.gmra.mrb[0].mxu0 %v1197
    %v1199 = vpop.f32.mrb[0].mxu0
    %v1200 = vadd.f32 %v1017, %v1199
    %v1201 = vpop.f32.mrb[0].mxu0
    %1202 = vmatprep.mubr.f32.mxu0 0.0
    %v1203 = vand.u32 %v287, 4294901760
    %1204 = vmatmul.mubr.f32.gmra.mrb[0].mxu0 %v1203
    %v1205 = vpop.f32.mrb[0].mxu0
    %v1206 = vadd.f32 %v1025, %v1205
    %v1207 = vpop.f32.mrb[0].mxu0
    %1208 = vmatprep.mubr.f32.mxu0 0.0
    %v1209 = vand.u32 %v290, 4294901760
    %1210 = vmatmul.mubr.f32.gmra.mrb[0].mxu0 %v1209
    %v1211 = vpop.f32.mrb[0].mxu0
    %v1212 = vadd.f32 %v1033, %v1211
    %v1213 = vpop.f32.mrb[0].mxu0
    %1214 = vmatprep.mubr.f32.mxu0 0.0
    %v1215 = vand.u32 %v293, 4294901760
    %1216 = vmatmul.mubr.f32.gmra.mrb[0].mxu0 %v1215
    %v1217 = vpop.f32.mrb[0].mxu0
    %v1218 = vadd.f32 %v1041, %v1217
    %v1219 = vpop.f32.mrb[0].mxu0
    %1220 = vmatprep.mubr.f32.mxu0 0.0
    %v1221 = vand.u32 %v296, 4294901760
    %1222 = vmatmul.mubr.f32.gmra.mrb[0].mxu0 %v1221
    %v1223 = vpop.f32.mrb[0].mxu0
    %v1224 = vadd.f32 %v1049, %v1223
    %v1225 = vpop.f32.mrb[0].mxu0
    %1226 = vmatprep.mubr.f32.mxu0 0.0
    %v1227 = vand.u32 %v299, 4294901760
    %1228 = vmatmul.mubr.f32.gmra.mrb[0].mxu0 %v1227
    %v1229 = vpop.f32.mrb[0].mxu0
    %v1230 = vadd.f32 %v1057, %v1229
    %v1231 = vpop.f32.mrb[0].mxu0
    %1232 = vmatprep.mubr.f32.mxu0 0.0
    %v1233 = vand.u32 %v302, 4294901760
    %1234 = vmatmul.mubr.f32.gmra.mrb[0].mxu0 %v1233
    %v1235 = vpop.f32.mrb[0].mxu0
    %v1236 = vadd.f32 %v1065, %v1235
    %v1237 = vpop.f32.mrb[0].mxu0
    %1238 = vmatprep.mubr.f32.mxu0 0.0
    %v1239 = vand.u32 %v305, 4294901760
    %1240 = vmatmul.mubr.f32.gmra.mrb[0].mxu0 %v1239
    %v1241 = vpop.f32.mrb[0].mxu0
    %v1242 = vadd.f32 %v1073, %v1241
    %v1243 = vpop.f32.mrb[0].mxu0
    %1244 = vmatprep.mubr.f32.mxu0 0.0
    %v1245 = vand.u32 %v308, 4294901760
    %1246 = vmatmul.mubr.f32.gmra.mrb[0].mxu0 %v1245
    %v1247 = vpop.f32.mrb[0].mxu0
    %v1248 = vadd.f32 %v1081, %v1247
    %v1249 = vpop.f32.mrb[0].mxu0
    %1250 = vdwg.mxu0
    %1251 = vmatprep.subr.mxu0 0.0
    %v1252 = vand.u32 %v259, 4294901760
    %1253 = vmatpush1.msra.mxu0 %v1252
    %1254 = vmatprep.subr.mxu0 0.0
    %v1255 = vand.u32 %v260, 4294901760
    %1256 = vmatpush1.msra.mxu0 %v1255
    %1257 = vmatprep.subr.mxu0 0.0
    %1258 = vmatpush1.msra.mxu0 0.0
    %1259 = vmatprep.subr.mxu0 0.0
    %1260 = vmatpush1.msra.mxu0 0.0
    %1261 = vmatprep.subr.mxu0 0.0
    %1262 = vmatpush1.msra.mxu0 0.0
    %1263 = vmatprep.subr.mxu0 0.0
    %1264 = vmatpush1.msra.mxu0 0.0
    %1265 = vmatprep.subr.mxu0 0.0
    %1266 = vmatpush1.msra.mxu0 0.0
    %1267 = vmatprep.subr.mxu0 0.0
    %1268 = vmatpush1.msra.mxu0 0.0
    %1269 = vmatprep.subr.mxu0 0.0
    %1270 = vmatpush1.msra.mxu0 0.0
    %1271 = vmatprep.subr.mxu0 0.0
    %1272 = vmatpush1.msra.mxu0 0.0
    %1273 = vmatprep.subr.mxu0 0.0
    %1274 = vmatpush1.msra.mxu0 0.0
    %1275 = vmatprep.subr.mxu0 0.0
    %1276 = vmatpush1.msra.mxu0 0.0
    %1277 = vmatprep.subr.mxu0 0.0
    %1278 = vmatpush1.msra.mxu0 0.0
    %1279 = vmatprep.subr.mxu0 0.0
    %1280 = vmatpush1.msra.mxu0 0.0
    %1281 = vmatprep.subr.mxu0 0.0
    %1282 = vmatpush1.msra.mxu0 0.0
    %1283 = vmatprep.subr.mxu0 0.0
    %1284 = vmatpush1.msra.mxu0 0.0
    %1285 = vmatprep.subr.mxu0 0.0
    %1286 = vmatpush1.msra.mxu0 0.0
    %1287 = vmatprep.subr.mxu0 0.0
    %1288 = vmatpush1.msra.mxu0 0.0
    %1289 = vmatprep.subr.mxu0 0.0
    %1290 = vmatpush1.msra.mxu0 0.0
    %1291 = vmatprep.subr.mxu0 0.0
    %1292 = vmatpush1.msra.mxu0 0.0
    %1293 = vmatprep.subr.mxu0 0.0
    %1294 = vmatpush1.msra.mxu0 0.0
    %1295 = vmatprep.subr.mxu0 0.0
    %1296 = vmatpush1.msra.mxu0 0.0
    %1297 = vmatprep.subr.mxu0 0.0
    %1298 = vmatpush1.msra.mxu0 0.0
    %1299 = vmatprep.subr.mxu0 0.0
    %1300 = vmatpush1.msra.mxu0 0.0
    %1301 = vmatprep.subr.mxu0 0.0
    %1302 = vmatpush1.msra.mxu0 0.0
    %1303 = vmatprep.subr.mxu0 0.0
    %1304 = vmatpush1.msra.mxu0 0.0
    %1305 = vmatprep.subr.mxu0 0.0
    %1306 = vmatpush1.msra.mxu0 0.0
    %1307 = vmatprep.subr.mxu0 0.0
    %1308 = vmatpush1.msra.mxu0 0.0
    %1309 = vmatprep.subr.mxu0 0.0
    %1310 = vmatpush1.msra.mxu0 0.0
    %1311 = vmatprep.subr.mxu0 0.0
    %1312 = vmatpush1.msra.mxu0 0.0
    %1313 = vmatprep.subr.mxu0 0.0
    %1314 = vmatpush1.msra.mxu0 0.0
    %1315 = vmatprep.subr.mxu0 0.0
    %1316 = vmatpush1.msra.mxu0 0.0
    %1317 = vmatprep.mubr.f32.mxu0 0.0
    %v1318 = vand.u32 %v263, 4294901760
    %1319 = vmatmul.mubr.f32.gmra.mrb[0].mxu0 %v1318
    %v1320 = vpop.f32.mrb[0].mxu0
    %v1321 = vadd.f32 %v1158, %v1320
    %v1322 = vpop.f32.mrb[0].mxu0
    %1323 = vmatprep.mubr.f32.mxu0 0.0
    %v1324 = vand.u32 %v266, 4294901760
    %1325 = vmatmul.mubr.f32.gmra.mrb[0].mxu0 %v1324
    %v1326 = vpop.f32.mrb[0].mxu0
    %v1327 = vadd.f32 %v1164, %v1326
    %v1328 = vpop.f32.mrb[0].mxu0
    %1329 = vmatprep.mubr.f32.mxu0 0.0
    %v1330 = vand.u32 %v269, 4294901760
    %1331 = vmatmul.mubr.f32.gmra.mrb[0].mxu0 %v1330
    %v1332 = vpop.f32.mrb[0].mxu0
    %v1333 = vadd.f32 %v1170, %v1332
    %v1334 = vpop.f32.mrb[0].mxu0
    %1335 = vmatprep.mubr.f32.mxu0 0.0
    %v1336 = vand.u32 %v272, 4294901760
    %1337 = vmatmul.mubr.f32.gmra.mrb[0].mxu0 %v1336
    %v1338 = vpop.f32.mrb[0].mxu0
    %v1339 = vadd.f32 %v1176, %v1338
    %v1340 = vpop.f32.mrb[0].mxu0
    %1341 = vmatprep.mubr.f32.mxu0 0.0
    %v1342 = vand.u32 %v275, 4294901760
    %1343 = vmatmul.mubr.f32.gmra.mrb[0].mxu0 %v1342
    %v1344 = vpop.f32.mrb[0].mxu0
    %v1345 = vadd.f32 %v1182, %v1344
    %v1346 = vpop.f32.mrb[0].mxu0
    %1347 = vmatprep.mubr.f32.mxu0 0.0
    %v1348 = vand.u32 %v278, 4294901760
    %1349 = vmatmul.mubr.f32.gmra.mrb[0].mxu0 %v1348
    %v1350 = vpop.f32.mrb[0].mxu0
    %v1351 = vadd.f32 %v1188, %v1350
    %v1352 = vpop.f32.mrb[0].mxu0
    %1353 = vmatprep.mubr.f32.mxu0 0.0
    %v1354 = vand.u32 %v281, 4294901760
    %1355 = vmatmul.mubr.f32.gmra.mrb[0].mxu0 %v1354
    %v1356 = vpop.f32.mrb[0].mxu0
    %v1357 = vadd.f32 %v1194, %v1356
    %v1358 = vpop.f32.mrb[0].mxu0
    %1359 = vmatprep.mubr.f32.mxu0 0.0
    %v1360 = vand.u32 %v284, 4294901760
    %1361 = vmatmul.mubr.f32.gmra.mrb[0].mxu0 %v1360
    %v1362 = vpop.f32.mrb[0].mxu0
    %v1363 = vadd.f32 %v1200, %v1362
    %v1364 = vpop.f32.mrb[0].mxu0
    %1365 = vmatprep.mubr.f32.mxu0 0.0
    %v1366 = vand.u32 %v287, 4294901760
    %1367 = vmatmul.mubr.f32.gmra.mrb[0].mxu0 %v1366
    %v1368 = vpop.f32.mrb[0].mxu0
    %v1369 = vadd.f32 %v1206, %v1368
    %v1370 = vpop.f32.mrb[0].mxu0
    %1371 = vmatprep.mubr.f32.mxu0 0.0
    %v1372 = vand.u32 %v290, 4294901760
    %1373 = vmatmul.mubr.f32.gmra.mrb[0].mxu0 %v1372
    %v1374 = vpop.f32.mrb[0].mxu0
    %v1375 = vadd.f32 %v1212, %v1374
    %v1376 = vpop.f32.mrb[0].mxu0
    %1377 = vmatprep.mubr.f32.mxu0 0.0
    %v1378 = vand.u32 %v293, 4294901760
    %1379 = vmatmul.mubr.f32.gmra.mrb[0].mxu0 %v1378
    %v1380 = vpop.f32.mrb[0].mxu0
    %v1381 = vadd.f32 %v1218, %v1380
    %v1382 = vpop.f32.mrb[0].mxu0
    %1383 = vmatprep.mubr.f32.mxu0 0.0
    %v1384 = vand.u32 %v296, 4294901760
    %1385 = vmatmul.mubr.f32.gmra.mrb[0].mxu0 %v1384
    %v1386 = vpop.f32.mrb[0].mxu0
    %v1387 = vadd.f32 %v1224, %v1386
    %v1388 = vpop.f32.mrb[0].mxu0
    %1389 = vmatprep.mubr.f32.mxu0 0.0
    %v1390 = vand.u32 %v299, 4294901760
    %1391 = vmatmul.mubr.f32.gmra.mrb[0].mxu0 %v1390
    %v1392 = vpop.f32.mrb[0].mxu0
    %v1393 = vadd.f32 %v1230, %v1392
    %v1394 = vpop.f32.mrb[0].mxu0
    %1395 = vmatprep.mubr.f32.mxu0 0.0
    %v1396 = vand.u32 %v302, 4294901760
    %1397 = vmatmul.mubr.f32.gmra.mrb[0].mxu0 %v1396
    %v1398 = vpop.f32.mrb[0].mxu0
    %v1399 = vadd.f32 %v1236, %v1398
    %v1400 = vpop.f32.mrb[0].mxu0
    %1401 = vmatprep.mubr.f32.mxu0 0.0
    %v1402 = vand.u32 %v305, 4294901760
    %1403 = vmatmul.mubr.f32.gmra.mrb[0].mxu0 %v1402
    %v1404 = vpop.f32.mrb[0].mxu0
    %v1405 = vadd.f32 %v1242, %v1404
    %v1406 = vpop.f32.mrb[0].mxu0
    %1407 = vmatprep.mubr.f32.mxu0 0.0
    %v1408 = vand.u32 %v308, 4294901760
    %1409 = vmatmul.mubr.f32.gmra.mrb[0].mxu0 %v1408
    %v1410 = vpop.f32.mrb[0].mxu0
    %v1411 = vadd.f32 %v1248, %v1410
    %v1412 = vpop.f32.mrb[0].mxu0
    %1413 = vdwg.mxu0
    %v1414 = vld [vmem:[%s3] sm:$0xff]
    %v1415 = vld [vmem:[%s3 + $0x8] sm:$0xff]
    %v1416 = vld [vmem:[%s3 + $0x10] sm:$0xff]
    %vm1417 = vcmask 195584
    %v1419 = vsel %vm1417, %v243, 0
    %v1422 = vsel %vm1417, %v244, 0
    %v1425 = vsel %vm1417, %v245, 0
    %v1428 = vsel %vm1417, %v246, 0
    %v1431 = vsel %vm1417, %v247, 0
    %v1434 = vsel %vm1417, %v248, 0
    %v1437 = vsel %vm1417, %v249, 0
    %v1440 = vsel %vm1417, %v250, 0
    %v1443 = vsel %vm1417, %v251, 0
    %v1446 = vsel %vm1417, %v252, 0
    %v1449 = vsel %vm1417, %v253, 0
    %v1452 = vsel %vm1417, %v254, 0
    %v1455 = vsel %vm1417, %v255, 0
    %v1458 = vsel %vm1417, %v256, 0
    %v1461 = vsel %vm1417, %v257, 0
    %v1464 = vsel %vm1417, %v258, 0
    %1466 = vmatprep.subr.mxu0 0.0
    %v1467 = vand.u32 %v1414, 4294901760
    %1468 = vmatpush1.msra.mxu0 %v1467
    %1469 = vmatprep.subr.mxu0 0.0
    %v1470 = vand.u32 %v1415, 4294901760
    %1471 = vmatpush1.msra.mxu0 %v1470
    %1472 = vmatprep.subr.mxu0 0.0
    %v1473 = vand.u32 %v1416, 4294901760
    %1474 = vmatpush1.msra.mxu0 %v1473
    %1475 = vmatprep.subr.mxu0 0.0
    %1476 = vmatpush1.msra.mxu0 0.0
    %1477 = vmatprep.subr.mxu0 0.0
    %1478 = vmatpush1.msra.mxu0 0.0
    %1479 = vmatprep.subr.mxu0 0.0
    %1480 = vmatpush1.msra.mxu0 0.0
    %1481 = vmatprep.subr.mxu0 0.0
    %1482 = vmatpush1.msra.mxu0 0.0
    %1483 = vmatprep.subr.mxu0 0.0
    %1484 = vmatpush1.msra.mxu0 0.0
    %1485 = vmatprep.subr.mxu0 0.0
    %1486 = vmatpush1.msra.mxu0 0.0
    %1487 = vmatprep.subr.mxu0 0.0
    %1488 = vmatpush1.msra.mxu0 0.0
    %1489 = vmatprep.subr.mxu0 0.0
    %1490 = vmatpush1.msra.mxu0 0.0
    %1491 = vmatprep.subr.mxu0 0.0
    %1492 = vmatpush1.msra.mxu0 0.0
    %1493 = vmatprep.subr.mxu0 0.0
    %1494 = vmatpush1.msra.mxu0 0.0
    %1495 = vmatprep.subr.mxu0 0.0
    %1496 = vmatpush1.msra.mxu0 0.0
    %1497 = vmatprep.subr.mxu0 0.0
    %1498 = vmatpush1.msra.mxu0 0.0
    %1499 = vmatprep.subr.mxu0 0.0
    %1500 = vmatpush1.msra.mxu0 0.0
    %1501 = vmatprep.subr.mxu0 0.0
    %1502 = vmatpush1.msra.mxu0 0.0
    %1503 = vmatprep.subr.mxu0 0.0
    %1504 = vmatpush1.msra.mxu0 0.0
    %1505 = vmatprep.subr.mxu0 0.0
    %1506 = vmatpush1.msra.mxu0 0.0
    %1507 = vmatprep.subr.mxu0 0.0
    %1508 = vmatpush1.msra.mxu0 0.0
    %1509 = vmatprep.subr.mxu0 0.0
    %1510 = vmatpush1.msra.mxu0 0.0
    %1511 = vmatprep.subr.mxu0 0.0
    %1512 = vmatpush1.msra.mxu0 0.0
    %1513 = vmatprep.subr.mxu0 0.0
    %1514 = vmatpush1.msra.mxu0 0.0
    %1515 = vmatprep.subr.mxu0 0.0
    %1516 = vmatpush1.msra.mxu0 0.0
    %1517 = vmatprep.subr.mxu0 0.0
    %1518 = vmatpush1.msra.mxu0 0.0
    %1519 = vmatprep.subr.mxu0 0.0
    %1520 = vmatpush1.msra.mxu0 0.0
    %1521 = vmatprep.subr.mxu0 0.0
    %1522 = vmatpush1.msra.mxu0 0.0
    %1523 = vmatprep.subr.mxu0 0.0
    %1524 = vmatpush1.msra.mxu0 0.0
    %1525 = vmatprep.subr.mxu0 0.0
    %1526 = vmatpush1.msra.mxu0 0.0
    %1527 = vmatprep.subr.mxu0 0.0
    %1528 = vmatpush1.msra.mxu0 0.0
    %1529 = vmatprep.subr.mxu0 0.0
    %1530 = vmatpush1.msra.mxu0 0.0
    %1531 = vmatprep.subr.mxu0 0.0
    %1532 = vmatpush1.msra.mxu0 0.0
    %1533 = vmatprep.mubr.f32.mxu0 0.0
    %v1534 = vand.u32 %v1419, 4294901760
    %v1535 = vsub.f32 %v1419, %v1534
    %v1536 = vand.u32 %v1535, 4294901760
    %v1537 = vsub.f32 %v1535, %v1536
    %v1538 = vand.u32 %v1537, 4294901760
    %1539 = vmatmul.mubr.f32.gmra.mrb[0].mxu0 %v1538
    %v1540 = vpop.f32.mrb[0].mxu0
    %v1541 = vadd.f32 0.0, %v1540
    %v1542 = vpop.f32.mrb[0].mxu0
    %1543 = vmatprep.mubr.f32.mxu0 0.0
    %v1544 = vand.u32 %v1422, 4294901760
    %v1545 = vsub.f32 %v1422, %v1544
    %v1546 = vand.u32 %v1545, 4294901760
    %v1547 = vsub.f32 %v1545, %v1546
    %v1548 = vand.u32 %v1547, 4294901760
    %1549 = vmatmul.mubr.f32.gmra.mrb[0].mxu0 %v1548
    %v1550 = vpop.f32.mrb[0].mxu0
    %v1551 = vadd.f32 0.0, %v1550
    %v1552 = vpop.f32.mrb[0].mxu0
    %1553 = vmatprep.mubr.f32.mxu0 0.0
    %v1554 = vand.u32 %v1425, 4294901760
    %v1555 = vsub.f32 %v1425, %v1554
    %v1556 = vand.u32 %v1555, 4294901760
    %v1557 = vsub.f32 %v1555, %v1556
    %v1558 = vand.u32 %v1557, 4294901760
    %1559 = vmatmul.mubr.f32.gmra.mrb[0].mxu0 %v1558
    %v1560 = vpop.f32.mrb[0].mxu0
    %v1561 = vadd.f32 0.0, %v1560
    %v1562 = vpop.f32.mrb[0].mxu0
    %1563 = vmatprep.mubr.f32.mxu0 0.0
    %v1564 = vand.u32 %v1428, 4294901760
    %v1565 = vsub.f32 %v1428, %v1564
    %v1566 = vand.u32 %v1565, 4294901760
    %v1567 = vsub.f32 %v1565, %v1566
    %v1568 = vand.u32 %v1567, 4294901760
    %1569 = vmatmul.mubr.f32.gmra.mrb[0].mxu0 %v1568
    %v1570 = vpop.f32.mrb[0].mxu0
    %v1571 = vadd.f32 0.0, %v1570
    %v1572 = vpop.f32.mrb[0].mxu0
    %1573 = vmatprep.mubr.f32.mxu0 0.0
    %v1574 = vand.u32 %v1431, 4294901760
    %v1575 = vsub.f32 %v1431, %v1574
    %v1576 = vand.u32 %v1575, 4294901760
    %v1577 = vsub.f32 %v1575, %v1576
    %v1578 = vand.u32 %v1577, 4294901760
    %1579 = vmatmul.mubr.f32.gmra.mrb[0].mxu0 %v1578
    %v1580 = vpop.f32.mrb[0].mxu0
    %v1581 = vadd.f32 0.0, %v1580
    %v1582 = vpop.f32.mrb[0].mxu0
    %1583 = vmatprep.mubr.f32.mxu0 0.0
    %v1584 = vand.u32 %v1434, 4294901760
    %v1585 = vsub.f32 %v1434, %v1584
    %v1586 = vand.u32 %v1585, 4294901760
    %v1587 = vsub.f32 %v1585, %v1586
    %v1588 = vand.u32 %v1587, 4294901760
    %1589 = vmatmul.mubr.f32.gmra.mrb[0].mxu0 %v1588
    %v1590 = vpop.f32.mrb[0].mxu0
    %v1591 = vadd.f32 0.0, %v1590
    %v1592 = vpop.f32.mrb[0].mxu0
    %1593 = vmatprep.mubr.f32.mxu0 0.0
    %v1594 = vand.u32 %v1437, 4294901760
    %v1595 = vsub.f32 %v1437, %v1594
    %v1596 = vand.u32 %v1595, 4294901760
    %v1597 = vsub.f32 %v1595, %v1596
    %v1598 = vand.u32 %v1597, 4294901760
    %1599 = vmatmul.mubr.f32.gmra.mrb[0].mxu0 %v1598
    %v1600 = vpop.f32.mrb[0].mxu0
    %v1601 = vadd.f32 0.0, %v1600
    %v1602 = vpop.f32.mrb[0].mxu0
    %1603 = vmatprep.mubr.f32.mxu0 0.0
    %v1604 = vand.u32 %v1440, 4294901760
    %v1605 = vsub.f32 %v1440, %v1604
    %v1606 = vand.u32 %v1605, 4294901760
    %v1607 = vsub.f32 %v1605, %v1606
    %v1608 = vand.u32 %v1607, 4294901760
    %1609 = vmatmul.mubr.f32.gmra.mrb[0].mxu0 %v1608
    %v1610 = vpop.f32.mrb[0].mxu0
    %v1611 = vadd.f32 0.0, %v1610
    %v1612 = vpop.f32.mrb[0].mxu0
    %1613 = vmatprep.mubr.f32.mxu0 0.0
    %v1614 = vand.u32 %v1443, 4294901760
    %v1615 = vsub.f32 %v1443, %v1614
    %v1616 = vand.u32 %v1615, 4294901760
    %v1617 = vsub.f32 %v1615, %v1616
    %v1618 = vand.u32 %v1617, 4294901760
    %1619 = vmatmul.mubr.f32.gmra.mrb[0].mxu0 %v1618
    %v1620 = vpop.f32.mrb[0].mxu0
    %v1621 = vadd.f32 0.0, %v1620
    %v1622 = vpop.f32.mrb[0].mxu0
    %1623 = vmatprep.mubr.f32.mxu0 0.0
    %v1624 = vand.u32 %v1446, 4294901760
    %v1625 = vsub.f32 %v1446, %v1624
    %v1626 = vand.u32 %v1625, 4294901760
    %v1627 = vsub.f32 %v1625, %v1626
    %v1628 = vand.u32 %v1627, 4294901760
    %1629 = vmatmul.mubr.f32.gmra.mrb[0].mxu0 %v1628
    %v1630 = vpop.f32.mrb[0].mxu0
    %v1631 = vadd.f32 0.0, %v1630
    %v1632 = vpop.f32.mrb[0].mxu0
    %1633 = vmatprep.mubr.f32.mxu0 0.0
    %v1634 = vand.u32 %v1449, 4294901760
    %v1635 = vsub.f32 %v1449, %v1634
    %v1636 = vand.u32 %v1635, 4294901760
    %v1637 = vsub.f32 %v1635, %v1636
    %v1638 = vand.u32 %v1637, 4294901760
    %1639 = vmatmul.mubr.f32.gmra.mrb[0].mxu0 %v1638
    %v1640 = vpop.f32.mrb[0].mxu0
    %v1641 = vadd.f32 0.0, %v1640
    %v1642 = vpop.f32.mrb[0].mxu0
    %1643 = vmatprep.mubr.f32.mxu0 0.0
    %v1644 = vand.u32 %v1452, 4294901760
    %v1645 = vsub.f32 %v1452, %v1644
    %v1646 = vand.u32 %v1645, 4294901760
    %v1647 = vsub.f32 %v1645, %v1646
    %v1648 = vand.u32 %v1647, 4294901760
    %1649 = vmatmul.mubr.f32.gmra.mrb[0].mxu0 %v1648
    %v1650 = vpop.f32.mrb[0].mxu0
    %v1651 = vadd.f32 0.0, %v1650
    %v1652 = vpop.f32.mrb[0].mxu0
    %1653 = vmatprep.mubr.f32.mxu0 0.0
    %v1654 = vand.u32 %v1455, 4294901760
    %v1655 = vsub.f32 %v1455, %v1654
    %v1656 = vand.u32 %v1655, 4294901760
    %v1657 = vsub.f32 %v1655, %v1656
    %v1658 = vand.u32 %v1657, 4294901760
    %1659 = vmatmul.mubr.f32.gmra.mrb[0].mxu0 %v1658
    %v1660 = vpop.f32.mrb[0].mxu0
    %v1661 = vadd.f32 0.0, %v1660
    %v1662 = vpop.f32.mrb[0].mxu0
    %1663 = vmatprep.mubr.f32.mxu0 0.0
    %v1664 = vand.u32 %v1458, 4294901760
    %v1665 = vsub.f32 %v1458, %v1664
    %v1666 = vand.u32 %v1665, 4294901760
    %v1667 = vsub.f32 %v1665, %v1666
    %v1668 = vand.u32 %v1667, 4294901760
    %1669 = vmatmul.mubr.f32.gmra.mrb[0].mxu0 %v1668
    %v1670 = vpop.f32.mrb[0].mxu0
    %v1671 = vadd.f32 0.0, %v1670
    %v1672 = vpop.f32.mrb[0].mxu0
    %1673 = vmatprep.mubr.f32.mxu0 0.0
    %v1674 = vand.u32 %v1461, 4294901760
    %v1675 = vsub.f32 %v1461, %v1674
    %v1676 = vand.u32 %v1675, 4294901760
    %v1677 = vsub.f32 %v1675, %v1676
    %v1678 = vand.u32 %v1677, 4294901760
    %1679 = vmatmul.mubr.f32.gmra.mrb[0].mxu0 %v1678
    %v1680 = vpop.f32.mrb[0].mxu0
    %v1681 = vadd.f32 0.0, %v1680
    %v1682 = vpop.f32.mrb[0].mxu0
    %1683 = vmatprep.mubr.f32.mxu0 0.0
    %v1684 = vand.u32 %v1464, 4294901760
    %v1685 = vsub.f32 %v1464, %v1684
    %v1686 = vand.u32 %v1685, 4294901760
    %v1687 = vsub.f32 %v1685, %v1686
    %v1688 = vand.u32 %v1687, 4294901760
    %1689 = vmatmul.mubr.f32.gmra.mrb[0].mxu0 %v1688
    %v1690 = vpop.f32.mrb[0].mxu0
    %v1691 = vadd.f32 0.0, %v1690
    %v1692 = vpop.f32.mrb[0].mxu0
    %1693 = vdwg.mxu0
    %1694 = vmatprep.subr.mxu0 0.0
    %v1695 = vand.u32 %v1414, 4294901760
    %v1696 = vsub.f32 %v1414, %v1695
    %v1697 = vand.u32 %v1696, 4294901760
    %v1698 = vsub.f32 %v1696, %v1697
    %v1699 = vand.u32 %v1698, 4294901760
    %1700 = vmatpush1.msra.mxu0 %v1699
    %1701 = vmatprep.subr.mxu0 0.0
    %v1702 = vand.u32 %v1415, 4294901760
    %v1703 = vsub.f32 %v1415, %v1702
    %v1704 = vand.u32 %v1703, 4294901760
    %v1705 = vsub.f32 %v1703, %v1704
    %v1706 = vand.u32 %v1705, 4294901760
    %1707 = vmatpush1.msra.mxu0 %v1706
    %1708 = vmatprep.subr.mxu0 0.0
    %v1709 = vand.u32 %v1416, 4294901760
    %v1710 = vsub.f32 %v1416, %v1709
    %v1711 = vand.u32 %v1710, 4294901760
    %v1712 = vsub.f32 %v1710, %v1711
    %v1713 = vand.u32 %v1712, 4294901760
    %1714 = vmatpush1.msra.mxu0 %v1713
    %1715 = vmatprep.subr.mxu0 0.0
    %1716 = vmatpush1.msra.mxu0 0.0
    %1717 = vmatprep.subr.mxu0 0.0
    %1718 = vmatpush1.msra.mxu0 0.0
    %1719 = vmatprep.subr.mxu0 0.0
    %1720 = vmatpush1.msra.mxu0 0.0
    %1721 = vmatprep.subr.mxu0 0.0
    %1722 = vmatpush1.msra.mxu0 0.0
    %1723 = vmatprep.subr.mxu0 0.0
    %1724 = vmatpush1.msra.mxu0 0.0
    %1725 = vmatprep.subr.mxu0 0.0
    %1726 = vmatpush1.msra.mxu0 0.0
    %1727 = vmatprep.subr.mxu0 0.0
    %1728 = vmatpush1.msra.mxu0 0.0
    %1729 = vmatprep.subr.mxu0 0.0
    %1730 = vmatpush1.msra.mxu0 0.0
    %1731 = vmatprep.subr.mxu0 0.0
    %1732 = vmatpush1.msra.mxu0 0.0
    %1733 = vmatprep.subr.mxu0 0.0
    %1734 = vmatpush1.msra.mxu0 0.0
    %1735 = vmatprep.subr.mxu0 0.0
    %1736 = vmatpush1.msra.mxu0 0.0
    %1737 = vmatprep.subr.mxu0 0.0
    %1738 = vmatpush1.msra.mxu0 0.0
    %1739 = vmatprep.subr.mxu0 0.0
    %1740 = vmatpush1.msra.mxu0 0.0
    %1741 = vmatprep.subr.mxu0 0.0
    %1742 = vmatpush1.msra.mxu0 0.0
    %1743 = vmatprep.subr.mxu0 0.0
    %1744 = vmatpush1.msra.mxu0 0.0
    %1745 = vmatprep.subr.mxu0 0.0
    %1746 = vmatpush1.msra.mxu0 0.0
    %1747 = vmatprep.subr.mxu0 0.0
    %1748 = vmatpush1.msra.mxu0 0.0
    %1749 = vmatprep.subr.mxu0 0.0
    %1750 = vmatpush1.msra.mxu0 0.0
    %1751 = vmatprep.subr.mxu0 0.0
    %1752 = vmatpush1.msra.mxu0 0.0
    %1753 = vmatprep.subr.mxu0 0.0
    %1754 = vmatpush1.msra.mxu0 0.0
    %1755 = vmatprep.subr.mxu0 0.0
    %1756 = vmatpush1.msra.mxu0 0.0
    %1757 = vmatprep.subr.mxu0 0.0
    %1758 = vmatpush1.msra.mxu0 0.0
    %1759 = vmatprep.subr.mxu0 0.0
    %1760 = vmatpush1.msra.mxu0 0.0
    %1761 = vmatprep.subr.mxu0 0.0
    %1762 = vmatpush1.msra.mxu0 0.0
    %1763 = vmatprep.subr.mxu0 0.0
    %1764 = vmatpush1.msra.mxu0 0.0
    %1765 = vmatprep.subr.mxu0 0.0
    %1766 = vmatpush1.msra.mxu0 0.0
    %1767 = vmatprep.subr.mxu0 0.0
    %1768 = vmatpush1.msra.mxu0 0.0
    %1769 = vmatprep.subr.mxu0 0.0
    %1770 = vmatpush1.msra.mxu0 0.0
    %1771 = vmatprep.subr.mxu0 0.0
    %1772 = vmatpush1.msra.mxu0 0.0
    %1773 = vmatprep.mubr.f32.mxu0 0.0
    %v1774 = vand.u32 %v1419, 4294901760
    %1775 = vmatmul.mubr.f32.gmra.mrb[0].mxu0 %v1774
    %v1776 = vpop.f32.mrb[0].mxu0
    %v1777 = vadd.f32 %v1541, %v1776
    %v1778 = vpop.f32.mrb[0].mxu0
    %1779 = vmatprep.mubr.f32.mxu0 0.0
    %v1780 = vand.u32 %v1422, 4294901760
    %1781 = vmatmul.mubr.f32.gmra.mrb[0].mxu0 %v1780
    %v1782 = vpop.f32.mrb[0].mxu0
    %v1783 = vadd.f32 %v1551, %v1782
    %v1784 = vpop.f32.mrb[0].mxu0
    %1785 = vmatprep.mubr.f32.mxu0 0.0
    %v1786 = vand.u32 %v1425, 4294901760
    %1787 = vmatmul.mubr.f32.gmra.mrb[0].mxu0 %v1786
    %v1788 = vpop.f32.mrb[0].mxu0
    %v1789 = vadd.f32 %v1561, %v1788
    %v1790 = vpop.f32.mrb[0].mxu0
    %1791 = vmatprep.mubr.f32.mxu0 0.0
    %v1792 = vand.u32 %v1428, 4294901760
    %1793 = vmatmul.mubr.f32.gmra.mrb[0].mxu0 %v1792
    %v1794 = vpop.f32.mrb[0].mxu0
    %v1795 = vadd.f32 %v1571, %v1794
    %v1796 = vpop.f32.mrb[0].mxu0
    %1797 = vmatprep.mubr.f32.mxu0 0.0
    %v1798 = vand.u32 %v1431, 4294901760
    %1799 = vmatmul.mubr.f32.gmra.mrb[0].mxu0 %v1798
    %v1800 = vpop.f32.mrb[0].mxu0
    %v1801 = vadd.f32 %v1581, %v1800
    %v1802 = vpop.f32.mrb[0].mxu0
    %1803 = vmatprep.mubr.f32.mxu0 0.0
    %v1804 = vand.u32 %v1434, 4294901760
    %1805 = vmatmul.mubr.f32.gmra.mrb[0].mxu0 %v1804
    %v1806 = vpop.f32.mrb[0].mxu0
    %v1807 = vadd.f32 %v1591, %v1806
    %v1808 = vpop.f32.mrb[0].mxu0
    %1809 = vmatprep.mubr.f32.mxu0 0.0
    %v1810 = vand.u32 %v1437, 4294901760
    %1811 = vmatmul.mubr.f32.gmra.mrb[0].mxu0 %v1810
    %v1812 = vpop.f32.mrb[0].mxu0
    %v1813 = vadd.f32 %v1601, %v1812
    %v1814 = vpop.f32.mrb[0].mxu0
    %1815 = vmatprep.mubr.f32.mxu0 0.0
    %v1816 = vand.u32 %v1440, 4294901760
    %1817 = vmatmul.mubr.f32.gmra.mrb[0].mxu0 %v1816
    %v1818 = vpop.f32.mrb[0].mxu0
    %v1819 = vadd.f32 %v1611, %v1818
    %v1820 = vpop.f32.mrb[0].mxu0
    %1821 = vmatprep.mubr.f32.mxu0 0.0
    %v1822 = vand.u32 %v1443, 4294901760
    %1823 = vmatmul.mubr.f32.gmra.mrb[0].mxu0 %v1822
    %v1824 = vpop.f32.mrb[0].mxu0
    %v1825 = vadd.f32 %v1621, %v1824
    %v1826 = vpop.f32.mrb[0].mxu0
    %1827 = vmatprep.mubr.f32.mxu0 0.0
    %v1828 = vand.u32 %v1446, 4294901760
    %1829 = vmatmul.mubr.f32.gmra.mrb[0].mxu0 %v1828
    %v1830 = vpop.f32.mrb[0].mxu0
    %v1831 = vadd.f32 %v1631, %v1830
    %v1832 = vpop.f32.mrb[0].mxu0
    %1833 = vmatprep.mubr.f32.mxu0 0.0
    %v1834 = vand.u32 %v1449, 4294901760
    %1835 = vmatmul.mubr.f32.gmra.mrb[0].mxu0 %v1834
    %v1836 = vpop.f32.mrb[0].mxu0
    %v1837 = vadd.f32 %v1641, %v1836
    %v1838 = vpop.f32.mrb[0].mxu0
    %1839 = vmatprep.mubr.f32.mxu0 0.0
    %v1840 = vand.u32 %v1452, 4294901760
    %1841 = vmatmul.mubr.f32.gmra.mrb[0].mxu0 %v1840
    %v1842 = vpop.f32.mrb[0].mxu0
    %v1843 = vadd.f32 %v1651, %v1842
    %v1844 = vpop.f32.mrb[0].mxu0
    %1845 = vmatprep.mubr.f32.mxu0 0.0
    %v1846 = vand.u32 %v1455, 4294901760
    %1847 = vmatmul.mubr.f32.gmra.mrb[0].mxu0 %v1846
    %v1848 = vpop.f32.mrb[0].mxu0
    %v1849 = vadd.f32 %v1661, %v1848
    %v1850 = vpop.f32.mrb[0].mxu0
    %1851 = vmatprep.mubr.f32.mxu0 0.0
    %v1852 = vand.u32 %v1458, 4294901760
    %1853 = vmatmul.mubr.f32.gmra.mrb[0].mxu0 %v1852
    %v1854 = vpop.f32.mrb[0].mxu0
    %v1855 = vadd.f32 %v1671, %v1854
    %v1856 = vpop.f32.mrb[0].mxu0
    %1857 = vmatprep.mubr.f32.mxu0 0.0
    %v1858 = vand.u32 %v1461, 4294901760
    %1859 = vmatmul.mubr.f32.gmra.mrb[0].mxu0 %v1858
    %v1860 = vpop.f32.mrb[0].mxu0
    %v1861 = vadd.f32 %v1681, %v1860
    %v1862 = vpop.f32.mrb[0].mxu0
    %1863 = vmatprep.mubr.f32.mxu0 0.0
    %v1864 = vand.u32 %v1464, 4294901760
    %1865 = vmatmul.mubr.f32.gmra.mrb[0].mxu0 %v1864
    %v1866 = vpop.f32.mrb[0].mxu0
    %v1867 = vadd.f32 %v1691, %v1866
    %v1868 = vpop.f32.mrb[0].mxu0
    %1869 = vdwg.mxu0
    %1870 = vmatprep.subr.mxu0 0.0
    %v1871 = vand.u32 %v1414, 4294901760
    %v1872 = vsub.f32 %v1414, %v1871
    %1873 = vmatpush1.msra.mxu0 %v1872
    %1874 = vmatprep.subr.mxu0 0.0
    %v1875 = vand.u32 %v1415, 4294901760
    %v1876 = vsub.f32 %v1415, %v1875
    %1877 = vmatpush1.msra.mxu0 %v1876
    %1878 = vmatprep.subr.mxu0 0.0
    %v1879 = vand.u32 %v1416, 4294901760
    %v1880 = vsub.f32 %v1416, %v1879
    %1881 = vmatpush1.msra.mxu0 %v1880
    %1882 = vmatprep.subr.mxu0 0.0
    %1883 = vmatpush1.msra.mxu0 0.0
    %1884 = vmatprep.subr.mxu0 0.0
    %1885 = vmatpush1.msra.mxu0 0.0
    %1886 = vmatprep.subr.mxu0 0.0
    %1887 = vmatpush1.msra.mxu0 0.0
    %1888 = vmatprep.subr.mxu0 0.0
    %1889 = vmatpush1.msra.mxu0 0.0
    %1890 = vmatprep.subr.mxu0 0.0
    %1891 = vmatpush1.msra.mxu0 0.0
    %1892 = vmatprep.subr.mxu0 0.0
    %1893 = vmatpush1.msra.mxu0 0.0
    %1894 = vmatprep.subr.mxu0 0.0
    %1895 = vmatpush1.msra.mxu0 0.0
    %1896 = vmatprep.subr.mxu0 0.0
    %1897 = vmatpush1.msra.mxu0 0.0
    %1898 = vmatprep.subr.mxu0 0.0
    %1899 = vmatpush1.msra.mxu0 0.0
    %1900 = vmatprep.subr.mxu0 0.0
    %1901 = vmatpush1.msra.mxu0 0.0
    %1902 = vmatprep.subr.mxu0 0.0
    %1903 = vmatpush1.msra.mxu0 0.0
    %1904 = vmatprep.subr.mxu0 0.0
    %1905 = vmatpush1.msra.mxu0 0.0
    %1906 = vmatprep.subr.mxu0 0.0
    %1907 = vmatpush1.msra.mxu0 0.0
    %1908 = vmatprep.subr.mxu0 0.0
    %1909 = vmatpush1.msra.mxu0 0.0
    %1910 = vmatprep.subr.mxu0 0.0
    %1911 = vmatpush1.msra.mxu0 0.0
    %1912 = vmatprep.subr.mxu0 0.0
    %1913 = vmatpush1.msra.mxu0 0.0
    %1914 = vmatprep.subr.mxu0 0.0
    %1915 = vmatpush1.msra.mxu0 0.0
    %1916 = vmatprep.subr.mxu0 0.0
    %1917 = vmatpush1.msra.mxu0 0.0
    %1918 = vmatprep.subr.mxu0 0.0
    %1919 = vmatpush1.msra.mxu0 0.0
    %1920 = vmatprep.subr.mxu0 0.0
    %1921 = vmatpush1.msra.mxu0 0.0
    %1922 = vmatprep.subr.mxu0 0.0
    %1923 = vmatpush1.msra.mxu0 0.0
    %1924 = vmatprep.subr.mxu0 0.0
    %1925 = vmatpush1.msra.mxu0 0.0
    %1926 = vmatprep.subr.mxu0 0.0
    %1927 = vmatpush1.msra.mxu0 0.0
    %1928 = vmatprep.subr.mxu0 0.0
    %1929 = vmatpush1.msra.mxu0 0.0
    %1930 = vmatprep.subr.mxu0 0.0
    %1931 = vmatpush1.msra.mxu0 0.0
    %1932 = vmatprep.subr.mxu0 0.0
    %1933 = vmatpush1.msra.mxu0 0.0
    %1934 = vmatprep.subr.mxu0 0.0
    %1935 = vmatpush1.msra.mxu0 0.0
    %1936 = vmatprep.subr.mxu0 0.0
    %1937 = vmatpush1.msra.mxu0 0.0
    %1938 = vmatprep.subr.mxu0 0.0
    %1939 = vmatpush1.msra.mxu0 0.0
    %1940 = vmatprep.mubr.f32.mxu0 0.0
    %v1941 = vand.u32 %v1419, 4294901760
    %v1942 = vsub.f32 %v1419, %v1941
    %1943 = vmatmul.mubr.f32.gmra.mrb[0].mxu0 %v1942
    %v1944 = vpop.f32.mrb[0].mxu0
    %v1945 = vadd.f32 %v1777, %v1944
    %v1946 = vpop.f32.mrb[0].mxu0
    %1947 = vmatprep.mubr.f32.mxu0 0.0
    %v1948 = vand.u32 %v1422, 4294901760
    %v1949 = vsub.f32 %v1422, %v1948
    %1950 = vmatmul.mubr.f32.gmra.mrb[0].mxu0 %v1949
    %v1951 = vpop.f32.mrb[0].mxu0
    %v1952 = vadd.f32 %v1783, %v1951
    %v1953 = vpop.f32.mrb[0].mxu0
    %1954 = vmatprep.mubr.f32.mxu0 0.0
    %v1955 = vand.u32 %v1425, 4294901760
    %v1956 = vsub.f32 %v1425, %v1955
    %1957 = vmatmul.mubr.f32.gmra.mrb[0].mxu0 %v1956
    %v1958 = vpop.f32.mrb[0].mxu0
    %v1959 = vadd.f32 %v1789, %v1958
    %v1960 = vpop.f32.mrb[0].mxu0
    %1961 = vmatprep.mubr.f32.mxu0 0.0
    %v1962 = vand.u32 %v1428, 4294901760
    %v1963 = vsub.f32 %v1428, %v1962
    %1964 = vmatmul.mubr.f32.gmra.mrb[0].mxu0 %v1963
    %v1965 = vpop.f32.mrb[0].mxu0
    %v1966 = vadd.f32 %v1795, %v1965
    %v1967 = vpop.f32.mrb[0].mxu0
    %1968 = vmatprep.mubr.f32.mxu0 0.0
    %v1969 = vand.u32 %v1431, 4294901760
    %v1970 = vsub.f32 %v1431, %v1969
    %1971 = vmatmul.mubr.f32.gmra.mrb[0].mxu0 %v1970
    %v1972 = vpop.f32.mrb[0].mxu0
    %v1973 = vadd.f32 %v1801, %v1972
    %v1974 = vpop.f32.mrb[0].mxu0
    %1975 = vmatprep.mubr.f32.mxu0 0.0
    %v1976 = vand.u32 %v1434, 4294901760
    %v1977 = vsub.f32 %v1434, %v1976
    %1978 = vmatmul.mubr.f32.gmra.mrb[0].mxu0 %v1977
    %v1979 = vpop.f32.mrb[0].mxu0
    %v1980 = vadd.f32 %v1807, %v1979
    %v1981 = vpop.f32.mrb[0].mxu0
    %1982 = vmatprep.mubr.f32.mxu0 0.0
    %v1983 = vand.u32 %v1437, 4294901760
    %v1984 = vsub.f32 %v1437, %v1983
    %1985 = vmatmul.mubr.f32.gmra.mrb[0].mxu0 %v1984
    %v1986 = vpop.f32.mrb[0].mxu0
    %v1987 = vadd.f32 %v1813, %v1986
    %v1988 = vpop.f32.mrb[0].mxu0
    %1989 = vmatprep.mubr.f32.mxu0 0.0
    %v1990 = vand.u32 %v1440, 4294901760
    %v1991 = vsub.f32 %v1440, %v1990
    %1992 = vmatmul.mubr.f32.gmra.mrb[0].mxu0 %v1991
    %v1993 = vpop.f32.mrb[0].mxu0
    %v1994 = vadd.f32 %v1819, %v1993
    %v1995 = vpop.f32.mrb[0].mxu0
    %1996 = vmatprep.mubr.f32.mxu0 0.0
    %v1997 = vand.u32 %v1443, 4294901760
    %v1998 = vsub.f32 %v1443, %v1997
    %1999 = vmatmul.mubr.f32.gmra.mrb[0].mxu0 %v1998
    %v2000 = vpop.f32.mrb[0].mxu0
    %v2001 = vadd.f32 %v1825, %v2000
    %v2002 = vpop.f32.mrb[0].mxu0
    %2003 = vmatprep.mubr.f32.mxu0 0.0
    %v2004 = vand.u32 %v1446, 4294901760
    %v2005 = vsub.f32 %v1446, %v2004
    %2006 = vmatmul.mubr.f32.gmra.mrb[0].mxu0 %v2005
    %v2007 = vpop.f32.mrb[0].mxu0
    %v2008 = vadd.f32 %v1831, %v2007
    %v2009 = vpop.f32.mrb[0].mxu0
    %2010 = vmatprep.mubr.f32.mxu0 0.0
    %v2011 = vand.u32 %v1449, 4294901760
    %v2012 = vsub.f32 %v1449, %v2011
    %2013 = vmatmul.mubr.f32.gmra.mrb[0].mxu0 %v2012
    %v2014 = vpop.f32.mrb[0].mxu0
    %v2015 = vadd.f32 %v1837, %v2014
    %v2016 = vpop.f32.mrb[0].mxu0
    %2017 = vmatprep.mubr.f32.mxu0 0.0
    %v2018 = vand.u32 %v1452, 4294901760
    %v2019 = vsub.f32 %v1452, %v2018
    %2020 = vmatmul.mubr.f32.gmra.mrb[0].mxu0 %v2019
    %v2021 = vpop.f32.mrb[0].mxu0
    %v2022 = vadd.f32 %v1843, %v2021
    %v2023 = vpop.f32.mrb[0].mxu0
    %2024 = vmatprep.mubr.f32.mxu0 0.0
    %v2025 = vand.u32 %v1455, 4294901760
    %v2026 = vsub.f32 %v1455, %v2025
    %2027 = vmatmul.mubr.f32.gmra.mrb[0].mxu0 %v2026
    %v2028 = vpop.f32.mrb[0].mxu0
    %v2029 = vadd.f32 %v1849, %v2028
    %v2030 = vpop.f32.mrb[0].mxu0
    %2031 = vmatprep.mubr.f32.mxu0 0.0
    %v2032 = vand.u32 %v1458, 4294901760
    %v2033 = vsub.f32 %v1458, %v2032
    %2034 = vmatmul.mubr.f32.gmra.mrb[0].mxu0 %v2033
    %v2035 = vpop.f32.mrb[0].mxu0
    %v2036 = vadd.f32 %v1855, %v2035
    %v2037 = vpop.f32.mrb[0].mxu0
    %2038 = vmatprep.mubr.f32.mxu0 0.0
    %v2039 = vand.u32 %v1461, 4294901760
    %v2040 = vsub.f32 %v1461, %v2039
    %2041 = vmatmul.mubr.f32.gmra.mrb[0].mxu0 %v2040
    %v2042 = vpop.f32.mrb[0].mxu0
    %v2043 = vadd.f32 %v1861, %v2042
    %v2044 = vpop.f32.mrb[0].mxu0
    %2045 = vmatprep.mubr.f32.mxu0 0.0
    %v2046 = vand.u32 %v1464, 4294901760
    %v2047 = vsub.f32 %v1464, %v2046
    %2048 = vmatmul.mubr.f32.gmra.mrb[0].mxu0 %v2047
    %v2049 = vpop.f32.mrb[0].mxu0
    %v2050 = vadd.f32 %v1867, %v2049
    %v2051 = vpop.f32.mrb[0].mxu0
    %2052 = vdwg.mxu0
    %2053 = vmatprep.subr.mxu0 0.0
    %v2054 = vand.u32 %v1414, 4294901760
    %2055 = vmatpush1.msra.mxu0 %v2054
    %2056 = vmatprep.subr.mxu0 0.0
    %v2057 = vand.u32 %v1415, 4294901760
    %2058 = vmatpush1.msra.mxu0 %v2057
    %2059 = vmatprep.subr.mxu0 0.0
    %v2060 = vand.u32 %v1416, 4294901760
    %2061 = vmatpush1.msra.mxu0 %v2060
    %2062 = vmatprep.subr.mxu0 0.0
    %2063 = vmatpush1.msra.mxu0 0.0
    %2064 = vmatprep.subr.mxu0 0.0
    %2065 = vmatpush1.msra.mxu0 0.0
    %2066 = vmatprep.subr.mxu0 0.0
    %2067 = vmatpush1.msra.mxu0 0.0
    %2068 = vmatprep.subr.mxu0 0.0
    %2069 = vmatpush1.msra.mxu0 0.0
    %2070 = vmatprep.subr.mxu0 0.0
    %2071 = vmatpush1.msra.mxu0 0.0
    %2072 = vmatprep.subr.mxu0 0.0
    %2073 = vmatpush1.msra.mxu0 0.0
    %2074 = vmatprep.subr.mxu0 0.0
    %2075 = vmatpush1.msra.mxu0 0.0
    %2076 = vmatprep.subr.mxu0 0.0
    %2077 = vmatpush1.msra.mxu0 0.0
    %2078 = vmatprep.subr.mxu0 0.0
    %2079 = vmatpush1.msra.mxu0 0.0
    %2080 = vmatprep.subr.mxu0 0.0
    %2081 = vmatpush1.msra.mxu0 0.0
    %2082 = vmatprep.subr.mxu0 0.0
    %2083 = vmatpush1.msra.mxu0 0.0
    %2084 = vmatprep.subr.mxu0 0.0
    %2085 = vmatpush1.msra.mxu0 0.0
    %2086 = vmatprep.subr.mxu0 0.0
    %2087 = vmatpush1.msra.mxu0 0.0
    %2088 = vmatprep.subr.mxu0 0.0
    %2089 = vmatpush1.msra.mxu0 0.0
    %2090 = vmatprep.subr.mxu0 0.0
    %2091 = vmatpush1.msra.mxu0 0.0
    %2092 = vmatprep.subr.mxu0 0.0
    %2093 = vmatpush1.msra.mxu0 0.0
    %2094 = vmatprep.subr.mxu0 0.0
    %2095 = vmatpush1.msra.mxu0 0.0
    %2096 = vmatprep.subr.mxu0 0.0
    %2097 = vmatpush1.msra.mxu0 0.0
    %2098 = vmatprep.subr.mxu0 0.0
    %2099 = vmatpush1.msra.mxu0 0.0
    %2100 = vmatprep.subr.mxu0 0.0
    %2101 = vmatpush1.msra.mxu0 0.0
    %2102 = vmatprep.subr.mxu0 0.0
    %2103 = vmatpush1.msra.mxu0 0.0
    %2104 = vmatprep.subr.mxu0 0.0
    %2105 = vmatpush1.msra.mxu0 0.0
    %2106 = vmatprep.subr.mxu0 0.0
    %2107 = vmatpush1.msra.mxu0 0.0
    %2108 = vmatprep.subr.mxu0 0.0
    %2109 = vmatpush1.msra.mxu0 0.0
    %2110 = vmatprep.subr.mxu0 0.0
    %2111 = vmatpush1.msra.mxu0 0.0
    %2112 = vmatprep.subr.mxu0 0.0
    %2113 = vmatpush1.msra.mxu0 0.0
    %2114 = vmatprep.subr.mxu0 0.0
    %2115 = vmatpush1.msra.mxu0 0.0
    %2116 = vmatprep.subr.mxu0 0.0
    %2117 = vmatpush1.msra.mxu0 0.0
    %2118 = vmatprep.subr.mxu0 0.0
    %2119 = vmatpush1.msra.mxu0 0.0
    %2120 = vmatprep.mubr.f32.mxu0 0.0
    %v2121 = vand.u32 %v1419, 4294901760
    %v2122 = vsub.f32 %v1419, %v2121
    %v2123 = vand.u32 %v2122, 4294901760
    %2124 = vmatmul.mubr.f32.gmra.mrb[0].mxu0 %v2123
    %v2125 = vpop.f32.mrb[0].mxu0
    %v2126 = vadd.f32 %v1945, %v2125
    %v2127 = vpop.f32.mrb[0].mxu0
    %2128 = vmatprep.mubr.f32.mxu0 0.0
    %v2129 = vand.u32 %v1422, 4294901760
    %v2130 = vsub.f32 %v1422, %v2129
    %v2131 = vand.u32 %v2130, 4294901760
    %2132 = vmatmul.mubr.f32.gmra.mrb[0].mxu0 %v2131
    %v2133 = vpop.f32.mrb[0].mxu0
    %v2134 = vadd.f32 %v1952, %v2133
    %v2135 = vpop.f32.mrb[0].mxu0
    %2136 = vmatprep.mubr.f32.mxu0 0.0
    %v2137 = vand.u32 %v1425, 4294901760
    %v2138 = vsub.f32 %v1425, %v2137
    %v2139 = vand.u32 %v2138, 4294901760
    %2140 = vmatmul.mubr.f32.gmra.mrb[0].mxu0 %v2139
    %v2141 = vpop.f32.mrb[0].mxu0
    %v2142 = vadd.f32 %v1959, %v2141
    %v2143 = vpop.f32.mrb[0].mxu0
    %2144 = vmatprep.mubr.f32.mxu0 0.0
    %v2145 = vand.u32 %v1428, 4294901760
    %v2146 = vsub.f32 %v1428, %v2145
    %v2147 = vand.u32 %v2146, 4294901760
    %2148 = vmatmul.mubr.f32.gmra.mrb[0].mxu0 %v2147
    %v2149 = vpop.f32.mrb[0].mxu0
    %v2150 = vadd.f32 %v1966, %v2149
    %v2151 = vpop.f32.mrb[0].mxu0
    %2152 = vmatprep.mubr.f32.mxu0 0.0
    %v2153 = vand.u32 %v1431, 4294901760
    %v2154 = vsub.f32 %v1431, %v2153
    %v2155 = vand.u32 %v2154, 4294901760
    %2156 = vmatmul.mubr.f32.gmra.mrb[0].mxu0 %v2155
    %v2157 = vpop.f32.mrb[0].mxu0
    %v2158 = vadd.f32 %v1973, %v2157
    %v2159 = vpop.f32.mrb[0].mxu0
    %2160 = vmatprep.mubr.f32.mxu0 0.0
    %v2161 = vand.u32 %v1434, 4294901760
    %v2162 = vsub.f32 %v1434, %v2161
    %v2163 = vand.u32 %v2162, 4294901760
    %2164 = vmatmul.mubr.f32.gmra.mrb[0].mxu0 %v2163
    %v2165 = vpop.f32.mrb[0].mxu0
    %v2166 = vadd.f32 %v1980, %v2165
    %v2167 = vpop.f32.mrb[0].mxu0
    %2168 = vmatprep.mubr.f32.mxu0 0.0
    %v2169 = vand.u32 %v1437, 4294901760
    %v2170 = vsub.f32 %v1437, %v2169
    %v2171 = vand.u32 %v2170, 4294901760
    %2172 = vmatmul.mubr.f32.gmra.mrb[0].mxu0 %v2171
    %v2173 = vpop.f32.mrb[0].mxu0
    %v2174 = vadd.f32 %v1987, %v2173
    %v2175 = vpop.f32.mrb[0].mxu0
    %2176 = vmatprep.mubr.f32.mxu0 0.0
    %v2177 = vand.u32 %v1440, 4294901760
    %v2178 = vsub.f32 %v1440, %v2177
    %v2179 = vand.u32 %v2178, 4294901760
    %2180 = vmatmul.mubr.f32.gmra.mrb[0].mxu0 %v2179
    %v2181 = vpop.f32.mrb[0].mxu0
    %v2182 = vadd.f32 %v1994, %v2181
    %v2183 = vpop.f32.mrb[0].mxu0
    %2184 = vmatprep.mubr.f32.mxu0 0.0
    %v2185 = vand.u32 %v1443, 4294901760
    %v2186 = vsub.f32 %v1443, %v2185
    %v2187 = vand.u32 %v2186, 4294901760
    %2188 = vmatmul.mubr.f32.gmra.mrb[0].mxu0 %v2187
    %v2189 = vpop.f32.mrb[0].mxu0
    %v2190 = vadd.f32 %v2001, %v2189
    %v2191 = vpop.f32.mrb[0].mxu0
    %2192 = vmatprep.mubr.f32.mxu0 0.0
    %v2193 = vand.u32 %v1446, 4294901760
    %v2194 = vsub.f32 %v1446, %v2193
    %v2195 = vand.u32 %v2194, 4294901760
    %2196 = vmatmul.mubr.f32.gmra.mrb[0].mxu0 %v2195
    %v2197 = vpop.f32.mrb[0].mxu0
    %v2198 = vadd.f32 %v2008, %v2197
    %v2199 = vpop.f32.mrb[0].mxu0
    %2200 = vmatprep.mubr.f32.mxu0 0.0
    %v2201 = vand.u32 %v1449, 4294901760
    %v2202 = vsub.f32 %v1449, %v2201
    %v2203 = vand.u32 %v2202, 4294901760
    %2204 = vmatmul.mubr.f32.gmra.mrb[0].mxu0 %v2203
    %v2205 = vpop.f32.mrb[0].mxu0
    %v2206 = vadd.f32 %v2015, %v2205
    %v2207 = vpop.f32.mrb[0].mxu0
    %2208 = vmatprep.mubr.f32.mxu0 0.0
    %v2209 = vand.u32 %v1452, 4294901760
    %v2210 = vsub.f32 %v1452, %v2209
    %v2211 = vand.u32 %v2210, 4294901760
    %2212 = vmatmul.mubr.f32.gmra.mrb[0].mxu0 %v2211
    %v2213 = vpop.f32.mrb[0].mxu0
    %v2214 = vadd.f32 %v2022, %v2213
    %v2215 = vpop.f32.mrb[0].mxu0
    %2216 = vmatprep.mubr.f32.mxu0 0.0
    %v2217 = vand.u32 %v1455, 4294901760
    %v2218 = vsub.f32 %v1455, %v2217
    %v2219 = vand.u32 %v2218, 4294901760
    %2220 = vmatmul.mubr.f32.gmra.mrb[0].mxu0 %v2219
    %v2221 = vpop.f32.mrb[0].mxu0
    %v2222 = vadd.f32 %v2029, %v2221
    %v2223 = vpop.f32.mrb[0].mxu0
    %2224 = vmatprep.mubr.f32.mxu0 0.0
    %v2225 = vand.u32 %v1458, 4294901760
    %v2226 = vsub.f32 %v1458, %v2225
    %v2227 = vand.u32 %v2226, 4294901760
    %2228 = vmatmul.mubr.f32.gmra.mrb[0].mxu0 %v2227
    %v2229 = vpop.f32.mrb[0].mxu0
    %v2230 = vadd.f32 %v2036, %v2229
    %v2231 = vpop.f32.mrb[0].mxu0
    %2232 = vmatprep.mubr.f32.mxu0 0.0
    %v2233 = vand.u32 %v1461, 4294901760
    %v2234 = vsub.f32 %v1461, %v2233
    %v2235 = vand.u32 %v2234, 4294901760
    %2236 = vmatmul.mubr.f32.gmra.mrb[0].mxu0 %v2235
    %v2237 = vpop.f32.mrb[0].mxu0
    %v2238 = vadd.f32 %v2043, %v2237
    %v2239 = vpop.f32.mrb[0].mxu0
    %2240 = vmatprep.mubr.f32.mxu0 0.0
    %v2241 = vand.u32 %v1464, 4294901760
    %v2242 = vsub.f32 %v1464, %v2241
    %v2243 = vand.u32 %v2242, 4294901760
    %2244 = vmatmul.mubr.f32.gmra.mrb[0].mxu0 %v2243
    %v2245 = vpop.f32.mrb[0].mxu0
    %v2246 = vadd.f32 %v2050, %v2245
    %v2247 = vpop.f32.mrb[0].mxu0
    %2248 = vdwg.mxu0
    %2249 = vmatprep.subr.mxu0 0.0
    %v2250 = vand.u32 %v1414, 4294901760
    %v2251 = vsub.f32 %v1414, %v2250
    %v2252 = vand.u32 %v2251, 4294901760
    %2253 = vmatpush1.msra.mxu0 %v2252
    %2254 = vmatprep.subr.mxu0 0.0
    %v2255 = vand.u32 %v1415, 4294901760
    %v2256 = vsub.f32 %v1415, %v2255
    %v2257 = vand.u32 %v2256, 4294901760
    %2258 = vmatpush1.msra.mxu0 %v2257
    %2259 = vmatprep.subr.mxu0 0.0
    %v2260 = vand.u32 %v1416, 4294901760
    %v2261 = vsub.f32 %v1416, %v2260
    %v2262 = vand.u32 %v2261, 4294901760
    %2263 = vmatpush1.msra.mxu0 %v2262
    %2264 = vmatprep.subr.mxu0 0.0
    %2265 = vmatpush1.msra.mxu0 0.0
    %2266 = vmatprep.subr.mxu0 0.0
    %2267 = vmatpush1.msra.mxu0 0.0
    %2268 = vmatprep.subr.mxu0 0.0
    %2269 = vmatpush1.msra.mxu0 0.0
    %2270 = vmatprep.subr.mxu0 0.0
    %2271 = vmatpush1.msra.mxu0 0.0
    %2272 = vmatprep.subr.mxu0 0.0
    %2273 = vmatpush1.msra.mxu0 0.0
    %2274 = vmatprep.subr.mxu0 0.0
    %2275 = vmatpush1.msra.mxu0 0.0
    %2276 = vmatprep.subr.mxu0 0.0
    %2277 = vmatpush1.msra.mxu0 0.0
    %2278 = vmatprep.subr.mxu0 0.0
    %2279 = vmatpush1.msra.mxu0 0.0
    %2280 = vmatprep.subr.mxu0 0.0
    %2281 = vmatpush1.msra.mxu0 0.0
    %2282 = vmatprep.subr.mxu0 0.0
    %2283 = vmatpush1.msra.mxu0 0.0
    %2284 = vmatprep.subr.mxu0 0.0
    %2285 = vmatpush1.msra.mxu0 0.0
    %2286 = vmatprep.subr.mxu0 0.0
    %2287 = vmatpush1.msra.mxu0 0.0
    %2288 = vmatprep.subr.mxu0 0.0
    %2289 = vmatpush1.msra.mxu0 0.0
    %2290 = vmatprep.subr.mxu0 0.0
    %2291 = vmatpush1.msra.mxu0 0.0
    %2292 = vmatprep.subr.mxu0 0.0
    %2293 = vmatpush1.msra.mxu0 0.0
    %2294 = vmatprep.subr.mxu0 0.0
    %2295 = vmatpush1.msra.mxu0 0.0
    %2296 = vmatprep.subr.mxu0 0.0
    %2297 = vmatpush1.msra.mxu0 0.0
    %2298 = vmatprep.subr.mxu0 0.0
    %2299 = vmatpush1.msra.mxu0 0.0
    %2300 = vmatprep.subr.mxu0 0.0
    %2301 = vmatpush1.msra.mxu0 0.0
    %2302 = vmatprep.subr.mxu0 0.0
    %2303 = vmatpush1.msra.mxu0 0.0
    %2304 = vmatprep.subr.mxu0 0.0
    %2305 = vmatpush1.msra.mxu0 0.0
    %2306 = vmatprep.subr.mxu0 0.0
    %2307 = vmatpush1.msra.mxu0 0.0
    %2308 = vmatprep.subr.mxu0 0.0
    %2309 = vmatpush1.msra.mxu0 0.0
    %2310 = vmatprep.subr.mxu0 0.0
    %2311 = vmatpush1.msra.mxu0 0.0
    %2312 = vmatprep.subr.mxu0 0.0
    %2313 = vmatpush1.msra.mxu0 0.0
    %2314 = vmatprep.subr.mxu0 0.0
    %2315 = vmatpush1.msra.mxu0 0.0
    %2316 = vmatprep.subr.mxu0 0.0
    %2317 = vmatpush1.msra.mxu0 0.0
    %2318 = vmatprep.subr.mxu0 0.0
    %2319 = vmatpush1.msra.mxu0 0.0
    %2320 = vmatprep.subr.mxu0 0.0
    %2321 = vmatpush1.msra.mxu0 0.0
    %2322 = vmatprep.mubr.f32.mxu0 0.0
    %v2323 = vand.u32 %v1419, 4294901760
    %2324 = vmatmul.mubr.f32.gmra.mrb[0].mxu0 %v2323
    %v2325 = vpop.f32.mrb[0].mxu0
    %v2326 = vadd.f32 %v2126, %v2325
    %v2327 = vpop.f32.mrb[0].mxu0
    %2328 = vmatprep.mubr.f32.mxu0 0.0
    %v2329 = vand.u32 %v1422, 4294901760
    %2330 = vmatmul.mubr.f32.gmra.mrb[0].mxu0 %v2329
    %v2331 = vpop.f32.mrb[0].mxu0
    %v2332 = vadd.f32 %v2134, %v2331
    %v2333 = vpop.f32.mrb[0].mxu0
    %2334 = vmatprep.mubr.f32.mxu0 0.0
    %v2335 = vand.u32 %v1425, 4294901760
    %2336 = vmatmul.mubr.f32.gmra.mrb[0].mxu0 %v2335
    %v2337 = vpop.f32.mrb[0].mxu0
    %v2338 = vadd.f32 %v2142, %v2337
    %v2339 = vpop.f32.mrb[0].mxu0
    %2340 = vmatprep.mubr.f32.mxu0 0.0
    %v2341 = vand.u32 %v1428, 4294901760
    %2342 = vmatmul.mubr.f32.gmra.mrb[0].mxu0 %v2341
    %v2343 = vpop.f32.mrb[0].mxu0
    %v2344 = vadd.f32 %v2150, %v2343
    %v2345 = vpop.f32.mrb[0].mxu0
    %2346 = vmatprep.mubr.f32.mxu0 0.0
    %v2347 = vand.u32 %v1431, 4294901760
    %2348 = vmatmul.mubr.f32.gmra.mrb[0].mxu0 %v2347
    %v2349 = vpop.f32.mrb[0].mxu0
    %v2350 = vadd.f32 %v2158, %v2349
    %v2351 = vpop.f32.mrb[0].mxu0
    %2352 = vmatprep.mubr.f32.mxu0 0.0
    %v2353 = vand.u32 %v1434, 4294901760
    %2354 = vmatmul.mubr.f32.gmra.mrb[0].mxu0 %v2353
    %v2355 = vpop.f32.mrb[0].mxu0
    %v2356 = vadd.f32 %v2166, %v2355
    %v2357 = vpop.f32.mrb[0].mxu0
    %2358 = vmatprep.mubr.f32.mxu0 0.0
    %v2359 = vand.u32 %v1437, 4294901760
    %2360 = vmatmul.mubr.f32.gmra.mrb[0].mxu0 %v2359
    %v2361 = vpop.f32.mrb[0].mxu0
    %v2362 = vadd.f32 %v2174, %v2361
    %v2363 = vpop.f32.mrb[0].mxu0
    %2364 = vmatprep.mubr.f32.mxu0 0.0
    %v2365 = vand.u32 %v1440, 4294901760
    %2366 = vmatmul.mubr.f32.gmra.mrb[0].mxu0 %v2365
    %v2367 = vpop.f32.mrb[0].mxu0
    %v2368 = vadd.f32 %v2182, %v2367
    %v2369 = vpop.f32.mrb[0].mxu0
    %2370 = vmatprep.mubr.f32.mxu0 0.0
    %v2371 = vand.u32 %v1443, 4294901760
    %2372 = vmatmul.mubr.f32.gmra.mrb[0].mxu0 %v2371
    %v2373 = vpop.f32.mrb[0].mxu0
    %v2374 = vadd.f32 %v2190, %v2373
    %v2375 = vpop.f32.mrb[0].mxu0
    %2376 = vmatprep.mubr.f32.mxu0 0.0
    %v2377 = vand.u32 %v1446, 4294901760
    %2378 = vmatmul.mubr.f32.gmra.mrb[0].mxu0 %v2377
    %v2379 = vpop.f32.mrb[0].mxu0
    %v2380 = vadd.f32 %v2198, %v2379
    %v2381 = vpop.f32.mrb[0].mxu0
    %2382 = vmatprep.mubr.f32.mxu0 0.0
    %v2383 = vand.u32 %v1449, 4294901760
    %2384 = vmatmul.mubr.f32.gmra.mrb[0].mxu0 %v2383
    %v2385 = vpop.f32.mrb[0].mxu0
    %v2386 = vadd.f32 %v2206, %v2385
    %v2387 = vpop.f32.mrb[0].mxu0
    %2388 = vmatprep.mubr.f32.mxu0 0.0
    %v2389 = vand.u32 %v1452, 4294901760
    %2390 = vmatmul.mubr.f32.gmra.mrb[0].mxu0 %v2389
    %v2391 = vpop.f32.mrb[0].mxu0
    %v2392 = vadd.f32 %v2214, %v2391
    %v2393 = vpop.f32.mrb[0].mxu0
    %2394 = vmatprep.mubr.f32.mxu0 0.0
    %v2395 = vand.u32 %v1455, 4294901760
    %2396 = vmatmul.mubr.f32.gmra.mrb[0].mxu0 %v2395
    %v2397 = vpop.f32.mrb[0].mxu0
    %v2398 = vadd.f32 %v2222, %v2397
    %v2399 = vpop.f32.mrb[0].mxu0
    %2400 = vmatprep.mubr.f32.mxu0 0.0
    %v2401 = vand.u32 %v1458, 4294901760
    %2402 = vmatmul.mubr.f32.gmra.mrb[0].mxu0 %v2401
    %v2403 = vpop.f32.mrb[0].mxu0
    %v2404 = vadd.f32 %v2230, %v2403
    %v2405 = vpop.f32.mrb[0].mxu0
    %2406 = vmatprep.mubr.f32.mxu0 0.0
    %v2407 = vand.u32 %v1461, 4294901760
    %2408 = vmatmul.mubr.f32.gmra.mrb[0].mxu0 %v2407
    %v2409 = vpop.f32.mrb[0].mxu0
    %v2410 = vadd.f32 %v2238, %v2409
    %v2411 = vpop.f32.mrb[0].mxu0
    %2412 = vmatprep.mubr.f32.mxu0 0.0
    %v2413 = vand.u32 %v1464, 4294901760
    %2414 = vmatmul.mubr.f32.gmra.mrb[0].mxu0 %v2413
    %v2415 = vpop.f32.mrb[0].mxu0
    %v2416 = vadd.f32 %v2246, %v2415
    %v2417 = vpop.f32.mrb[0].mxu0
    %2418 = vdwg.mxu0
    %2419 = vmatprep.subr.mxu0 0.0
    %v2420 = vand.u32 %v1414, 4294901760
    %2421 = vmatpush1.msra.mxu0 %v2420
    %2422 = vmatprep.subr.mxu0 0.0
    %v2423 = vand.u32 %v1415, 4294901760
    %2424 = vmatpush1.msra.mxu0 %v2423
    %2425 = vmatprep.subr.mxu0 0.0
    %v2426 = vand.u32 %v1416, 4294901760
    %2427 = vmatpush1.msra.mxu0 %v2426
    %2428 = vmatprep.subr.mxu0 0.0
    %2429 = vmatpush1.msra.mxu0 0.0
    %2430 = vmatprep.subr.mxu0 0.0
    %2431 = vmatpush1.msra.mxu0 0.0
    %2432 = vmatprep.subr.mxu0 0.0
    %2433 = vmatpush1.msra.mxu0 0.0
    %2434 = vmatprep.subr.mxu0 0.0
    %2435 = vmatpush1.msra.mxu0 0.0
    %2436 = vmatprep.subr.mxu0 0.0
    %2437 = vmatpush1.msra.mxu0 0.0
    %2438 = vmatprep.subr.mxu0 0.0
    %2439 = vmatpush1.msra.mxu0 0.0
    %2440 = vmatprep.subr.mxu0 0.0
    %2441 = vmatpush1.msra.mxu0 0.0
    %2442 = vmatprep.subr.mxu0 0.0
    %2443 = vmatpush1.msra.mxu0 0.0
    %2444 = vmatprep.subr.mxu0 0.0
    %2445 = vmatpush1.msra.mxu0 0.0
    %2446 = vmatprep.subr.mxu0 0.0
    %2447 = vmatpush1.msra.mxu0 0.0
    %2448 = vmatprep.subr.mxu0 0.0
    %2449 = vmatpush1.msra.mxu0 0.0
    %2450 = vmatprep.subr.mxu0 0.0
    %2451 = vmatpush1.msra.mxu0 0.0
    %2452 = vmatprep.subr.mxu0 0.0
    %2453 = vmatpush1.msra.mxu0 0.0
    %2454 = vmatprep.subr.mxu0 0.0
    %2455 = vmatpush1.msra.mxu0 0.0
    %2456 = vmatprep.subr.mxu0 0.0
    %2457 = vmatpush1.msra.mxu0 0.0
    %2458 = vmatprep.subr.mxu0 0.0
    %2459 = vmatpush1.msra.mxu0 0.0
    %2460 = vmatprep.subr.mxu0 0.0
    %2461 = vmatpush1.msra.mxu0 0.0
    %2462 = vmatprep.subr.mxu0 0.0
    %2463 = vmatpush1.msra.mxu0 0.0
    %2464 = vmatprep.subr.mxu0 0.0
    %2465 = vmatpush1.msra.mxu0 0.0
    %2466 = vmatprep.subr.mxu0 0.0
    %2467 = vmatpush1.msra.mxu0 0.0
    %2468 = vmatprep.subr.mxu0 0.0
    %2469 = vmatpush1.msra.mxu0 0.0
    %2470 = vmatprep.subr.mxu0 0.0
    %2471 = vmatpush1.msra.mxu0 0.0
    %2472 = vmatprep.subr.mxu0 0.0
    %2473 = vmatpush1.msra.mxu0 0.0
    %2474 = vmatprep.subr.mxu0 0.0
    %2475 = vmatpush1.msra.mxu0 0.0
    %2476 = vmatprep.subr.mxu0 0.0
    %2477 = vmatpush1.msra.mxu0 0.0
    %2478 = vmatprep.subr.mxu0 0.0
    %2479 = vmatpush1.msra.mxu0 0.0
    %2480 = vmatprep.subr.mxu0 0.0
    %2481 = vmatpush1.msra.mxu0 0.0
    %2482 = vmatprep.subr.mxu0 0.0
    %2483 = vmatpush1.msra.mxu0 0.0
    %2484 = vmatprep.subr.mxu0 0.0
    %2485 = vmatpush1.msra.mxu0 0.0
    %2486 = vmatprep.mubr.f32.mxu0 0.0
    %v2487 = vand.u32 %v1419, 4294901760
    %2488 = vmatmul.mubr.f32.gmra.mrb[0].mxu0 %v2487
    %v2489 = vpop.f32.mrb[0].mxu0
    %v2490 = vadd.f32 %v2326, %v2489
    %v2491 = vpop.f32.mrb[0].mxu0
    %2492 = vmatprep.mubr.f32.mxu0 0.0
    %v2493 = vand.u32 %v1422, 4294901760
    %2494 = vmatmul.mubr.f32.gmra.mrb[0].mxu0 %v2493
    %v2495 = vpop.f32.mrb[0].mxu0
    %v2496 = vadd.f32 %v2332, %v2495
    %v2497 = vpop.f32.mrb[0].mxu0
    %2498 = vmatprep.mubr.f32.mxu0 0.0
    %v2499 = vand.u32 %v1425, 4294901760
    %2500 = vmatmul.mubr.f32.gmra.mrb[0].mxu0 %v2499
    %v2501 = vpop.f32.mrb[0].mxu0
    %v2502 = vadd.f32 %v2338, %v2501
    %v2503 = vpop.f32.mrb[0].mxu0
    %2504 = vmatprep.mubr.f32.mxu0 0.0
    %v2505 = vand.u32 %v1428, 4294901760
    %2506 = vmatmul.mubr.f32.gmra.mrb[0].mxu0 %v2505
    %v2507 = vpop.f32.mrb[0].mxu0
    %v2508 = vadd.f32 %v2344, %v2507
    %v2509 = vpop.f32.mrb[0].mxu0
    %2510 = vmatprep.mubr.f32.mxu0 0.0
    %v2511 = vand.u32 %v1431, 4294901760
    %2512 = vmatmul.mubr.f32.gmra.mrb[0].mxu0 %v2511
    %v2513 = vpop.f32.mrb[0].mxu0
    %v2514 = vadd.f32 %v2350, %v2513
    %v2515 = vpop.f32.mrb[0].mxu0
    %2516 = vmatprep.mubr.f32.mxu0 0.0
    %v2517 = vand.u32 %v1434, 4294901760
    %2518 = vmatmul.mubr.f32.gmra.mrb[0].mxu0 %v2517
    %v2519 = vpop.f32.mrb[0].mxu0
    %v2520 = vadd.f32 %v2356, %v2519
    %v2521 = vpop.f32.mrb[0].mxu0
    %2522 = vmatprep.mubr.f32.mxu0 0.0
    %v2523 = vand.u32 %v1437, 4294901760
    %2524 = vmatmul.mubr.f32.gmra.mrb[0].mxu0 %v2523
    %v2525 = vpop.f32.mrb[0].mxu0
    %v2526 = vadd.f32 %v2362, %v2525
    %v2527 = vpop.f32.mrb[0].mxu0
    %2528 = vmatprep.mubr.f32.mxu0 0.0
    %v2529 = vand.u32 %v1440, 4294901760
    %2530 = vmatmul.mubr.f32.gmra.mrb[0].mxu0 %v2529
    %v2531 = vpop.f32.mrb[0].mxu0
    %v2532 = vadd.f32 %v2368, %v2531
    %v2533 = vpop.f32.mrb[0].mxu0
    %2534 = vmatprep.mubr.f32.mxu0 0.0
    %v2535 = vand.u32 %v1443, 4294901760
    %2536 = vmatmul.mubr.f32.gmra.mrb[0].mxu0 %v2535
    %v2537 = vpop.f32.mrb[0].mxu0
    %v2538 = vadd.f32 %v2374, %v2537
    %v2539 = vpop.f32.mrb[0].mxu0
    %2540 = vmatprep.mubr.f32.mxu0 0.0
    %v2541 = vand.u32 %v1446, 4294901760
    %2542 = vmatmul.mubr.f32.gmra.mrb[0].mxu0 %v2541
    %v2543 = vpop.f32.mrb[0].mxu0
    %v2544 = vadd.f32 %v2380, %v2543
    %v2545 = vpop.f32.mrb[0].mxu0
    %2546 = vmatprep.mubr.f32.mxu0 0.0
    %v2547 = vand.u32 %v1449, 4294901760
    %2548 = vmatmul.mubr.f32.gmra.mrb[0].mxu0 %v2547
    %v2549 = vpop.f32.mrb[0].mxu0
    %v2550 = vadd.f32 %v2386, %v2549
    %v2551 = vpop.f32.mrb[0].mxu0
    %2552 = vmatprep.mubr.f32.mxu0 0.0
    %v2553 = vand.u32 %v1452, 4294901760
    %2554 = vmatmul.mubr.f32.gmra.mrb[0].mxu0 %v2553
    %v2555 = vpop.f32.mrb[0].mxu0
    %v2556 = vadd.f32 %v2392, %v2555
    %v2557 = vpop.f32.mrb[0].mxu0
    %2558 = vmatprep.mubr.f32.mxu0 0.0
    %v2559 = vand.u32 %v1455, 4294901760
    %2560 = vmatmul.mubr.f32.gmra.mrb[0].mxu0 %v2559
    %v2561 = vpop.f32.mrb[0].mxu0
    %v2562 = vadd.f32 %v2398, %v2561
    %v2563 = vpop.f32.mrb[0].mxu0
    %2564 = vmatprep.mubr.f32.mxu0 0.0
    %v2565 = vand.u32 %v1458, 4294901760
    %2566 = vmatmul.mubr.f32.gmra.mrb[0].mxu0 %v2565
    %v2567 = vpop.f32.mrb[0].mxu0
    %v2568 = vadd.f32 %v2404, %v2567
    %v2569 = vpop.f32.mrb[0].mxu0
    %2570 = vmatprep.mubr.f32.mxu0 0.0
    %v2571 = vand.u32 %v1461, 4294901760
    %2572 = vmatmul.mubr.f32.gmra.mrb[0].mxu0 %v2571
    %v2573 = vpop.f32.mrb[0].mxu0
    %v2574 = vadd.f32 %v2410, %v2573
    %v2575 = vpop.f32.mrb[0].mxu0
    %2576 = vmatprep.mubr.f32.mxu0 0.0
    %v2577 = vand.u32 %v1464, 4294901760
    %2578 = vmatmul.mubr.f32.gmra.mrb[0].mxu0 %v2577
    %v2579 = vpop.f32.mrb[0].mxu0
    %v2580 = vadd.f32 %v2416, %v2579
    %v2581 = vpop.f32.mrb[0].mxu0
    %2582 = vdwg.mxu0
    %v2583 = vmul.f32 %v1321, %v2490
    %v2584 = vmul.f32 %v1327, %v2496
    %v2585 = vmul.f32 %v1333, %v2502
    %v2586 = vmul.f32 %v1339, %v2508
    %v2587 = vmul.f32 %v1345, %v2514
    %v2588 = vmul.f32 %v1351, %v2520
    %v2589 = vmul.f32 %v1357, %v2526
    %v2590 = vmul.f32 %v1363, %v2532
    %v2591 = vmul.f32 %v1369, %v2538
    %v2592 = vmul.f32 %v1375, %v2544
    %v2593 = vmul.f32 %v1381, %v2550
    %v2594 = vmul.f32 %v1387, %v2556
    %v2595 = vmul.f32 %v1393, %v2562
    %v2596 = vmul.f32 %v1399, %v2568
    %v2597 = vmul.f32 %v1405, %v2574
    %v2598 = vmul.f32 %v1411, %v2580
    %v2599 = vld [vmem:[%s7] sm:$0x1]
    %v2601 = vlaneseq
    %v2602 = vshrl.u32 %v2601, 7
    %v2603 = vsub.s32 0, %v2602
    %v2604 = vrot.slane %v2599, %v2603
    %v2606 = vmul.f32 %v2583, %v2604
    %v2607 = vmul.f32 %v2584, %v2604
    %v2608 = vmul.f32 %v2585, %v2604
    %v2609 = vmul.f32 %v2586, %v2604
    %v2610 = vmul.f32 %v2587, %v2604
    %v2611 = vmul.f32 %v2588, %v2604
    %v2612 = vmul.f32 %v2589, %v2604
    %v2613 = vmul.f32 %v2590, %v2604
    %v2614 = vmul.f32 %v2591, %v2604
    %v2615 = vmul.f32 %v2592, %v2604
    %v2616 = vmul.f32 %v2593, %v2604
    %v2617 = vmul.f32 %v2594, %v2604
    %v2618 = vmul.f32 %v2595, %v2604
    %v2619 = vmul.f32 %v2596, %v2604
    %v2620 = vmul.f32 %v2597, %v2604
    %v2621 = vmul.f32 %v2598, %v2604
    %2622 = vadd.xlane.f32.xlu0 %v2606
    %v2623 = vpop.xlane.xlu0 %2622
    %2624 = vadd.xlane.f32.xlu0 %v2607
    %v2625 = vpop.xlane.xlu0 %2624
    %2626 = vadd.xlane.f32.xlu0 %v2608
    %v2627 = vpop.xlane.xlu0 %2626
    %2628 = vadd.xlane.f32.xlu0 %v2609
    %v2629 = vpop.xlane.xlu0 %2628
    %2630 = vadd.xlane.f32.xlu0 %v2610
    %v2631 = vpop.xlane.xlu0 %2630
    %2632 = vadd.xlane.f32.xlu0 %v2611
    %v2633 = vpop.xlane.xlu0 %2632
    %2634 = vadd.xlane.f32.xlu0 %v2612
    %v2635 = vpop.xlane.xlu0 %2634
    %2636 = vadd.xlane.f32.xlu0 %v2613
    %v2637 = vpop.xlane.xlu0 %2636
    %2638 = vadd.xlane.f32.xlu0 %v2614
    %v2639 = vpop.xlane.xlu0 %2638
    %2640 = vadd.xlane.f32.xlu0 %v2615
    %v2641 = vpop.xlane.xlu0 %2640
    %2642 = vadd.xlane.f32.xlu0 %v2616
    %v2643 = vpop.xlane.xlu0 %2642
    %2644 = vadd.xlane.f32.xlu0 %v2617
    %v2645 = vpop.xlane.xlu0 %2644
    %2646 = vadd.xlane.f32.xlu0 %v2618
    %v2647 = vpop.xlane.xlu0 %2646
    %2648 = vadd.xlane.f32.xlu0 %v2619
    %v2649 = vpop.xlane.xlu0 %2648
    %2650 = vadd.xlane.f32.xlu0 %v2620
    %v2651 = vpop.xlane.xlu0 %2650
    %2652 = vadd.xlane.f32.xlu0 %v2621
    %v2653 = vpop.xlane.xlu0 %2652
    %v2654 = vld [vmem:[%s4] sm:$0xff]
    %v2655 = vld [vmem:[%s4 + $0x8] sm:$0xff]
    %v2656 = vld [vmem:[%s4 + $0x10] sm:$0xff]
    %v2657 = vld [vmem:[%s4 + $0x18] sm:$0xff]
    %v2658 = vld [vmem:[%s4 + $0x20] sm:$0xff]
    %v2659 = vld [vmem:[%s4 + $0x28] sm:$0xff]
    %v2660 = vld [vmem:[%s4 + $0x30] sm:$0xff]
    %v2661 = vld [vmem:[%s4 + $0x38] sm:$0xff]
    %v2662 = vld [vmem:[%s4 + $0x40] sm:$0xff]
    %v2663 = vld [vmem:[%s4 + $0x48] sm:$0xff]
    %v2664 = vld [vmem:[%s4 + $0x50] sm:$0xff]
    %v2665 = vld [vmem:[%s4 + $0x58] sm:$0xff]
    %v2666 = vld [vmem:[%s4 + $0x60] sm:$0xff]
    %v2667 = vld [vmem:[%s4 + $0x68] sm:$0xff]
    %v2668 = vld [vmem:[%s4 + $0x70] sm:$0xff]
    %v2669 = vld [vmem:[%s4 + $0x78] sm:$0xff]
    %v2670 = vld [vmem:[%s5] sm:$0xff]
    %v2671 = vld [vmem:[%s5 + $0x8] sm:$0xff]
    %v2672 = vld [vmem:[%s5 + $0x10] sm:$0xff]
    %v2673 = vld [vmem:[%s5 + $0x18] sm:$0xff]
    %v2674 = vld [vmem:[%s5 + $0x20] sm:$0xff]
    %v2675 = vld [vmem:[%s5 + $0x28] sm:$0xff]
    %v2676 = vld [vmem:[%s5 + $0x30] sm:$0xff]
    %v2677 = vld [vmem:[%s5 + $0x38] sm:$0xff]
    %v2678 = vld [vmem:[%s5 + $0x40] sm:$0xff]
    %v2679 = vld [vmem:[%s5 + $0x48] sm:$0xff]
    %v2680 = vld [vmem:[%s5 + $0x50] sm:$0xff]
    %v2681 = vld [vmem:[%s5 + $0x58] sm:$0xff]
    %v2682 = vld [vmem:[%s5 + $0x60] sm:$0xff]
    %v2683 = vld [vmem:[%s5 + $0x68] sm:$0xff]
    %v2684 = vld [vmem:[%s5 + $0x70] sm:$0xff]
    %v2685 = vld [vmem:[%s5 + $0x78] sm:$0xff]
    %2686 = vmatprep.subr.mxu0 0.0
    %v2687 = vand.u32 %v2670, 4294901760
    %2688 = vmatpush1.msra.mxu0 %v2687
    %2689 = vmatprep.subr.mxu0 0.0
    %v2690 = vand.u32 %v2671, 4294901760
    %2691 = vmatpush1.msra.mxu0 %v2690
    %2692 = vmatprep.subr.mxu0 0.0
    %v2693 = vand.u32 %v2672, 4294901760
    %2694 = vmatpush1.msra.mxu0 %v2693
    %2695 = vmatprep.subr.mxu0 0.0
    %v2696 = vand.u32 %v2673, 4294901760
    %2697 = vmatpush1.msra.mxu0 %v2696
    %2698 = vmatprep.subr.mxu0 0.0
    %v2699 = vand.u32 %v2674, 4294901760
    %2700 = vmatpush1.msra.mxu0 %v2699
    %2701 = vmatprep.subr.mxu0 0.0
    %v2702 = vand.u32 %v2675, 4294901760
    %2703 = vmatpush1.msra.mxu0 %v2702
    %2704 = vmatprep.subr.mxu0 0.0
    %v2705 = vand.u32 %v2676, 4294901760
    %2706 = vmatpush1.msra.mxu0 %v2705
    %2707 = vmatprep.subr.mxu0 0.0
    %v2708 = vand.u32 %v2677, 4294901760
    %2709 = vmatpush1.msra.mxu0 %v2708
    %2710 = vmatprep.subr.mxu0 0.0
    %v2711 = vand.u32 %v2678, 4294901760
    %2712 = vmatpush1.msra.mxu0 %v2711
    %2713 = vmatprep.subr.mxu0 0.0
    %v2714 = vand.u32 %v2679, 4294901760
    %2715 = vmatpush1.msra.mxu0 %v2714
    %2716 = vmatprep.subr.mxu0 0.0
    %v2717 = vand.u32 %v2680, 4294901760
    %2718 = vmatpush1.msra.mxu0 %v2717
    %2719 = vmatprep.subr.mxu0 0.0
    %v2720 = vand.u32 %v2681, 4294901760
    %2721 = vmatpush1.msra.mxu0 %v2720
    %2722 = vmatprep.subr.mxu0 0.0
    %v2723 = vand.u32 %v2682, 4294901760
    %2724 = vmatpush1.msra.mxu0 %v2723
    %2725 = vmatprep.subr.mxu0 0.0
    %v2726 = vand.u32 %v2683, 4294901760
    %2727 = vmatpush1.msra.mxu0 %v2726
    %2728 = vmatprep.subr.mxu0 0.0
    %v2729 = vand.u32 %v2684, 4294901760
    %2730 = vmatpush1.msra.mxu0 %v2729
    %2731 = vmatprep.subr.mxu0 0.0
    %v2732 = vand.u32 %v2685, 4294901760
    %2733 = vmatpush1.msra.mxu0 %v2732
    %2734 = vmatprep.subr.mxu0 0.0
    %2735 = vmatpush1.msra.mxu0 0.0
    %2736 = vmatprep.subr.mxu0 0.0
    %2737 = vmatpush1.msra.mxu0 0.0
    %2738 = vmatprep.subr.mxu0 0.0
    %2739 = vmatpush1.msra.mxu0 0.0
    %2740 = vmatprep.subr.mxu0 0.0
    %2741 = vmatpush1.msra.mxu0 0.0
    %2742 = vmatprep.subr.mxu0 0.0
    %2743 = vmatpush1.msra.mxu0 0.0
    %2744 = vmatprep.subr.mxu0 0.0
    %2745 = vmatpush1.msra.mxu0 0.0
    %2746 = vmatprep.subr.mxu0 0.0
    %2747 = vmatpush1.msra.mxu0 0.0
    %2748 = vmatprep.subr.mxu0 0.0
    %2749 = vmatpush1.msra.mxu0 0.0
    %2750 = vmatprep.subr.mxu0 0.0
    %2751 = vmatpush1.msra.mxu0 0.0
    %2752 = vmatprep.subr.mxu0 0.0
    %2753 = vmatpush1.msra.mxu0 0.0
    %2754 = vmatprep.subr.mxu0 0.0
    %2755 = vmatpush1.msra.mxu0 0.0
    %2756 = vmatprep.subr.mxu0 0.0
    %2757 = vmatpush1.msra.mxu0 0.0
    %2758 = vmatprep.subr.mxu0 0.0
    %2759 = vmatpush1.msra.mxu0 0.0
    %2760 = vmatprep.subr.mxu0 0.0
    %2761 = vmatpush1.msra.mxu0 0.0
    %2762 = vmatprep.subr.mxu0 0.0
    %2763 = vmatpush1.msra.mxu0 0.0
    %2764 = vmatprep.subr.mxu0 0.0
    %2765 = vmatpush1.msra.mxu0 0.0
    %2766 = vmatprep.mubr.f32.mxu0 0.0
    %v2767 = vand.u32 %v2490, 4294901760
    %v2768 = vsub.f32 %v2490, %v2767
    %v2769 = vand.u32 %v2768, 4294901760
    %v2770 = vsub.f32 %v2768, %v2769
    %v2771 = vand.u32 %v2770, 4294901760
    %2772 = vmatmul.mubr.f32.gmra.mrb[0].mxu0 %v2771
    %v2773 = vpop.f32.mrb[0].mxu0
    %v2774 = vadd.f32 0.0, %v2773
    %v2775 = vpop.f32.mrb[0].mxu0
    %2776 = vmatprep.mubr.f32.mxu0 0.0
    %v2777 = vand.u32 %v2496, 4294901760
    %v2778 = vsub.f32 %v2496, %v2777
    %v2779 = vand.u32 %v2778, 4294901760
    %v2780 = vsub.f32 %v2778, %v2779
    %v2781 = vand.u32 %v2780, 4294901760
    %2782 = vmatmul.mubr.f32.gmra.mrb[0].mxu0 %v2781
    %v2783 = vpop.f32.mrb[0].mxu0
    %v2784 = vadd.f32 0.0, %v2783
    %v2785 = vpop.f32.mrb[0].mxu0
    %2786 = vmatprep.mubr.f32.mxu0 0.0
    %v2787 = vand.u32 %v2502, 4294901760
    %v2788 = vsub.f32 %v2502, %v2787
    %v2789 = vand.u32 %v2788, 4294901760
    %v2790 = vsub.f32 %v2788, %v2789
    %v2791 = vand.u32 %v2790, 4294901760
    %2792 = vmatmul.mubr.f32.gmra.mrb[0].mxu0 %v2791
    %v2793 = vpop.f32.mrb[0].mxu0
    %v2794 = vadd.f32 0.0, %v2793
    %v2795 = vpop.f32.mrb[0].mxu0
    %2796 = vmatprep.mubr.f32.mxu0 0.0
    %v2797 = vand.u32 %v2508, 4294901760
    %v2798 = vsub.f32 %v2508, %v2797
    %v2799 = vand.u32 %v2798, 4294901760
    %v2800 = vsub.f32 %v2798, %v2799
    %v2801 = vand.u32 %v2800, 4294901760
    %2802 = vmatmul.mubr.f32.gmra.mrb[0].mxu0 %v2801
    %v2803 = vpop.f32.mrb[0].mxu0
    %v2804 = vadd.f32 0.0, %v2803
    %v2805 = vpop.f32.mrb[0].mxu0
    %2806 = vmatprep.mubr.f32.mxu0 0.0
    %v2807 = vand.u32 %v2514, 4294901760
    %v2808 = vsub.f32 %v2514, %v2807
    %v2809 = vand.u32 %v2808, 4294901760
    %v2810 = vsub.f32 %v2808, %v2809
    %v2811 = vand.u32 %v2810, 4294901760
    %2812 = vmatmul.mubr.f32.gmra.mrb[0].mxu0 %v2811
    %v2813 = vpop.f32.mrb[0].mxu0
    %v2814 = vadd.f32 0.0, %v2813
    %v2815 = vpop.f32.mrb[0].mxu0
    %2816 = vmatprep.mubr.f32.mxu0 0.0
    %v2817 = vand.u32 %v2520, 4294901760
    %v2818 = vsub.f32 %v2520, %v2817
    %v2819 = vand.u32 %v2818, 4294901760
    %v2820 = vsub.f32 %v2818, %v2819
    %v2821 = vand.u32 %v2820, 4294901760
    %2822 = vmatmul.mubr.f32.gmra.mrb[0].mxu0 %v2821
    %v2823 = vpop.f32.mrb[0].mxu0
    %v2824 = vadd.f32 0.0, %v2823
    %v2825 = vpop.f32.mrb[0].mxu0
    %2826 = vmatprep.mubr.f32.mxu0 0.0
    %v2827 = vand.u32 %v2526, 4294901760
    %v2828 = vsub.f32 %v2526, %v2827
    %v2829 = vand.u32 %v2828, 4294901760
    %v2830 = vsub.f32 %v2828, %v2829
    %v2831 = vand.u32 %v2830, 4294901760
    %2832 = vmatmul.mubr.f32.gmra.mrb[0].mxu0 %v2831
    %v2833 = vpop.f32.mrb[0].mxu0
    %v2834 = vadd.f32 0.0, %v2833
    %v2835 = vpop.f32.mrb[0].mxu0
    %2836 = vmatprep.mubr.f32.mxu0 0.0
    %v2837 = vand.u32 %v2532, 4294901760
    %v2838 = vsub.f32 %v2532, %v2837
    %v2839 = vand.u32 %v2838, 4294901760
    %v2840 = vsub.f32 %v2838, %v2839
    %v2841 = vand.u32 %v2840, 4294901760
    %2842 = vmatmul.mubr.f32.gmra.mrb[0].mxu0 %v2841
    %v2843 = vpop.f32.mrb[0].mxu0
    %v2844 = vadd.f32 0.0, %v2843
    %v2845 = vpop.f32.mrb[0].mxu0
    %2846 = vmatprep.mubr.f32.mxu0 0.0
    %v2847 = vand.u32 %v2538, 4294901760
    %v2848 = vsub.f32 %v2538, %v2847
    %v2849 = vand.u32 %v2848, 4294901760
    %v2850 = vsub.f32 %v2848, %v2849
    %v2851 = vand.u32 %v2850, 4294901760
    %2852 = vmatmul.mubr.f32.gmra.mrb[0].mxu0 %v2851
    %v2853 = vpop.f32.mrb[0].mxu0
    %v2854 = vadd.f32 0.0, %v2853
    %v2855 = vpop.f32.mrb[0].mxu0
    %2856 = vmatprep.mubr.f32.mxu0 0.0
    %v2857 = vand.u32 %v2544, 4294901760
    %v2858 = vsub.f32 %v2544, %v2857
    %v2859 = vand.u32 %v2858, 4294901760
    %v2860 = vsub.f32 %v2858, %v2859
    %v2861 = vand.u32 %v2860, 4294901760
    %2862 = vmatmul.mubr.f32.gmra.mrb[0].mxu0 %v2861
    %v2863 = vpop.f32.mrb[0].mxu0
    %v2864 = vadd.f32 0.0, %v2863
    %v2865 = vpop.f32.mrb[0].mxu0
    %2866 = vmatprep.mubr.f32.mxu0 0.0
    %v2867 = vand.u32 %v2550, 4294901760
    %v2868 = vsub.f32 %v2550, %v2867
    %v2869 = vand.u32 %v2868, 4294901760
    %v2870 = vsub.f32 %v2868, %v2869
    %v2871 = vand.u32 %v2870, 4294901760
    %2872 = vmatmul.mubr.f32.gmra.mrb[0].mxu0 %v2871
    %v2873 = vpop.f32.mrb[0].mxu0
    %v2874 = vadd.f32 0.0, %v2873
    %v2875 = vpop.f32.mrb[0].mxu0
    %2876 = vmatprep.mubr.f32.mxu0 0.0
    %v2877 = vand.u32 %v2556, 4294901760
    %v2878 = vsub.f32 %v2556, %v2877
    %v2879 = vand.u32 %v2878, 4294901760
    %v2880 = vsub.f32 %v2878, %v2879
    %v2881 = vand.u32 %v2880, 4294901760
    %2882 = vmatmul.mubr.f32.gmra.mrb[0].mxu0 %v2881
    %v2883 = vpop.f32.mrb[0].mxu0
    %v2884 = vadd.f32 0.0, %v2883
    %v2885 = vpop.f32.mrb[0].mxu0
    %2886 = vmatprep.mubr.f32.mxu0 0.0
    %v2887 = vand.u32 %v2562, 4294901760
    %v2888 = vsub.f32 %v2562, %v2887
    %v2889 = vand.u32 %v2888, 4294901760
    %v2890 = vsub.f32 %v2888, %v2889
    %v2891 = vand.u32 %v2890, 4294901760
    %2892 = vmatmul.mubr.f32.gmra.mrb[0].mxu0 %v2891
    %v2893 = vpop.f32.mrb[0].mxu0
    %v2894 = vadd.f32 0.0, %v2893
    %v2895 = vpop.f32.mrb[0].mxu0
    %2896 = vmatprep.mubr.f32.mxu0 0.0
    %v2897 = vand.u32 %v2568, 4294901760
    %v2898 = vsub.f32 %v2568, %v2897
    %v2899 = vand.u32 %v2898, 4294901760
    %v2900 = vsub.f32 %v2898, %v2899
    %v2901 = vand.u32 %v2900, 4294901760
    %2902 = vmatmul.mubr.f32.gmra.mrb[0].mxu0 %v2901
    %v2903 = vpop.f32.mrb[0].mxu0
    %v2904 = vadd.f32 0.0, %v2903
    %v2905 = vpop.f32.mrb[0].mxu0
    %2906 = vmatprep.mubr.f32.mxu0 0.0
    %v2907 = vand.u32 %v2574, 4294901760
    %v2908 = vsub.f32 %v2574, %v2907
    %v2909 = vand.u32 %v2908, 4294901760
    %v2910 = vsub.f32 %v2908, %v2909
    %v2911 = vand.u32 %v2910, 4294901760
    %2912 = vmatmul.mubr.f32.gmra.mrb[0].mxu0 %v2911
    %v2913 = vpop.f32.mrb[0].mxu0
    %v2914 = vadd.f32 0.0, %v2913
    %v2915 = vpop.f32.mrb[0].mxu0
    %2916 = vmatprep.mubr.f32.mxu0 0.0
    %v2917 = vand.u32 %v2580, 4294901760
    %v2918 = vsub.f32 %v2580, %v2917
    %v2919 = vand.u32 %v2918, 4294901760
    %v2920 = vsub.f32 %v2918, %v2919
    %v2921 = vand.u32 %v2920, 4294901760
    %2922 = vmatmul.mubr.f32.gmra.mrb[0].mxu0 %v2921
    %v2923 = vpop.f32.mrb[0].mxu0
    %v2924 = vadd.f32 0.0, %v2923
    %v2925 = vpop.f32.mrb[0].mxu0
    %2926 = vdwg.mxu0
    %2927 = vmatprep.subr.mxu0 0.0
    %v2928 = vand.u32 %v2670, 4294901760
    %v2929 = vsub.f32 %v2670, %v2928
    %v2930 = vand.u32 %v2929, 4294901760
    %v2931 = vsub.f32 %v2929, %v2930
    %v2932 = vand.u32 %v2931, 4294901760
    %2933 = vmatpush1.msra.mxu0 %v2932
    %2934 = vmatprep.subr.mxu0 0.0
    %v2935 = vand.u32 %v2671, 4294901760
    %v2936 = vsub.f32 %v2671, %v2935
    %v2937 = vand.u32 %v2936, 4294901760
    %v2938 = vsub.f32 %v2936, %v2937
    %v2939 = vand.u32 %v2938, 4294901760
    %2940 = vmatpush1.msra.mxu0 %v2939
    %2941 = vmatprep.subr.mxu0 0.0
    %v2942 = vand.u32 %v2672, 4294901760
    %v2943 = vsub.f32 %v2672, %v2942
    %v2944 = vand.u32 %v2943, 4294901760
    %v2945 = vsub.f32 %v2943, %v2944
    %v2946 = vand.u32 %v2945, 4294901760
    %2947 = vmatpush1.msra.mxu0 %v2946
    %2948 = vmatprep.subr.mxu0 0.0
    %v2949 = vand.u32 %v2673, 4294901760
    %v2950 = vsub.f32 %v2673, %v2949
    %v2951 = vand.u32 %v2950, 4294901760
    %v2952 = vsub.f32 %v2950, %v2951
    %v2953 = vand.u32 %v2952, 4294901760
    %2954 = vmatpush1.msra.mxu0 %v2953
    %2955 = vmatprep.subr.mxu0 0.0
    %v2956 = vand.u32 %v2674, 4294901760
    %v2957 = vsub.f32 %v2674, %v2956
    %v2958 = vand.u32 %v2957, 4294901760
    %v2959 = vsub.f32 %v2957, %v2958
    %v2960 = vand.u32 %v2959, 4294901760
    %2961 = vmatpush1.msra.mxu0 %v2960
    %2962 = vmatprep.subr.mxu0 0.0
    %v2963 = vand.u32 %v2675, 4294901760
    %v2964 = vsub.f32 %v2675, %v2963
    %v2965 = vand.u32 %v2964, 4294901760
    %v2966 = vsub.f32 %v2964, %v2965
    %v2967 = vand.u32 %v2966, 4294901760
    %2968 = vmatpush1.msra.mxu0 %v2967
    %2969 = vmatprep.subr.mxu0 0.0
    %v2970 = vand.u32 %v2676, 4294901760
    %v2971 = vsub.f32 %v2676, %v2970
    %v2972 = vand.u32 %v2971, 4294901760
    %v2973 = vsub.f32 %v2971, %v2972
    %v2974 = vand.u32 %v2973, 4294901760
    %2975 = vmatpush1.msra.mxu0 %v2974
    %2976 = vmatprep.subr.mxu0 0.0
    %v2977 = vand.u32 %v2677, 4294901760
    %v2978 = vsub.f32 %v2677, %v2977
    %v2979 = vand.u32 %v2978, 4294901760
    %v2980 = vsub.f32 %v2978, %v2979
    %v2981 = vand.u32 %v2980, 4294901760
    %2982 = vmatpush1.msra.mxu0 %v2981
    %2983 = vmatprep.subr.mxu0 0.0
    %v2984 = vand.u32 %v2678, 4294901760
    %v2985 = vsub.f32 %v2678, %v2984
    %v2986 = vand.u32 %v2985, 4294901760
    %v2987 = vsub.f32 %v2985, %v2986
    %v2988 = vand.u32 %v2987, 4294901760
    %2989 = vmatpush1.msra.mxu0 %v2988
    %2990 = vmatprep.subr.mxu0 0.0
    %v2991 = vand.u32 %v2679, 4294901760
    %v2992 = vsub.f32 %v2679, %v2991
    %v2993 = vand.u32 %v2992, 4294901760
    %v2994 = vsub.f32 %v2992, %v2993
    %v2995 = vand.u32 %v2994, 4294901760
    %2996 = vmatpush1.msra.mxu0 %v2995
    %2997 = vmatprep.subr.mxu0 0.0
    %v2998 = vand.u32 %v2680, 4294901760
    %v2999 = vsub.f32 %v2680, %v2998
    %v3000 = vand.u32 %v2999, 4294901760
    %v3001 = vsub.f32 %v2999, %v3000
    %v3002 = vand.u32 %v3001, 4294901760
    %3003 = vmatpush1.msra.mxu0 %v3002
    %3004 = vmatprep.subr.mxu0 0.0
    %v3005 = vand.u32 %v2681, 4294901760
    %v3006 = vsub.f32 %v2681, %v3005
    %v3007 = vand.u32 %v3006, 4294901760
    %v3008 = vsub.f32 %v3006, %v3007
    %v3009 = vand.u32 %v3008, 4294901760
    %3010 = vmatpush1.msra.mxu0 %v3009
    %3011 = vmatprep.subr.mxu0 0.0
    %v3012 = vand.u32 %v2682, 4294901760
    %v3013 = vsub.f32 %v2682, %v3012
    %v3014 = vand.u32 %v3013, 4294901760
    %v3015 = vsub.f32 %v3013, %v3014
    %v3016 = vand.u32 %v3015, 4294901760
    %3017 = vmatpush1.msra.mxu0 %v3016
    %3018 = vmatprep.subr.mxu0 0.0
    %v3019 = vand.u32 %v2683, 4294901760
    %v3020 = vsub.f32 %v2683, %v3019
    %v3021 = vand.u32 %v3020, 4294901760
    %v3022 = vsub.f32 %v3020, %v3021
    %v3023 = vand.u32 %v3022, 4294901760
    %3024 = vmatpush1.msra.mxu0 %v3023
    %3025 = vmatprep.subr.mxu0 0.0
    %v3026 = vand.u32 %v2684, 4294901760
    %v3027 = vsub.f32 %v2684, %v3026
    %v3028 = vand.u32 %v3027, 4294901760
    %v3029 = vsub.f32 %v3027, %v3028
    %v3030 = vand.u32 %v3029, 4294901760
    %3031 = vmatpush1.msra.mxu0 %v3030
    %3032 = vmatprep.subr.mxu0 0.0
    %v3033 = vand.u32 %v2685, 4294901760
    %v3034 = vsub.f32 %v2685, %v3033
    %v3035 = vand.u32 %v3034, 4294901760
    %v3036 = vsub.f32 %v3034, %v3035
    %v3037 = vand.u32 %v3036, 4294901760
    %3038 = vmatpush1.msra.mxu0 %v3037
    %3039 = vmatprep.subr.mxu0 0.0
    %3040 = vmatpush1.msra.mxu0 0.0
    %3041 = vmatprep.subr.mxu0 0.0
    %3042 = vmatpush1.msra.mxu0 0.0
    %3043 = vmatprep.subr.mxu0 0.0
    %3044 = vmatpush1.msra.mxu0 0.0
    %3045 = vmatprep.subr.mxu0 0.0
    %3046 = vmatpush1.msra.mxu0 0.0
    %3047 = vmatprep.subr.mxu0 0.0
    %3048 = vmatpush1.msra.mxu0 0.0
    %3049 = vmatprep.subr.mxu0 0.0
    %3050 = vmatpush1.msra.mxu0 0.0
    %3051 = vmatprep.subr.mxu0 0.0
    %3052 = vmatpush1.msra.mxu0 0.0
    %3053 = vmatprep.subr.mxu0 0.0
    %3054 = vmatpush1.msra.mxu0 0.0
    %3055 = vmatprep.subr.mxu0 0.0
    %3056 = vmatpush1.msra.mxu0 0.0
    %3057 = vmatprep.subr.mxu0 0.0
    %3058 = vmatpush1.msra.mxu0 0.0
    %3059 = vmatprep.subr.mxu0 0.0
    %3060 = vmatpush1.msra.mxu0 0.0
    %3061 = vmatprep.subr.mxu0 0.0
    %3062 = vmatpush1.msra.mxu0 0.0
    %3063 = vmatprep.subr.mxu0 0.0
    %3064 = vmatpush1.msra.mxu0 0.0
    %3065 = vmatprep.subr.mxu0 0.0
    %3066 = vmatpush1.msra.mxu0 0.0
    %3067 = vmatprep.subr.mxu0 0.0
    %3068 = vmatpush1.msra.mxu0 0.0
    %3069 = vmatprep.subr.mxu0 0.0
    %3070 = vmatpush1.msra.mxu0 0.0
    %3071 = vmatprep.mubr.f32.mxu0 0.0
    %v3072 = vand.u32 %v2490, 4294901760
    %3073 = vmatmul.mubr.f32.gmra.mrb[0].mxu0 %v3072
    %v3074 = vpop.f32.mrb[0].mxu0
    %v3075 = vadd.f32 %v2774, %v3074
    %v3076 = vpop.f32.mrb[0].mxu0
    %3077 = vmatprep.mubr.f32.mxu0 0.0
    %v3078 = vand.u32 %v2496, 4294901760
    %3079 = vmatmul.mubr.f32.gmra.mrb[0].mxu0 %v3078
    %v3080 = vpop.f32.mrb[0].mxu0
    %v3081 = vadd.f32 %v2784, %v3080
    %v3082 = vpop.f32.mrb[0].mxu0
    %3083 = vmatprep.mubr.f32.mxu0 0.0
    %v3084 = vand.u32 %v2502, 4294901760
    %3085 = vmatmul.mubr.f32.gmra.mrb[0].mxu0 %v3084
    %v3086 = vpop.f32.mrb[0].mxu0
    %v3087 = vadd.f32 %v2794, %v3086
    %v3088 = vpop.f32.mrb[0].mxu0
    %3089 = vmatprep.mubr.f32.mxu0 0.0
    %v3090 = vand.u32 %v2508, 4294901760
    %3091 = vmatmul.mubr.f32.gmra.mrb[0].mxu0 %v3090
    %v3092 = vpop.f32.mrb[0].mxu0
    %v3093 = vadd.f32 %v2804, %v3092
    %v3094 = vpop.f32.mrb[0].mxu0
    %3095 = vmatprep.mubr.f32.mxu0 0.0
    %v3096 = vand.u32 %v2514, 4294901760
    %3097 = vmatmul.mubr.f32.gmra.mrb[0].mxu0 %v3096
    %v3098 = vpop.f32.mrb[0].mxu0
    %v3099 = vadd.f32 %v2814, %v3098
    %v3100 = vpop.f32.mrb[0].mxu0
    %3101 = vmatprep.mubr.f32.mxu0 0.0
    %v3102 = vand.u32 %v2520, 4294901760
    %3103 = vmatmul.mubr.f32.gmra.mrb[0].mxu0 %v3102
    %v3104 = vpop.f32.mrb[0].mxu0
    %v3105 = vadd.f32 %v2824, %v3104
    %v3106 = vpop.f32.mrb[0].mxu0
    %3107 = vmatprep.mubr.f32.mxu0 0.0
    %v3108 = vand.u32 %v2526, 4294901760
    %3109 = vmatmul.mubr.f32.gmra.mrb[0].mxu0 %v3108
    %v3110 = vpop.f32.mrb[0].mxu0
    %v3111 = vadd.f32 %v2834, %v3110
    %v3112 = vpop.f32.mrb[0].mxu0
    %3113 = vmatprep.mubr.f32.mxu0 0.0
    %v3114 = vand.u32 %v2532, 4294901760
    %3115 = vmatmul.mubr.f32.gmra.mrb[0].mxu0 %v3114
    %v3116 = vpop.f32.mrb[0].mxu0
    %v3117 = vadd.f32 %v2844, %v3116
    %v3118 = vpop.f32.mrb[0].mxu0
    %3119 = vmatprep.mubr.f32.mxu0 0.0
    %v3120 = vand.u32 %v2538, 4294901760
    %3121 = vmatmul.mubr.f32.gmra.mrb[0].mxu0 %v3120
    %v3122 = vpop.f32.mrb[0].mxu0
    %v3123 = vadd.f32 %v2854, %v3122
    %v3124 = vpop.f32.mrb[0].mxu0
    %3125 = vmatprep.mubr.f32.mxu0 0.0
    %v3126 = vand.u32 %v2544, 4294901760
    %3127 = vmatmul.mubr.f32.gmra.mrb[0].mxu0 %v3126
    %v3128 = vpop.f32.mrb[0].mxu0
    %v3129 = vadd.f32 %v2864, %v3128
    %v3130 = vpop.f32.mrb[0].mxu0
    %3131 = vmatprep.mubr.f32.mxu0 0.0
    %v3132 = vand.u32 %v2550, 4294901760
    %3133 = vmatmul.mubr.f32.gmra.mrb[0].mxu0 %v3132
    %v3134 = vpop.f32.mrb[0].mxu0
    %v3135 = vadd.f32 %v2874, %v3134
    %v3136 = vpop.f32.mrb[0].mxu0
    %3137 = vmatprep.mubr.f32.mxu0 0.0
    %v3138 = vand.u32 %v2556, 4294901760
    %3139 = vmatmul.mubr.f32.gmra.mrb[0].mxu0 %v3138
    %v3140 = vpop.f32.mrb[0].mxu0
    %v3141 = vadd.f32 %v2884, %v3140
    %v3142 = vpop.f32.mrb[0].mxu0
    %3143 = vmatprep.mubr.f32.mxu0 0.0
    %v3144 = vand.u32 %v2562, 4294901760
    %3145 = vmatmul.mubr.f32.gmra.mrb[0].mxu0 %v3144
    %v3146 = vpop.f32.mrb[0].mxu0
    %v3147 = vadd.f32 %v2894, %v3146
    %v3148 = vpop.f32.mrb[0].mxu0
    %3149 = vmatprep.mubr.f32.mxu0 0.0
    %v3150 = vand.u32 %v2568, 4294901760
    %3151 = vmatmul.mubr.f32.gmra.mrb[0].mxu0 %v3150
    %v3152 = vpop.f32.mrb[0].mxu0
    %v3153 = vadd.f32 %v2904, %v3152
    %v3154 = vpop.f32.mrb[0].mxu0
    %3155 = vmatprep.mubr.f32.mxu0 0.0
    %v3156 = vand.u32 %v2574, 4294901760
    %3157 = vmatmul.mubr.f32.gmra.mrb[0].mxu0 %v3156
    %v3158 = vpop.f32.mrb[0].mxu0
    %v3159 = vadd.f32 %v2914, %v3158
    %v3160 = vpop.f32.mrb[0].mxu0
    %3161 = vmatprep.mubr.f32.mxu0 0.0
    %v3162 = vand.u32 %v2580, 4294901760
    %3163 = vmatmul.mubr.f32.gmra.mrb[0].mxu0 %v3162
    %v3164 = vpop.f32.mrb[0].mxu0
    %v3165 = vadd.f32 %v2924, %v3164
    %v3166 = vpop.f32.mrb[0].mxu0
    %3167 = vdwg.mxu0
    %3168 = vmatprep.subr.mxu0 0.0
    %v3169 = vand.u32 %v2670, 4294901760
    %v3170 = vsub.f32 %v2670, %v3169
    %3171 = vmatpush1.msra.mxu0 %v3170
    %3172 = vmatprep.subr.mxu0 0.0
    %v3173 = vand.u32 %v2671, 4294901760
    %v3174 = vsub.f32 %v2671, %v3173
    %3175 = vmatpush1.msra.mxu0 %v3174
    %3176 = vmatprep.subr.mxu0 0.0
    %v3177 = vand.u32 %v2672, 4294901760
    %v3178 = vsub.f32 %v2672, %v3177
    %3179 = vmatpush1.msra.mxu0 %v3178
    %3180 = vmatprep.subr.mxu0 0.0
    %v3181 = vand.u32 %v2673, 4294901760
    %v3182 = vsub.f32 %v2673, %v3181
    %3183 = vmatpush1.msra.mxu0 %v3182
    %3184 = vmatprep.subr.mxu0 0.0
    %v3185 = vand.u32 %v2674, 4294901760
    %v3186 = vsub.f32 %v2674, %v3185
    %3187 = vmatpush1.msra.mxu0 %v3186
    %3188 = vmatprep.subr.mxu0 0.0
    %v3189 = vand.u32 %v2675, 4294901760
    %v3190 = vsub.f32 %v2675, %v3189
    %3191 = vmatpush1.msra.mxu0 %v3190
    %3192 = vmatprep.subr.mxu0 0.0
    %v3193 = vand.u32 %v2676, 4294901760
    %v3194 = vsub.f32 %v2676, %v3193
    %3195 = vmatpush1.msra.mxu0 %v3194
    %3196 = vmatprep.subr.mxu0 0.0
    %v3197 = vand.u32 %v2677, 4294901760
    %v3198 = vsub.f32 %v2677, %v3197
    %3199 = vmatpush1.msra.mxu0 %v3198
    %3200 = vmatprep.subr.mxu0 0.0
    %v3201 = vand.u32 %v2678, 4294901760
    %v3202 = vsub.f32 %v2678, %v3201
    %3203 = vmatpush1.msra.mxu0 %v3202
    %3204 = vmatprep.subr.mxu0 0.0
    %v3205 = vand.u32 %v2679, 4294901760
    %v3206 = vsub.f32 %v2679, %v3205
    %3207 = vmatpush1.msra.mxu0 %v3206
    %3208 = vmatprep.subr.mxu0 0.0
    %v3209 = vand.u32 %v2680, 4294901760
    %v3210 = vsub.f32 %v2680, %v3209
    %3211 = vmatpush1.msra.mxu0 %v3210
    %3212 = vmatprep.subr.mxu0 0.0
    %v3213 = vand.u32 %v2681, 4294901760
    %v3214 = vsub.f32 %v2681, %v3213
    %3215 = vmatpush1.msra.mxu0 %v3214
    %3216 = vmatprep.subr.mxu0 0.0
    %v3217 = vand.u32 %v2682, 4294901760
    %v3218 = vsub.f32 %v2682, %v3217
    %3219 = vmatpush1.msra.mxu0 %v3218
    %3220 = vmatprep.subr.mxu0 0.0
    %v3221 = vand.u32 %v2683, 4294901760
    %v3222 = vsub.f32 %v2683, %v3221
    %3223 = vmatpush1.msra.mxu0 %v3222
    %3224 = vmatprep.subr.mxu0 0.0
    %v3225 = vand.u32 %v2684, 4294901760
    %v3226 = vsub.f32 %v2684, %v3225
    %3227 = vmatpush1.msra.mxu0 %v3226
    %3228 = vmatprep.subr.mxu0 0.0
    %v3229 = vand.u32 %v2685, 4294901760
    %v3230 = vsub.f32 %v2685, %v3229
    %3231 = vmatpush1.msra.mxu0 %v3230
    %3232 = vmatprep.subr.mxu0 0.0
    %3233 = vmatpush1.msra.mxu0 0.0
    %3234 = vmatprep.subr.mxu0 0.0
    %3235 = vmatpush1.msra.mxu0 0.0
    %3236 = vmatprep.subr.mxu0 0.0
    %3237 = vmatpush1.msra.mxu0 0.0
    %3238 = vmatprep.subr.mxu0 0.0
    %3239 = vmatpush1.msra.mxu0 0.0
    %3240 = vmatprep.subr.mxu0 0.0
    %3241 = vmatpush1.msra.mxu0 0.0
    %3242 = vmatprep.subr.mxu0 0.0
    %3243 = vmatpush1.msra.mxu0 0.0
    %3244 = vmatprep.subr.mxu0 0.0
    %3245 = vmatpush1.msra.mxu0 0.0
    %3246 = vmatprep.subr.mxu0 0.0
    %3247 = vmatpush1.msra.mxu0 0.0
    %3248 = vmatprep.subr.mxu0 0.0
    %3249 = vmatpush1.msra.mxu0 0.0
    %3250 = vmatprep.subr.mxu0 0.0
    %3251 = vmatpush1.msra.mxu0 0.0
    %3252 = vmatprep.subr.mxu0 0.0
    %3253 = vmatpush1.msra.mxu0 0.0
    %3254 = vmatprep.subr.mxu0 0.0
    %3255 = vmatpush1.msra.mxu0 0.0
    %3256 = vmatprep.subr.mxu0 0.0
    %3257 = vmatpush1.msra.mxu0 0.0
    %3258 = vmatprep.subr.mxu0 0.0
    %3259 = vmatpush1.msra.mxu0 0.0
    %3260 = vmatprep.subr.mxu0 0.0
    %3261 = vmatpush1.msra.mxu0 0.0
    %3262 = vmatprep.subr.mxu0 0.0
    %3263 = vmatpush1.msra.mxu0 0.0
    %3264 = vmatprep.mubr.f32.mxu0 0.0
    %v3265 = vand.u32 %v2490, 4294901760
    %v3266 = vsub.f32 %v2490, %v3265
    %3267 = vmatmul.mubr.f32.gmra.mrb[0].mxu0 %v3266
    %v3268 = vpop.f32.mrb[0].mxu0
    %v3269 = vadd.f32 %v3075, %v3268
    %v3270 = vpop.f32.mrb[0].mxu0
    %3271 = vmatprep.mubr.f32.mxu0 0.0
    %v3272 = vand.u32 %v2496, 4294901760
    %v3273 = vsub.f32 %v2496, %v3272
    %3274 = vmatmul.mubr.f32.gmra.mrb[0].mxu0 %v3273
    %v3275 = vpop.f32.mrb[0].mxu0
    %v3276 = vadd.f32 %v3081, %v3275
    %v3277 = vpop.f32.mrb[0].mxu0
    %3278 = vmatprep.mubr.f32.mxu0 0.0
    %v3279 = vand.u32 %v2502, 4294901760
    %v3280 = vsub.f32 %v2502, %v3279
    %3281 = vmatmul.mubr.f32.gmra.mrb[0].mxu0 %v3280
    %v3282 = vpop.f32.mrb[0].mxu0
    %v3283 = vadd.f32 %v3087, %v3282
    %v3284 = vpop.f32.mrb[0].mxu0
    %3285 = vmatprep.mubr.f32.mxu0 0.0
    %v3286 = vand.u32 %v2508, 4294901760
    %v3287 = vsub.f32 %v2508, %v3286
    %3288 = vmatmul.mubr.f32.gmra.mrb[0].mxu0 %v3287
    %v3289 = vpop.f32.mrb[0].mxu0
    %v3290 = vadd.f32 %v3093, %v3289
    %v3291 = vpop.f32.mrb[0].mxu0
    %3292 = vmatprep.mubr.f32.mxu0 0.0
    %v3293 = vand.u32 %v2514, 4294901760
    %v3294 = vsub.f32 %v2514, %v3293
    %3295 = vmatmul.mubr.f32.gmra.mrb[0].mxu0 %v3294
    %v3296 = vpop.f32.mrb[0].mxu0
    %v3297 = vadd.f32 %v3099, %v3296
    %v3298 = vpop.f32.mrb[0].mxu0
    %3299 = vmatprep.mubr.f32.mxu0 0.0
    %v3300 = vand.u32 %v2520, 4294901760
    %v3301 = vsub.f32 %v2520, %v3300
    %3302 = vmatmul.mubr.f32.gmra.mrb[0].mxu0 %v3301
    %v3303 = vpop.f32.mrb[0].mxu0
    %v3304 = vadd.f32 %v3105, %v3303
    %v3305 = vpop.f32.mrb[0].mxu0
    %3306 = vmatprep.mubr.f32.mxu0 0.0
    %v3307 = vand.u32 %v2526, 4294901760
    %v3308 = vsub.f32 %v2526, %v3307
    %3309 = vmatmul.mubr.f32.gmra.mrb[0].mxu0 %v3308
    %v3310 = vpop.f32.mrb[0].mxu0
    %v3311 = vadd.f32 %v3111, %v3310
    %v3312 = vpop.f32.mrb[0].mxu0
    %3313 = vmatprep.mubr.f32.mxu0 0.0
    %v3314 = vand.u32 %v2532, 4294901760
    %v3315 = vsub.f32 %v2532, %v3314
    %3316 = vmatmul.mubr.f32.gmra.mrb[0].mxu0 %v3315
    %v3317 = vpop.f32.mrb[0].mxu0
    %v3318 = vadd.f32 %v3117, %v3317
    %v3319 = vpop.f32.mrb[0].mxu0
    %3320 = vmatprep.mubr.f32.mxu0 0.0
    %v3321 = vand.u32 %v2538, 4294901760
    %v3322 = vsub.f32 %v2538, %v3321
    %3323 = vmatmul.mubr.f32.gmra.mrb[0].mxu0 %v3322
    %v3324 = vpop.f32.mrb[0].mxu0
    %v3325 = vadd.f32 %v3123, %v3324
    %v3326 = vpop.f32.mrb[0].mxu0
    %3327 = vmatprep.mubr.f32.mxu0 0.0
    %v3328 = vand.u32 %v2544, 4294901760
    %v3329 = vsub.f32 %v2544, %v3328
    %3330 = vmatmul.mubr.f32.gmra.mrb[0].mxu0 %v3329
    %v3331 = vpop.f32.mrb[0].mxu0
    %v3332 = vadd.f32 %v3129, %v3331
    %v3333 = vpop.f32.mrb[0].mxu0
    %3334 = vmatprep.mubr.f32.mxu0 0.0
    %v3335 = vand.u32 %v2550, 4294901760
    %v3336 = vsub.f32 %v2550, %v3335
    %3337 = vmatmul.mubr.f32.gmra.mrb[0].mxu0 %v3336
    %v3338 = vpop.f32.mrb[0].mxu0
    %v3339 = vadd.f32 %v3135, %v3338
    %v3340 = vpop.f32.mrb[0].mxu0
    %3341 = vmatprep.mubr.f32.mxu0 0.0
    %v3342 = vand.u32 %v2556, 4294901760
    %v3343 = vsub.f32 %v2556, %v3342
    %3344 = vmatmul.mubr.f32.gmra.mrb[0].mxu0 %v3343
    %v3345 = vpop.f32.mrb[0].mxu0
    %v3346 = vadd.f32 %v3141, %v3345
    %v3347 = vpop.f32.mrb[0].mxu0
    %3348 = vmatprep.mubr.f32.mxu0 0.0
    %v3349 = vand.u32 %v2562, 4294901760
    %v3350 = vsub.f32 %v2562, %v3349
    %3351 = vmatmul.mubr.f32.gmra.mrb[0].mxu0 %v3350
    %v3352 = vpop.f32.mrb[0].mxu0
    %v3353 = vadd.f32 %v3147, %v3352
    %v3354 = vpop.f32.mrb[0].mxu0
    %3355 = vmatprep.mubr.f32.mxu0 0.0
    %v3356 = vand.u32 %v2568, 4294901760
    %v3357 = vsub.f32 %v2568, %v3356
    %3358 = vmatmul.mubr.f32.gmra.mrb[0].mxu0 %v3357
    %v3359 = vpop.f32.mrb[0].mxu0
    %v3360 = vadd.f32 %v3153, %v3359
    %v3361 = vpop.f32.mrb[0].mxu0
    %3362 = vmatprep.mubr.f32.mxu0 0.0
    %v3363 = vand.u32 %v2574, 4294901760
    %v3364 = vsub.f32 %v2574, %v3363
    %3365 = vmatmul.mubr.f32.gmra.mrb[0].mxu0 %v3364
    %v3366 = vpop.f32.mrb[0].mxu0
    %v3367 = vadd.f32 %v3159, %v3366
    %v3368 = vpop.f32.mrb[0].mxu0
    %3369 = vmatprep.mubr.f32.mxu0 0.0
    %v3370 = vand.u32 %v2580, 4294901760
    %v3371 = vsub.f32 %v2580, %v3370
    %3372 = vmatmul.mubr.f32.gmra.mrb[0].mxu0 %v3371
    %v3373 = vpop.f32.mrb[0].mxu0
    %v3374 = vadd.f32 %v3165, %v3373
    %v3375 = vpop.f32.mrb[0].mxu0
    %3376 = vdwg.mxu0
    %3377 = vmatprep.subr.mxu0 0.0
    %v3378 = vand.u32 %v2670, 4294901760
    %3379 = vmatpush1.msra.mxu0 %v3378
    %3380 = vmatprep.subr.mxu0 0.0
    %v3381 = vand.u32 %v2671, 4294901760
    %3382 = vmatpush1.msra.mxu0 %v3381
    %3383 = vmatprep.subr.mxu0 0.0
    %v3384 = vand.u32 %v2672, 4294901760
    %3385 = vmatpush1.msra.mxu0 %v3384
    %3386 = vmatprep.subr.mxu0 0.0
    %v3387 = vand.u32 %v2673, 4294901760
    %3388 = vmatpush1.msra.mxu0 %v3387
    %3389 = vmatprep.subr.mxu0 0.0
    %v3390 = vand.u32 %v2674, 4294901760
    %3391 = vmatpush1.msra.mxu0 %v3390
    %3392 = vmatprep.subr.mxu0 0.0
    %v3393 = vand.u32 %v2675, 4294901760
    %3394 = vmatpush1.msra.mxu0 %v3393
    %3395 = vmatprep.subr.mxu0 0.0
    %v3396 = vand.u32 %v2676, 4294901760
    %3397 = vmatpush1.msra.mxu0 %v3396
    %3398 = vmatprep.subr.mxu0 0.0
    %v3399 = vand.u32 %v2677, 4294901760
    %3400 = vmatpush1.msra.mxu0 %v3399
    %3401 = vmatprep.subr.mxu0 0.0
    %v3402 = vand.u32 %v2678, 4294901760
    %3403 = vmatpush1.msra.mxu0 %v3402
    %3404 = vmatprep.subr.mxu0 0.0
    %v3405 = vand.u32 %v2679, 4294901760
    %3406 = vmatpush1.msra.mxu0 %v3405
    %3407 = vmatprep.subr.mxu0 0.0
    %v3408 = vand.u32 %v2680, 4294901760
    %3409 = vmatpush1.msra.mxu0 %v3408
    %3410 = vmatprep.subr.mxu0 0.0
    %v3411 = vand.u32 %v2681, 4294901760
    %3412 = vmatpush1.msra.mxu0 %v3411
    %3413 = vmatprep.subr.mxu0 0.0
    %v3414 = vand.u32 %v2682, 4294901760
    %3415 = vmatpush1.msra.mxu0 %v3414
    %3416 = vmatprep.subr.mxu0 0.0
    %v3417 = vand.u32 %v2683, 4294901760
    %3418 = vmatpush1.msra.mxu0 %v3417
    %3419 = vmatprep.subr.mxu0 0.0
    %v3420 = vand.u32 %v2684, 4294901760
    %3421 = vmatpush1.msra.mxu0 %v3420
    %3422 = vmatprep.subr.mxu0 0.0
    %v3423 = vand.u32 %v2685, 4294901760
    %3424 = vmatpush1.msra.mxu0 %v3423
    %3425 = vmatprep.subr.mxu0 0.0
    %3426 = vmatpush1.msra.mxu0 0.0
    %3427 = vmatprep.subr.mxu0 0.0
    %3428 = vmatpush1.msra.mxu0 0.0
    %3429 = vmatprep.subr.mxu0 0.0
    %3430 = vmatpush1.msra.mxu0 0.0
    %3431 = vmatprep.subr.mxu0 0.0
    %3432 = vmatpush1.msra.mxu0 0.0
    %3433 = vmatprep.subr.mxu0 0.0
    %3434 = vmatpush1.msra.mxu0 0.0
    %3435 = vmatprep.subr.mxu0 0.0
    %3436 = vmatpush1.msra.mxu0 0.0
    %3437 = vmatprep.subr.mxu0 0.0
    %3438 = vmatpush1.msra.mxu0 0.0
    %3439 = vmatprep.subr.mxu0 0.0
    %3440 = vmatpush1.msra.mxu0 0.0
    %3441 = vmatprep.subr.mxu0 0.0
    %3442 = vmatpush1.msra.mxu0 0.0
    %3443 = vmatprep.subr.mxu0 0.0
    %3444 = vmatpush1.msra.mxu0 0.0
    %3445 = vmatprep.subr.mxu0 0.0
    %3446 = vmatpush1.msra.mxu0 0.0
    %3447 = vmatprep.subr.mxu0 0.0
    %3448 = vmatpush1.msra.mxu0 0.0
    %3449 = vmatprep.subr.mxu0 0.0
    %3450 = vmatpush1.msra.mxu0 0.0
    %3451 = vmatprep.subr.mxu0 0.0
    %3452 = vmatpush1.msra.mxu0 0.0
    %3453 = vmatprep.subr.mxu0 0.0
    %3454 = vmatpush1.msra.mxu0 0.0
    %3455 = vmatprep.subr.mxu0 0.0
    %3456 = vmatpush1.msra.mxu0 0.0
    %3457 = vmatprep.mubr.f32.mxu0 0.0
    %v3458 = vand.u32 %v2490, 4294901760
    %v3459 = vsub.f32 %v2490, %v3458
    %v3460 = vand.u32 %v3459, 4294901760
    %3461 = vmatmul.mubr.f32.gmra.mrb[0].mxu0 %v3460
    %v3462 = vpop.f32.mrb[0].mxu0
    %v3463 = vadd.f32 %v3269, %v3462
    %v3464 = vpop.f32.mrb[0].mxu0
    %3465 = vmatprep.mubr.f32.mxu0 0.0
    %v3466 = vand.u32 %v2496, 4294901760
    %v3467 = vsub.f32 %v2496, %v3466
    %v3468 = vand.u32 %v3467, 4294901760
    %3469 = vmatmul.mubr.f32.gmra.mrb[0].mxu0 %v3468
    %v3470 = vpop.f32.mrb[0].mxu0
    %v3471 = vadd.f32 %v3276, %v3470
    %v3472 = vpop.f32.mrb[0].mxu0
    %3473 = vmatprep.mubr.f32.mxu0 0.0
    %v3474 = vand.u32 %v2502, 4294901760
    %v3475 = vsub.f32 %v2502, %v3474
    %v3476 = vand.u32 %v3475, 4294901760
    %3477 = vmatmul.mubr.f32.gmra.mrb[0].mxu0 %v3476
    %v3478 = vpop.f32.mrb[0].mxu0
    %v3479 = vadd.f32 %v3283, %v3478
    %v3480 = vpop.f32.mrb[0].mxu0
    %3481 = vmatprep.mubr.f32.mxu0 0.0
    %v3482 = vand.u32 %v2508, 4294901760
    %v3483 = vsub.f32 %v2508, %v3482
    %v3484 = vand.u32 %v3483, 4294901760
    %3485 = vmatmul.mubr.f32.gmra.mrb[0].mxu0 %v3484
    %v3486 = vpop.f32.mrb[0].mxu0
    %v3487 = vadd.f32 %v3290, %v3486
    %v3488 = vpop.f32.mrb[0].mxu0
    %3489 = vmatprep.mubr.f32.mxu0 0.0
    %v3490 = vand.u32 %v2514, 4294901760
    %v3491 = vsub.f32 %v2514, %v3490
    %v3492 = vand.u32 %v3491, 4294901760
    %3493 = vmatmul.mubr.f32.gmra.mrb[0].mxu0 %v3492
    %v3494 = vpop.f32.mrb[0].mxu0
    %v3495 = vadd.f32 %v3297, %v3494
    %v3496 = vpop.f32.mrb[0].mxu0
    %3497 = vmatprep.mubr.f32.mxu0 0.0
    %v3498 = vand.u32 %v2520, 4294901760
    %v3499 = vsub.f32 %v2520, %v3498
    %v3500 = vand.u32 %v3499, 4294901760
    %3501 = vmatmul.mubr.f32.gmra.mrb[0].mxu0 %v3500
    %v3502 = vpop.f32.mrb[0].mxu0
    %v3503 = vadd.f32 %v3304, %v3502
    %v3504 = vpop.f32.mrb[0].mxu0
    %3505 = vmatprep.mubr.f32.mxu0 0.0
    %v3506 = vand.u32 %v2526, 4294901760
    %v3507 = vsub.f32 %v2526, %v3506
    %v3508 = vand.u32 %v3507, 4294901760
    %3509 = vmatmul.mubr.f32.gmra.mrb[0].mxu0 %v3508
    %v3510 = vpop.f32.mrb[0].mxu0
    %v3511 = vadd.f32 %v3311, %v3510
    %v3512 = vpop.f32.mrb[0].mxu0
    %3513 = vmatprep.mubr.f32.mxu0 0.0
    %v3514 = vand.u32 %v2532, 4294901760
    %v3515 = vsub.f32 %v2532, %v3514
    %v3516 = vand.u32 %v3515, 4294901760
    %3517 = vmatmul.mubr.f32.gmra.mrb[0].mxu0 %v3516
    %v3518 = vpop.f32.mrb[0].mxu0
    %v3519 = vadd.f32 %v3318, %v3518
    %v3520 = vpop.f32.mrb[0].mxu0
    %3521 = vmatprep.mubr.f32.mxu0 0.0
    %v3522 = vand.u32 %v2538, 4294901760
    %v3523 = vsub.f32 %v2538, %v3522
    %v3524 = vand.u32 %v3523, 4294901760
    %3525 = vmatmul.mubr.f32.gmra.mrb[0].mxu0 %v3524
    %v3526 = vpop.f32.mrb[0].mxu0
    %v3527 = vadd.f32 %v3325, %v3526
    %v3528 = vpop.f32.mrb[0].mxu0
    %3529 = vmatprep.mubr.f32.mxu0 0.0
    %v3530 = vand.u32 %v2544, 4294901760
    %v3531 = vsub.f32 %v2544, %v3530
    %v3532 = vand.u32 %v3531, 4294901760
    %3533 = vmatmul.mubr.f32.gmra.mrb[0].mxu0 %v3532
    %v3534 = vpop.f32.mrb[0].mxu0
    %v3535 = vadd.f32 %v3332, %v3534
    %v3536 = vpop.f32.mrb[0].mxu0
    %3537 = vmatprep.mubr.f32.mxu0 0.0
    %v3538 = vand.u32 %v2550, 4294901760
    %v3539 = vsub.f32 %v2550, %v3538
    %v3540 = vand.u32 %v3539, 4294901760
    %3541 = vmatmul.mubr.f32.gmra.mrb[0].mxu0 %v3540
    %v3542 = vpop.f32.mrb[0].mxu0
    %v3543 = vadd.f32 %v3339, %v3542
    %v3544 = vpop.f32.mrb[0].mxu0
    %3545 = vmatprep.mubr.f32.mxu0 0.0
    %v3546 = vand.u32 %v2556, 4294901760
    %v3547 = vsub.f32 %v2556, %v3546
    %v3548 = vand.u32 %v3547, 4294901760
    %3549 = vmatmul.mubr.f32.gmra.mrb[0].mxu0 %v3548
    %v3550 = vpop.f32.mrb[0].mxu0
    %v3551 = vadd.f32 %v3346, %v3550
    %v3552 = vpop.f32.mrb[0].mxu0
    %3553 = vmatprep.mubr.f32.mxu0 0.0
    %v3554 = vand.u32 %v2562, 4294901760
    %v3555 = vsub.f32 %v2562, %v3554
    %v3556 = vand.u32 %v3555, 4294901760
    %3557 = vmatmul.mubr.f32.gmra.mrb[0].mxu0 %v3556
    %v3558 = vpop.f32.mrb[0].mxu0
    %v3559 = vadd.f32 %v3353, %v3558
    %v3560 = vpop.f32.mrb[0].mxu0
    %3561 = vmatprep.mubr.f32.mxu0 0.0
    %v3562 = vand.u32 %v2568, 4294901760
    %v3563 = vsub.f32 %v2568, %v3562
    %v3564 = vand.u32 %v3563, 4294901760
    %3565 = vmatmul.mubr.f32.gmra.mrb[0].mxu0 %v3564
    %v3566 = vpop.f32.mrb[0].mxu0
    %v3567 = vadd.f32 %v3360, %v3566
    %v3568 = vpop.f32.mrb[0].mxu0
    %3569 = vmatprep.mubr.f32.mxu0 0.0
    %v3570 = vand.u32 %v2574, 4294901760
    %v3571 = vsub.f32 %v2574, %v3570
    %v3572 = vand.u32 %v3571, 4294901760
    %3573 = vmatmul.mubr.f32.gmra.mrb[0].mxu0 %v3572
    %v3574 = vpop.f32.mrb[0].mxu0
    %v3575 = vadd.f32 %v3367, %v3574
    %v3576 = vpop.f32.mrb[0].mxu0
    %3577 = vmatprep.mubr.f32.mxu0 0.0
    %v3578 = vand.u32 %v2580, 4294901760
    %v3579 = vsub.f32 %v2580, %v3578
    %v3580 = vand.u32 %v3579, 4294901760
    %3581 = vmatmul.mubr.f32.gmra.mrb[0].mxu0 %v3580
    %v3582 = vpop.f32.mrb[0].mxu0
    %v3583 = vadd.f32 %v3374, %v3582
    %v3584 = vpop.f32.mrb[0].mxu0
    %3585 = vdwg.mxu0
    %3586 = vmatprep.subr.mxu0 0.0
    %v3587 = vand.u32 %v2670, 4294901760
    %v3588 = vsub.f32 %v2670, %v3587
    %v3589 = vand.u32 %v3588, 4294901760
    %3590 = vmatpush1.msra.mxu0 %v3589
    %3591 = vmatprep.subr.mxu0 0.0
    %v3592 = vand.u32 %v2671, 4294901760
    %v3593 = vsub.f32 %v2671, %v3592
    %v3594 = vand.u32 %v3593, 4294901760
    %3595 = vmatpush1.msra.mxu0 %v3594
    %3596 = vmatprep.subr.mxu0 0.0
    %v3597 = vand.u32 %v2672, 4294901760
    %v3598 = vsub.f32 %v2672, %v3597
    %v3599 = vand.u32 %v3598, 4294901760
    %3600 = vmatpush1.msra.mxu0 %v3599
    %3601 = vmatprep.subr.mxu0 0.0
    %v3602 = vand.u32 %v2673, 4294901760
    %v3603 = vsub.f32 %v2673, %v3602
    %v3604 = vand.u32 %v3603, 4294901760
    %3605 = vmatpush1.msra.mxu0 %v3604
    %3606 = vmatprep.subr.mxu0 0.0
    %v3607 = vand.u32 %v2674, 4294901760
    %v3608 = vsub.f32 %v2674, %v3607
    %v3609 = vand.u32 %v3608, 4294901760
    %3610 = vmatpush1.msra.mxu0 %v3609
    %3611 = vmatprep.subr.mxu0 0.0
    %v3612 = vand.u32 %v2675, 4294901760
    %v3613 = vsub.f32 %v2675, %v3612
    %v3614 = vand.u32 %v3613, 4294901760
    %3615 = vmatpush1.msra.mxu0 %v3614
    %3616 = vmatprep.subr.mxu0 0.0
    %v3617 = vand.u32 %v2676, 4294901760
    %v3618 = vsub.f32 %v2676, %v3617
    %v3619 = vand.u32 %v3618, 4294901760
    %3620 = vmatpush1.msra.mxu0 %v3619
    %3621 = vmatprep.subr.mxu0 0.0
    %v3622 = vand.u32 %v2677, 4294901760
    %v3623 = vsub.f32 %v2677, %v3622
    %v3624 = vand.u32 %v3623, 4294901760
    %3625 = vmatpush1.msra.mxu0 %v3624
    %3626 = vmatprep.subr.mxu0 0.0
    %v3627 = vand.u32 %v2678, 4294901760
    %v3628 = vsub.f32 %v2678, %v3627
    %v3629 = vand.u32 %v3628, 4294901760
    %3630 = vmatpush1.msra.mxu0 %v3629
    %3631 = vmatprep.subr.mxu0 0.0
    %v3632 = vand.u32 %v2679, 4294901760
    %v3633 = vsub.f32 %v2679, %v3632
    %v3634 = vand.u32 %v3633, 4294901760
    %3635 = vmatpush1.msra.mxu0 %v3634
    %3636 = vmatprep.subr.mxu0 0.0
    %v3637 = vand.u32 %v2680, 4294901760
    %v3638 = vsub.f32 %v2680, %v3637
    %v3639 = vand.u32 %v3638, 4294901760
    %3640 = vmatpush1.msra.mxu0 %v3639
    %3641 = vmatprep.subr.mxu0 0.0
    %v3642 = vand.u32 %v2681, 4294901760
    %v3643 = vsub.f32 %v2681, %v3642
    %v3644 = vand.u32 %v3643, 4294901760
    %3645 = vmatpush1.msra.mxu0 %v3644
    %3646 = vmatprep.subr.mxu0 0.0
    %v3647 = vand.u32 %v2682, 4294901760
    %v3648 = vsub.f32 %v2682, %v3647
    %v3649 = vand.u32 %v3648, 4294901760
    %3650 = vmatpush1.msra.mxu0 %v3649
    %3651 = vmatprep.subr.mxu0 0.0
    %v3652 = vand.u32 %v2683, 4294901760
    %v3653 = vsub.f32 %v2683, %v3652
    %v3654 = vand.u32 %v3653, 4294901760
    %3655 = vmatpush1.msra.mxu0 %v3654
    %3656 = vmatprep.subr.mxu0 0.0
    %v3657 = vand.u32 %v2684, 4294901760
    %v3658 = vsub.f32 %v2684, %v3657
    %v3659 = vand.u32 %v3658, 4294901760
    %3660 = vmatpush1.msra.mxu0 %v3659
    %3661 = vmatprep.subr.mxu0 0.0
    %v3662 = vand.u32 %v2685, 4294901760
    %v3663 = vsub.f32 %v2685, %v3662
    %v3664 = vand.u32 %v3663, 4294901760
    %3665 = vmatpush1.msra.mxu0 %v3664
    %3666 = vmatprep.subr.mxu0 0.0
    %3667 = vmatpush1.msra.mxu0 0.0
    %3668 = vmatprep.subr.mxu0 0.0
    %3669 = vmatpush1.msra.mxu0 0.0
    %3670 = vmatprep.subr.mxu0 0.0
    %3671 = vmatpush1.msra.mxu0 0.0
    %3672 = vmatprep.subr.mxu0 0.0
    %3673 = vmatpush1.msra.mxu0 0.0
    %3674 = vmatprep.subr.mxu0 0.0
    %3675 = vmatpush1.msra.mxu0 0.0
    %3676 = vmatprep.subr.mxu0 0.0
    %3677 = vmatpush1.msra.mxu0 0.0
    %3678 = vmatprep.subr.mxu0 0.0
    %3679 = vmatpush1.msra.mxu0 0.0
    %3680 = vmatprep.subr.mxu0 0.0
    %3681 = vmatpush1.msra.mxu0 0.0
    %3682 = vmatprep.subr.mxu0 0.0
    %3683 = vmatpush1.msra.mxu0 0.0
    %3684 = vmatprep.subr.mxu0 0.0
    %3685 = vmatpush1.msra.mxu0 0.0
    %3686 = vmatprep.subr.mxu0 0.0
    %3687 = vmatpush1.msra.mxu0 0.0
    %3688 = vmatprep.subr.mxu0 0.0
    %3689 = vmatpush1.msra.mxu0 0.0
    %3690 = vmatprep.subr.mxu0 0.0
    %3691 = vmatpush1.msra.mxu0 0.0
    %3692 = vmatprep.subr.mxu0 0.0
    %3693 = vmatpush1.msra.mxu0 0.0
    %3694 = vmatprep.subr.mxu0 0.0
    %3695 = vmatpush1.msra.mxu0 0.0
    %3696 = vmatprep.subr.mxu0 0.0
    %3697 = vmatpush1.msra.mxu0 0.0
    %3698 = vmatprep.mubr.f32.mxu0 0.0
    %v3699 = vand.u32 %v2490, 4294901760
    %3700 = vmatmul.mubr.f32.gmra.mrb[0].mxu0 %v3699
    %v3701 = vpop.f32.mrb[0].mxu0
    %v3702 = vadd.f32 %v3463, %v3701
    %v3703 = vpop.f32.mrb[0].mxu0
    %3704 = vmatprep.mubr.f32.mxu0 0.0
    %v3705 = vand.u32 %v2496, 4294901760
    %3706 = vmatmul.mubr.f32.gmra.mrb[0].mxu0 %v3705
    %v3707 = vpop.f32.mrb[0].mxu0
    %v3708 = vadd.f32 %v3471, %v3707
    %v3709 = vpop.f32.mrb[0].mxu0
    %3710 = vmatprep.mubr.f32.mxu0 0.0
    %v3711 = vand.u32 %v2502, 4294901760
    %3712 = vmatmul.mubr.f32.gmra.mrb[0].mxu0 %v3711
    %v3713 = vpop.f32.mrb[0].mxu0
    %v3714 = vadd.f32 %v3479, %v3713
    %v3715 = vpop.f32.mrb[0].mxu0
    %3716 = vmatprep.mubr.f32.mxu0 0.0
    %v3717 = vand.u32 %v2508, 4294901760
    %3718 = vmatmul.mubr.f32.gmra.mrb[0].mxu0 %v3717
    %v3719 = vpop.f32.mrb[0].mxu0
    %v3720 = vadd.f32 %v3487, %v3719
    %v3721 = vpop.f32.mrb[0].mxu0
    %3722 = vmatprep.mubr.f32.mxu0 0.0
    %v3723 = vand.u32 %v2514, 4294901760
    %3724 = vmatmul.mubr.f32.gmra.mrb[0].mxu0 %v3723
    %v3725 = vpop.f32.mrb[0].mxu0
    %v3726 = vadd.f32 %v3495, %v3725
    %v3727 = vpop.f32.mrb[0].mxu0
    %3728 = vmatprep.mubr.f32.mxu0 0.0
    %v3729 = vand.u32 %v2520, 4294901760
    %3730 = vmatmul.mubr.f32.gmra.mrb[0].mxu0 %v3729
    %v3731 = vpop.f32.mrb[0].mxu0
    %v3732 = vadd.f32 %v3503, %v3731
    %v3733 = vpop.f32.mrb[0].mxu0
    %3734 = vmatprep.mubr.f32.mxu0 0.0
    %v3735 = vand.u32 %v2526, 4294901760
    %3736 = vmatmul.mubr.f32.gmra.mrb[0].mxu0 %v3735
    %v3737 = vpop.f32.mrb[0].mxu0
    %v3738 = vadd.f32 %v3511, %v3737
    %v3739 = vpop.f32.mrb[0].mxu0
    %3740 = vmatprep.mubr.f32.mxu0 0.0
    %v3741 = vand.u32 %v2532, 4294901760
    %3742 = vmatmul.mubr.f32.gmra.mrb[0].mxu0 %v3741
    %v3743 = vpop.f32.mrb[0].mxu0
    %v3744 = vadd.f32 %v3519, %v3743
    %v3745 = vpop.f32.mrb[0].mxu0
    %3746 = vmatprep.mubr.f32.mxu0 0.0
    %v3747 = vand.u32 %v2538, 4294901760
    %3748 = vmatmul.mubr.f32.gmra.mrb[0].mxu0 %v3747
    %v3749 = vpop.f32.mrb[0].mxu0
    %v3750 = vadd.f32 %v3527, %v3749
    %v3751 = vpop.f32.mrb[0].mxu0
    %3752 = vmatprep.mubr.f32.mxu0 0.0
    %v3753 = vand.u32 %v2544, 4294901760
    %3754 = vmatmul.mubr.f32.gmra.mrb[0].mxu0 %v3753
    %v3755 = vpop.f32.mrb[0].mxu0
    %v3756 = vadd.f32 %v3535, %v3755
    %v3757 = vpop.f32.mrb[0].mxu0
    %3758 = vmatprep.mubr.f32.mxu0 0.0
    %v3759 = vand.u32 %v2550, 4294901760
    %3760 = vmatmul.mubr.f32.gmra.mrb[0].mxu0 %v3759
    %v3761 = vpop.f32.mrb[0].mxu0
    %v3762 = vadd.f32 %v3543, %v3761
    %v3763 = vpop.f32.mrb[0].mxu0
    %3764 = vmatprep.mubr.f32.mxu0 0.0
    %v3765 = vand.u32 %v2556, 4294901760
    %3766 = vmatmul.mubr.f32.gmra.mrb[0].mxu0 %v3765
    %v3767 = vpop.f32.mrb[0].mxu0
    %v3768 = vadd.f32 %v3551, %v3767
    %v3769 = vpop.f32.mrb[0].mxu0
    %3770 = vmatprep.mubr.f32.mxu0 0.0
    %v3771 = vand.u32 %v2562, 4294901760
    %3772 = vmatmul.mubr.f32.gmra.mrb[0].mxu0 %v3771
    %v3773 = vpop.f32.mrb[0].mxu0
    %v3774 = vadd.f32 %v3559, %v3773
    %v3775 = vpop.f32.mrb[0].mxu0
    %3776 = vmatprep.mubr.f32.mxu0 0.0
    %v3777 = vand.u32 %v2568, 4294901760
    %3778 = vmatmul.mubr.f32.gmra.mrb[0].mxu0 %v3777
    %v3779 = vpop.f32.mrb[0].mxu0
    %v3780 = vadd.f32 %v3567, %v3779
    %v3781 = vpop.f32.mrb[0].mxu0
    %3782 = vmatprep.mubr.f32.mxu0 0.0
    %v3783 = vand.u32 %v2574, 4294901760
    %3784 = vmatmul.mubr.f32.gmra.mrb[0].mxu0 %v3783
    %v3785 = vpop.f32.mrb[0].mxu0
    %v3786 = vadd.f32 %v3575, %v3785
    %v3787 = vpop.f32.mrb[0].mxu0
    %3788 = vmatprep.mubr.f32.mxu0 0.0
    %v3789 = vand.u32 %v2580, 4294901760
    %3790 = vmatmul.mubr.f32.gmra.mrb[0].mxu0 %v3789
    %v3791 = vpop.f32.mrb[0].mxu0
    %v3792 = vadd.f32 %v3583, %v3791
    %v3793 = vpop.f32.mrb[0].mxu0
    %3794 = vdwg.mxu0
    %3795 = vmatprep.subr.mxu0 0.0
    %v3796 = vand.u32 %v2670, 4294901760
    %3797 = vmatpush1.msra.mxu0 %v3796
    %3798 = vmatprep.subr.mxu0 0.0
    %v3799 = vand.u32 %v2671, 4294901760
    %3800 = vmatpush1.msra.mxu0 %v3799
    %3801 = vmatprep.subr.mxu0 0.0
    %v3802 = vand.u32 %v2672, 4294901760
    %3803 = vmatpush1.msra.mxu0 %v3802
    %3804 = vmatprep.subr.mxu0 0.0
    %v3805 = vand.u32 %v2673, 4294901760
    %3806 = vmatpush1.msra.mxu0 %v3805
    %3807 = vmatprep.subr.mxu0 0.0
    %v3808 = vand.u32 %v2674, 4294901760
    %3809 = vmatpush1.msra.mxu0 %v3808
    %3810 = vmatprep.subr.mxu0 0.0
    %v3811 = vand.u32 %v2675, 4294901760
    %3812 = vmatpush1.msra.mxu0 %v3811
    %3813 = vmatprep.subr.mxu0 0.0
    %v3814 = vand.u32 %v2676, 4294901760
    %3815 = vmatpush1.msra.mxu0 %v3814
    %3816 = vmatprep.subr.mxu0 0.0
    %v3817 = vand.u32 %v2677, 4294901760
    %3818 = vmatpush1.msra.mxu0 %v3817
    %3819 = vmatprep.subr.mxu0 0.0
    %v3820 = vand.u32 %v2678, 4294901760
    %3821 = vmatpush1.msra.mxu0 %v3820
    %3822 = vmatprep.subr.mxu0 0.0
    %v3823 = vand.u32 %v2679, 4294901760
    %3824 = vmatpush1.msra.mxu0 %v3823
    %3825 = vmatprep.subr.mxu0 0.0
    %v3826 = vand.u32 %v2680, 4294901760
    %3827 = vmatpush1.msra.mxu0 %v3826
    %3828 = vmatprep.subr.mxu0 0.0
    %v3829 = vand.u32 %v2681, 4294901760
    %3830 = vmatpush1.msra.mxu0 %v3829
    %3831 = vmatprep.subr.mxu0 0.0
    %v3832 = vand.u32 %v2682, 4294901760
    %3833 = vmatpush1.msra.mxu0 %v3832
    %3834 = vmatprep.subr.mxu0 0.0
    %v3835 = vand.u32 %v2683, 4294901760
    %3836 = vmatpush1.msra.mxu0 %v3835
    %3837 = vmatprep.subr.mxu0 0.0
    %v3838 = vand.u32 %v2684, 4294901760
    %3839 = vmatpush1.msra.mxu0 %v3838
    %3840 = vmatprep.subr.mxu0 0.0
    %v3841 = vand.u32 %v2685, 4294901760
    %3842 = vmatpush1.msra.mxu0 %v3841
    %3843 = vmatprep.subr.mxu0 0.0
    %3844 = vmatpush1.msra.mxu0 0.0
    %3845 = vmatprep.subr.mxu0 0.0
    %3846 = vmatpush1.msra.mxu0 0.0
    %3847 = vmatprep.subr.mxu0 0.0
    %3848 = vmatpush1.msra.mxu0 0.0
    %3849 = vmatprep.subr.mxu0 0.0
    %3850 = vmatpush1.msra.mxu0 0.0
    %3851 = vmatprep.subr.mxu0 0.0
    %3852 = vmatpush1.msra.mxu0 0.0
    %3853 = vmatprep.subr.mxu0 0.0
    %3854 = vmatpush1.msra.mxu0 0.0
    %3855 = vmatprep.subr.mxu0 0.0
    %3856 = vmatpush1.msra.mxu0 0.0
    %3857 = vmatprep.subr.mxu0 0.0
    %3858 = vmatpush1.msra.mxu0 0.0
    %3859 = vmatprep.subr.mxu0 0.0
    %3860 = vmatpush1.msra.mxu0 0.0
    %3861 = vmatprep.subr.mxu0 0.0
    %3862 = vmatpush1.msra.mxu0 0.0
    %3863 = vmatprep.subr.mxu0 0.0
    %3864 = vmatpush1.msra.mxu0 0.0
    %3865 = vmatprep.subr.mxu0 0.0
    %3866 = vmatpush1.msra.mxu0 0.0
    %3867 = vmatprep.subr.mxu0 0.0
    %3868 = vmatpush1.msra.mxu0 0.0
    %3869 = vmatprep.subr.mxu0 0.0
    %3870 = vmatpush1.msra.mxu0 0.0
    %3871 = vmatprep.subr.mxu0 0.0
    %3872 = vmatpush1.msra.mxu0 0.0
    %3873 = vmatprep.subr.mxu0 0.0
    %3874 = vmatpush1.msra.mxu0 0.0
    %3875 = vmatprep.mubr.f32.mxu0 0.0
    %v3876 = vand.u32 %v2490, 4294901760
    %3877 = vmatmul.mubr.f32.gmra.mrb[0].mxu0 %v3876
    %v3878 = vpop.f32.mrb[0].mxu0
    %v3879 = vadd.f32 %v3702, %v3878
    %v3880 = vpop.f32.mrb[0].mxu0
    %3881 = vmatprep.mubr.f32.mxu0 0.0
    %v3882 = vand.u32 %v2496, 4294901760
    %3883 = vmatmul.mubr.f32.gmra.mrb[0].mxu0 %v3882
    %v3884 = vpop.f32.mrb[0].mxu0
    %v3885 = vadd.f32 %v3708, %v3884
    %v3886 = vpop.f32.mrb[0].mxu0
    %3887 = vmatprep.mubr.f32.mxu0 0.0
    %v3888 = vand.u32 %v2502, 4294901760
    %3889 = vmatmul.mubr.f32.gmra.mrb[0].mxu0 %v3888
    %v3890 = vpop.f32.mrb[0].mxu0
    %v3891 = vadd.f32 %v3714, %v3890
    %v3892 = vpop.f32.mrb[0].mxu0
    %3893 = vmatprep.mubr.f32.mxu0 0.0
    %v3894 = vand.u32 %v2508, 4294901760
    %3895 = vmatmul.mubr.f32.gmra.mrb[0].mxu0 %v3894
    %v3896 = vpop.f32.mrb[0].mxu0
    %v3897 = vadd.f32 %v3720, %v3896
    %v3898 = vpop.f32.mrb[0].mxu0
    %3899 = vmatprep.mubr.f32.mxu0 0.0
    %v3900 = vand.u32 %v2514, 4294901760
    %3901 = vmatmul.mubr.f32.gmra.mrb[0].mxu0 %v3900
    %v3902 = vpop.f32.mrb[0].mxu0
    %v3903 = vadd.f32 %v3726, %v3902
    %v3904 = vpop.f32.mrb[0].mxu0
    %3905 = vmatprep.mubr.f32.mxu0 0.0
    %v3906 = vand.u32 %v2520, 4294901760
    %3907 = vmatmul.mubr.f32.gmra.mrb[0].mxu0 %v3906
    %v3908 = vpop.f32.mrb[0].mxu0
    %v3909 = vadd.f32 %v3732, %v3908
    %v3910 = vpop.f32.mrb[0].mxu0
    %3911 = vmatprep.mubr.f32.mxu0 0.0
    %v3912 = vand.u32 %v2526, 4294901760
    %3913 = vmatmul.mubr.f32.gmra.mrb[0].mxu0 %v3912
    %v3914 = vpop.f32.mrb[0].mxu0
    %v3915 = vadd.f32 %v3738, %v3914
    %v3916 = vpop.f32.mrb[0].mxu0
    %3917 = vmatprep.mubr.f32.mxu0 0.0
    %v3918 = vand.u32 %v2532, 4294901760
    %3919 = vmatmul.mubr.f32.gmra.mrb[0].mxu0 %v3918
    %v3920 = vpop.f32.mrb[0].mxu0
    %v3921 = vadd.f32 %v3744, %v3920
    %v3922 = vpop.f32.mrb[0].mxu0
    %3923 = vmatprep.mubr.f32.mxu0 0.0
    %v3924 = vand.u32 %v2538, 4294901760
    %3925 = vmatmul.mubr.f32.gmra.mrb[0].mxu0 %v3924
    %v3926 = vpop.f32.mrb[0].mxu0
    %v3927 = vadd.f32 %v3750, %v3926
    %v3928 = vpop.f32.mrb[0].mxu0
    %3929 = vmatprep.mubr.f32.mxu0 0.0
    %v3930 = vand.u32 %v2544, 4294901760
    %3931 = vmatmul.mubr.f32.gmra.mrb[0].mxu0 %v3930
    %v3932 = vpop.f32.mrb[0].mxu0
    %v3933 = vadd.f32 %v3756, %v3932
    %v3934 = vpop.f32.mrb[0].mxu0
    %3935 = vmatprep.mubr.f32.mxu0 0.0
    %v3936 = vand.u32 %v2550, 4294901760
    %3937 = vmatmul.mubr.f32.gmra.mrb[0].mxu0 %v3936
    %v3938 = vpop.f32.mrb[0].mxu0
    %v3939 = vadd.f32 %v3762, %v3938
    %v3940 = vpop.f32.mrb[0].mxu0
    %3941 = vmatprep.mubr.f32.mxu0 0.0
    %v3942 = vand.u32 %v2556, 4294901760
    %3943 = vmatmul.mubr.f32.gmra.mrb[0].mxu0 %v3942
    %v3944 = vpop.f32.mrb[0].mxu0
    %v3945 = vadd.f32 %v3768, %v3944
    %v3946 = vpop.f32.mrb[0].mxu0
    %3947 = vmatprep.mubr.f32.mxu0 0.0
    %v3948 = vand.u32 %v2562, 4294901760
    %3949 = vmatmul.mubr.f32.gmra.mrb[0].mxu0 %v3948
    %v3950 = vpop.f32.mrb[0].mxu0
    %v3951 = vadd.f32 %v3774, %v3950
    %v3952 = vpop.f32.mrb[0].mxu0
    %3953 = vmatprep.mubr.f32.mxu0 0.0
    %v3954 = vand.u32 %v2568, 4294901760
    %3955 = vmatmul.mubr.f32.gmra.mrb[0].mxu0 %v3954
    %v3956 = vpop.f32.mrb[0].mxu0
    %v3957 = vadd.f32 %v3780, %v3956
    %v3958 = vpop.f32.mrb[0].mxu0
    %3959 = vmatprep.mubr.f32.mxu0 0.0
    %v3960 = vand.u32 %v2574, 4294901760
    %3961 = vmatmul.mubr.f32.gmra.mrb[0].mxu0 %v3960
    %v3962 = vpop.f32.mrb[0].mxu0
    %v3963 = vadd.f32 %v3786, %v3962
    %v3964 = vpop.f32.mrb[0].mxu0
    %3965 = vmatprep.mubr.f32.mxu0 0.0
    %v3966 = vand.u32 %v2580, 4294901760
    %3967 = vmatmul.mubr.f32.gmra.mrb[0].mxu0 %v3966
    %v3968 = vpop.f32.mrb[0].mxu0
    %v3969 = vadd.f32 %v3792, %v3968
    %v3970 = vpop.f32.mrb[0].mxu0
    %3971 = vdwg.mxu0
    %3972 = vmatprep.subr.mxu0 0.0
    %v3973 = vand.u32 %v2654, 4294901760
    %3974 = vmatpush1.msra.mxu0 %v3973
    %3975 = vmatprep.subr.mxu0 0.0
    %v3976 = vand.u32 %v2655, 4294901760
    %3977 = vmatpush1.msra.mxu0 %v3976
    %3978 = vmatprep.subr.mxu0 0.0
    %v3979 = vand.u32 %v2656, 4294901760
    %3980 = vmatpush1.msra.mxu0 %v3979
    %3981 = vmatprep.subr.mxu0 0.0
    %v3982 = vand.u32 %v2657, 4294901760
    %3983 = vmatpush1.msra.mxu0 %v3982
    %3984 = vmatprep.subr.mxu0 0.0
    %v3985 = vand.u32 %v2658, 4294901760
    %3986 = vmatpush1.msra.mxu0 %v3985
    %3987 = vmatprep.subr.mxu0 0.0
    %v3988 = vand.u32 %v2659, 4294901760
    %3989 = vmatpush1.msra.mxu0 %v3988
    %3990 = vmatprep.subr.mxu0 0.0
    %v3991 = vand.u32 %v2660, 4294901760
    %3992 = vmatpush1.msra.mxu0 %v3991
    %3993 = vmatprep.subr.mxu0 0.0
    %v3994 = vand.u32 %v2661, 4294901760
    %3995 = vmatpush1.msra.mxu0 %v3994
    %3996 = vmatprep.subr.mxu0 0.0
    %v3997 = vand.u32 %v2662, 4294901760
    %3998 = vmatpush1.msra.mxu0 %v3997
    %3999 = vmatprep.subr.mxu0 0.0
    %v4000 = vand.u32 %v2663, 4294901760
    %4001 = vmatpush1.msra.mxu0 %v4000
    %4002 = vmatprep.subr.mxu0 0.0
    %v4003 = vand.u32 %v2664, 4294901760
    %4004 = vmatpush1.msra.mxu0 %v4003
    %4005 = vmatprep.subr.mxu0 0.0
    %v4006 = vand.u32 %v2665, 4294901760
    %4007 = vmatpush1.msra.mxu0 %v4006
    %4008 = vmatprep.subr.mxu0 0.0
    %v4009 = vand.u32 %v2666, 4294901760
    %4010 = vmatpush1.msra.mxu0 %v4009
    %4011 = vmatprep.subr.mxu0 0.0
    %v4012 = vand.u32 %v2667, 4294901760
    %4013 = vmatpush1.msra.mxu0 %v4012
    %4014 = vmatprep.subr.mxu0 0.0
    %v4015 = vand.u32 %v2668, 4294901760
    %4016 = vmatpush1.msra.mxu0 %v4015
    %4017 = vmatprep.subr.mxu0 0.0
    %v4018 = vand.u32 %v2669, 4294901760
    %4019 = vmatpush1.msra.mxu0 %v4018
    %4020 = vmatprep.subr.mxu0 0.0
    %4021 = vmatpush1.msra.mxu0 0.0
    %4022 = vmatprep.subr.mxu0 0.0
    %4023 = vmatpush1.msra.mxu0 0.0
    %4024 = vmatprep.subr.mxu0 0.0
    %4025 = vmatpush1.msra.mxu0 0.0
    %4026 = vmatprep.subr.mxu0 0.0
    %4027 = vmatpush1.msra.mxu0 0.0
    %4028 = vmatprep.subr.mxu0 0.0
    %4029 = vmatpush1.msra.mxu0 0.0
    %4030 = vmatprep.subr.mxu0 0.0
    %4031 = vmatpush1.msra.mxu0 0.0
    %4032 = vmatprep.subr.mxu0 0.0
    %4033 = vmatpush1.msra.mxu0 0.0
    %4034 = vmatprep.subr.mxu0 0.0
    %4035 = vmatpush1.msra.mxu0 0.0
    %4036 = vmatprep.subr.mxu0 0.0
    %4037 = vmatpush1.msra.mxu0 0.0
    %4038 = vmatprep.subr.mxu0 0.0
    %4039 = vmatpush1.msra.mxu0 0.0
    %4040 = vmatprep.subr.mxu0 0.0
    %4041 = vmatpush1.msra.mxu0 0.0
    %4042 = vmatprep.subr.mxu0 0.0
    %4043 = vmatpush1.msra.mxu0 0.0
    %4044 = vmatprep.subr.mxu0 0.0
    %4045 = vmatpush1.msra.mxu0 0.0
    %4046 = vmatprep.subr.mxu0 0.0
    %4047 = vmatpush1.msra.mxu0 0.0
    %4048 = vmatprep.subr.mxu0 0.0
    %4049 = vmatpush1.msra.mxu0 0.0
    %4050 = vmatprep.subr.mxu0 0.0
    %4051 = vmatpush1.msra.mxu0 0.0
    %4052 = vmatprep.mubr.f32.mxu0 0.0
    %v4053 = vand.u32 %v1321, 4294901760
    %v4054 = vsub.f32 %v1321, %v4053
    %v4055 = vand.u32 %v4054, 4294901760
    %v4056 = vsub.f32 %v4054, %v4055
    %v4057 = vand.u32 %v4056, 4294901760
    %4058 = vmatmul.mubr.f32.gmra.mrb[0].mxu0 %v4057
    %v4059 = vpop.f32.mrb[0].mxu0
    %v4060 = vadd.f32 %v3879, %v4059
    %v4061 = vpop.f32.mrb[0].mxu0
    %4062 = vmatprep.mubr.f32.mxu0 0.0
    %v4063 = vand.u32 %v1327, 4294901760
    %v4064 = vsub.f32 %v1327, %v4063
    %v4065 = vand.u32 %v4064, 4294901760
    %v4066 = vsub.f32 %v4064, %v4065
    %v4067 = vand.u32 %v4066, 4294901760
    %4068 = vmatmul.mubr.f32.gmra.mrb[0].mxu0 %v4067
    %v4069 = vpop.f32.mrb[0].mxu0
    %v4070 = vadd.f32 %v3885, %v4069
    %v4071 = vpop.f32.mrb[0].mxu0
    %4072 = vmatprep.mubr.f32.mxu0 0.0
    %v4073 = vand.u32 %v1333, 4294901760
    %v4074 = vsub.f32 %v1333, %v4073
    %v4075 = vand.u32 %v4074, 4294901760
    %v4076 = vsub.f32 %v4074, %v4075
    %v4077 = vand.u32 %v4076, 4294901760
    %4078 = vmatmul.mubr.f32.gmra.mrb[0].mxu0 %v4077
    %v4079 = vpop.f32.mrb[0].mxu0
    %v4080 = vadd.f32 %v3891, %v4079
    %v4081 = vpop.f32.mrb[0].mxu0
    %4082 = vmatprep.mubr.f32.mxu0 0.0
    %v4083 = vand.u32 %v1339, 4294901760
    %v4084 = vsub.f32 %v1339, %v4083
    %v4085 = vand.u32 %v4084, 4294901760
    %v4086 = vsub.f32 %v4084, %v4085
    %v4087 = vand.u32 %v4086, 4294901760
    %4088 = vmatmul.mubr.f32.gmra.mrb[0].mxu0 %v4087
    %v4089 = vpop.f32.mrb[0].mxu0
    %v4090 = vadd.f32 %v3897, %v4089
    %v4091 = vpop.f32.mrb[0].mxu0
    %4092 = vmatprep.mubr.f32.mxu0 0.0
    %v4093 = vand.u32 %v1345, 4294901760
    %v4094 = vsub.f32 %v1345, %v4093
    %v4095 = vand.u32 %v4094, 4294901760
    %v4096 = vsub.f32 %v4094, %v4095
    %v4097 = vand.u32 %v4096, 4294901760
    %4098 = vmatmul.mubr.f32.gmra.mrb[0].mxu0 %v4097
    %v4099 = vpop.f32.mrb[0].mxu0
    %v4100 = vadd.f32 %v3903, %v4099
    %v4101 = vpop.f32.mrb[0].mxu0
    %4102 = vmatprep.mubr.f32.mxu0 0.0
    %v4103 = vand.u32 %v1351, 4294901760
    %v4104 = vsub.f32 %v1351, %v4103
    %v4105 = vand.u32 %v4104, 4294901760
    %v4106 = vsub.f32 %v4104, %v4105
    %v4107 = vand.u32 %v4106, 4294901760
    %4108 = vmatmul.mubr.f32.gmra.mrb[0].mxu0 %v4107
    %v4109 = vpop.f32.mrb[0].mxu0
    %v4110 = vadd.f32 %v3909, %v4109
    %v4111 = vpop.f32.mrb[0].mxu0
    %4112 = vmatprep.mubr.f32.mxu0 0.0
    %v4113 = vand.u32 %v1357, 4294901760
    %v4114 = vsub.f32 %v1357, %v4113
    %v4115 = vand.u32 %v4114, 4294901760
    %v4116 = vsub.f32 %v4114, %v4115
    %v4117 = vand.u32 %v4116, 4294901760
    %4118 = vmatmul.mubr.f32.gmra.mrb[0].mxu0 %v4117
    %v4119 = vpop.f32.mrb[0].mxu0
    %v4120 = vadd.f32 %v3915, %v4119
    %v4121 = vpop.f32.mrb[0].mxu0
    %4122 = vmatprep.mubr.f32.mxu0 0.0
    %v4123 = vand.u32 %v1363, 4294901760
    %v4124 = vsub.f32 %v1363, %v4123
    %v4125 = vand.u32 %v4124, 4294901760
    %v4126 = vsub.f32 %v4124, %v4125
    %v4127 = vand.u32 %v4126, 4294901760
    %4128 = vmatmul.mubr.f32.gmra.mrb[0].mxu0 %v4127
    %v4129 = vpop.f32.mrb[0].mxu0
    %v4130 = vadd.f32 %v3921, %v4129
    %v4131 = vpop.f32.mrb[0].mxu0
    %4132 = vmatprep.mubr.f32.mxu0 0.0
    %v4133 = vand.u32 %v1369, 4294901760
    %v4134 = vsub.f32 %v1369, %v4133
    %v4135 = vand.u32 %v4134, 4294901760
    %v4136 = vsub.f32 %v4134, %v4135
    %v4137 = vand.u32 %v4136, 4294901760
    %4138 = vmatmul.mubr.f32.gmra.mrb[0].mxu0 %v4137
    %v4139 = vpop.f32.mrb[0].mxu0
    %v4140 = vadd.f32 %v3927, %v4139
    %v4141 = vpop.f32.mrb[0].mxu0
    %4142 = vmatprep.mubr.f32.mxu0 0.0
    %v4143 = vand.u32 %v1375, 4294901760
    %v4144 = vsub.f32 %v1375, %v4143
    %v4145 = vand.u32 %v4144, 4294901760
    %v4146 = vsub.f32 %v4144, %v4145
    %v4147 = vand.u32 %v4146, 4294901760
    %4148 = vmatmul.mubr.f32.gmra.mrb[0].mxu0 %v4147
    %v4149 = vpop.f32.mrb[0].mxu0
    %v4150 = vadd.f32 %v3933, %v4149
    %v4151 = vpop.f32.mrb[0].mxu0
    %4152 = vmatprep.mubr.f32.mxu0 0.0
    %v4153 = vand.u32 %v1381, 4294901760
    %v4154 = vsub.f32 %v1381, %v4153
    %v4155 = vand.u32 %v4154, 4294901760
    %v4156 = vsub.f32 %v4154, %v4155
    %v4157 = vand.u32 %v4156, 4294901760
    %4158 = vmatmul.mubr.f32.gmra.mrb[0].mxu0 %v4157
    %v4159 = vpop.f32.mrb[0].mxu0
    %v4160 = vadd.f32 %v3939, %v4159
    %v4161 = vpop.f32.mrb[0].mxu0
    %4162 = vmatprep.mubr.f32.mxu0 0.0
    %v4163 = vand.u32 %v1387, 4294901760
    %v4164 = vsub.f32 %v1387, %v4163
    %v4165 = vand.u32 %v4164, 4294901760
    %v4166 = vsub.f32 %v4164, %v4165
    %v4167 = vand.u32 %v4166, 4294901760
    %4168 = vmatmul.mubr.f32.gmra.mrb[0].mxu0 %v4167
    %v4169 = vpop.f32.mrb[0].mxu0
    %v4170 = vadd.f32 %v3945, %v4169
    %v4171 = vpop.f32.mrb[0].mxu0
    %4172 = vmatprep.mubr.f32.mxu0 0.0
    %v4173 = vand.u32 %v1393, 4294901760
    %v4174 = vsub.f32 %v1393, %v4173
    %v4175 = vand.u32 %v4174, 4294901760
    %v4176 = vsub.f32 %v4174, %v4175
    %v4177 = vand.u32 %v4176, 4294901760
    %4178 = vmatmul.mubr.f32.gmra.mrb[0].mxu0 %v4177
    %v4179 = vpop.f32.mrb[0].mxu0
    %v4180 = vadd.f32 %v3951, %v4179
    %v4181 = vpop.f32.mrb[0].mxu0
    %4182 = vmatprep.mubr.f32.mxu0 0.0
    %v4183 = vand.u32 %v1399, 4294901760
    %v4184 = vsub.f32 %v1399, %v4183
    %v4185 = vand.u32 %v4184, 4294901760
    %v4186 = vsub.f32 %v4184, %v4185
    %v4187 = vand.u32 %v4186, 4294901760
    %4188 = vmatmul.mubr.f32.gmra.mrb[0].mxu0 %v4187
    %v4189 = vpop.f32.mrb[0].mxu0
    %v4190 = vadd.f32 %v3957, %v4189
    %v4191 = vpop.f32.mrb[0].mxu0
    %4192 = vmatprep.mubr.f32.mxu0 0.0
    %v4193 = vand.u32 %v1405, 4294901760
    %v4194 = vsub.f32 %v1405, %v4193
    %v4195 = vand.u32 %v4194, 4294901760
    %v4196 = vsub.f32 %v4194, %v4195
    %v4197 = vand.u32 %v4196, 4294901760
    %4198 = vmatmul.mubr.f32.gmra.mrb[0].mxu0 %v4197
    %v4199 = vpop.f32.mrb[0].mxu0
    %v4200 = vadd.f32 %v3963, %v4199
    %v4201 = vpop.f32.mrb[0].mxu0
    %4202 = vmatprep.mubr.f32.mxu0 0.0
    %v4203 = vand.u32 %v1411, 4294901760
    %v4204 = vsub.f32 %v1411, %v4203
    %v4205 = vand.u32 %v4204, 4294901760
    %v4206 = vsub.f32 %v4204, %v4205
    %v4207 = vand.u32 %v4206, 4294901760
    %4208 = vmatmul.mubr.f32.gmra.mrb[0].mxu0 %v4207
    %v4209 = vpop.f32.mrb[0].mxu0
    %v4210 = vadd.f32 %v3969, %v4209
    %v4211 = vpop.f32.mrb[0].mxu0
    %4212 = vdwg.mxu0
    %4213 = vmatprep.subr.mxu0 0.0
    %v4214 = vand.u32 %v2654, 4294901760
    %v4215 = vsub.f32 %v2654, %v4214
    %v4216 = vand.u32 %v4215, 4294901760
    %v4217 = vsub.f32 %v4215, %v4216
    %v4218 = vand.u32 %v4217, 4294901760
    %4219 = vmatpush1.msra.mxu0 %v4218
    %4220 = vmatprep.subr.mxu0 0.0
    %v4221 = vand.u32 %v2655, 4294901760
    %v4222 = vsub.f32 %v2655, %v4221
    %v4223 = vand.u32 %v4222, 4294901760
    %v4224 = vsub.f32 %v4222, %v4223
    %v4225 = vand.u32 %v4224, 4294901760
    %4226 = vmatpush1.msra.mxu0 %v4225
    %4227 = vmatprep.subr.mxu0 0.0
    %v4228 = vand.u32 %v2656, 4294901760
    %v4229 = vsub.f32 %v2656, %v4228
    %v4230 = vand.u32 %v4229, 4294901760
    %v4231 = vsub.f32 %v4229, %v4230
    %v4232 = vand.u32 %v4231, 4294901760
    %4233 = vmatpush1.msra.mxu0 %v4232
    %4234 = vmatprep.subr.mxu0 0.0
    %v4235 = vand.u32 %v2657, 4294901760
    %v4236 = vsub.f32 %v2657, %v4235
    %v4237 = vand.u32 %v4236, 4294901760
    %v4238 = vsub.f32 %v4236, %v4237
    %v4239 = vand.u32 %v4238, 4294901760
    %4240 = vmatpush1.msra.mxu0 %v4239
    %4241 = vmatprep.subr.mxu0 0.0
    %v4242 = vand.u32 %v2658, 4294901760
    %v4243 = vsub.f32 %v2658, %v4242
    %v4244 = vand.u32 %v4243, 4294901760
    %v4245 = vsub.f32 %v4243, %v4244
    %v4246 = vand.u32 %v4245, 4294901760
    %4247 = vmatpush1.msra.mxu0 %v4246
    %4248 = vmatprep.subr.mxu0 0.0
    %v4249 = vand.u32 %v2659, 4294901760
    %v4250 = vsub.f32 %v2659, %v4249
    %v4251 = vand.u32 %v4250, 4294901760
    %v4252 = vsub.f32 %v4250, %v4251
    %v4253 = vand.u32 %v4252, 4294901760
    %4254 = vmatpush1.msra.mxu0 %v4253
    %4255 = vmatprep.subr.mxu0 0.0
    %v4256 = vand.u32 %v2660, 4294901760
    %v4257 = vsub.f32 %v2660, %v4256
    %v4258 = vand.u32 %v4257, 4294901760
    %v4259 = vsub.f32 %v4257, %v4258
    %v4260 = vand.u32 %v4259, 4294901760
    %4261 = vmatpush1.msra.mxu0 %v4260
    %4262 = vmatprep.subr.mxu0 0.0
    %v4263 = vand.u32 %v2661, 4294901760
    %v4264 = vsub.f32 %v2661, %v4263
    %v4265 = vand.u32 %v4264, 4294901760
    %v4266 = vsub.f32 %v4264, %v4265
    %v4267 = vand.u32 %v4266, 4294901760
    %4268 = vmatpush1.msra.mxu0 %v4267
    %4269 = vmatprep.subr.mxu0 0.0
    %v4270 = vand.u32 %v2662, 4294901760
    %v4271 = vsub.f32 %v2662, %v4270
    %v4272 = vand.u32 %v4271, 4294901760
    %v4273 = vsub.f32 %v4271, %v4272
    %v4274 = vand.u32 %v4273, 4294901760
    %4275 = vmatpush1.msra.mxu0 %v4274
    %4276 = vmatprep.subr.mxu0 0.0
    %v4277 = vand.u32 %v2663, 4294901760
    %v4278 = vsub.f32 %v2663, %v4277
    %v4279 = vand.u32 %v4278, 4294901760
    %v4280 = vsub.f32 %v4278, %v4279
    %v4281 = vand.u32 %v4280, 4294901760
    %4282 = vmatpush1.msra.mxu0 %v4281
    %4283 = vmatprep.subr.mxu0 0.0
    %v4284 = vand.u32 %v2664, 4294901760
    %v4285 = vsub.f32 %v2664, %v4284
    %v4286 = vand.u32 %v4285, 4294901760
    %v4287 = vsub.f32 %v4285, %v4286
    %v4288 = vand.u32 %v4287, 4294901760
    %4289 = vmatpush1.msra.mxu0 %v4288
    %4290 = vmatprep.subr.mxu0 0.0
    %v4291 = vand.u32 %v2665, 4294901760
    %v4292 = vsub.f32 %v2665, %v4291
    %v4293 = vand.u32 %v4292, 4294901760
    %v4294 = vsub.f32 %v4292, %v4293
    %v4295 = vand.u32 %v4294, 4294901760
    %4296 = vmatpush1.msra.mxu0 %v4295
    %4297 = vmatprep.subr.mxu0 0.0
    %v4298 = vand.u32 %v2666, 4294901760
    %v4299 = vsub.f32 %v2666, %v4298
    %v4300 = vand.u32 %v4299, 4294901760
    %v4301 = vsub.f32 %v4299, %v4300
    %v4302 = vand.u32 %v4301, 4294901760
    %4303 = vmatpush1.msra.mxu0 %v4302
    %4304 = vmatprep.subr.mxu0 0.0
    %v4305 = vand.u32 %v2667, 4294901760
    %v4306 = vsub.f32 %v2667, %v4305
    %v4307 = vand.u32 %v4306, 4294901760
    %v4308 = vsub.f32 %v4306, %v4307
    %v4309 = vand.u32 %v4308, 4294901760
    %4310 = vmatpush1.msra.mxu0 %v4309
    %4311 = vmatprep.subr.mxu0 0.0
    %v4312 = vand.u32 %v2668, 4294901760
    %v4313 = vsub.f32 %v2668, %v4312
    %v4314 = vand.u32 %v4313, 4294901760
    %v4315 = vsub.f32 %v4313, %v4314
    %v4316 = vand.u32 %v4315, 4294901760
    %4317 = vmatpush1.msra.mxu0 %v4316
    %4318 = vmatprep.subr.mxu0 0.0
    %v4319 = vand.u32 %v2669, 4294901760
    %v4320 = vsub.f32 %v2669, %v4319
    %v4321 = vand.u32 %v4320, 4294901760
    %v4322 = vsub.f32 %v4320, %v4321
    %v4323 = vand.u32 %v4322, 4294901760
    %4324 = vmatpush1.msra.mxu0 %v4323
    %4325 = vmatprep.subr.mxu0 0.0
    %4326 = vmatpush1.msra.mxu0 0.0
    %4327 = vmatprep.subr.mxu0 0.0
    %4328 = vmatpush1.msra.mxu0 0.0
    %4329 = vmatprep.subr.mxu0 0.0
    %4330 = vmatpush1.msra.mxu0 0.0
    %4331 = vmatprep.subr.mxu0 0.0
    %4332 = vmatpush1.msra.mxu0 0.0
    %4333 = vmatprep.subr.mxu0 0.0
    %4334 = vmatpush1.msra.mxu0 0.0
    %4335 = vmatprep.subr.mxu0 0.0
    %4336 = vmatpush1.msra.mxu0 0.0
    %4337 = vmatprep.subr.mxu0 0.0
    %4338 = vmatpush1.msra.mxu0 0.0
    %4339 = vmatprep.subr.mxu0 0.0
    %4340 = vmatpush1.msra.mxu0 0.0
    %4341 = vmatprep.subr.mxu0 0.0
    %4342 = vmatpush1.msra.mxu0 0.0
    %4343 = vmatprep.subr.mxu0 0.0
    %4344 = vmatpush1.msra.mxu0 0.0
    %4345 = vmatprep.subr.mxu0 0.0
    %4346 = vmatpush1.msra.mxu0 0.0
    %4347 = vmatprep.subr.mxu0 0.0
    %4348 = vmatpush1.msra.mxu0 0.0
    %4349 = vmatprep.subr.mxu0 0.0
    %4350 = vmatpush1.msra.mxu0 0.0
    %4351 = vmatprep.subr.mxu0 0.0
    %4352 = vmatpush1.msra.mxu0 0.0
    %4353 = vmatprep.subr.mxu0 0.0
    %4354 = vmatpush1.msra.mxu0 0.0
    %4355 = vmatprep.subr.mxu0 0.0
    %4356 = vmatpush1.msra.mxu0 0.0
    %4357 = vmatprep.mubr.f32.mxu0 0.0
    %v4358 = vand.u32 %v1321, 4294901760
    %4359 = vmatmul.mubr.f32.gmra.mrb[0].mxu0 %v4358
    %v4360 = vpop.f32.mrb[0].mxu0
    %v4361 = vadd.f32 %v4060, %v4360
    %v4362 = vpop.f32.mrb[0].mxu0
    %4363 = vmatprep.mubr.f32.mxu0 0.0
    %v4364 = vand.u32 %v1327, 4294901760
    %4365 = vmatmul.mubr.f32.gmra.mrb[0].mxu0 %v4364
    %v4366 = vpop.f32.mrb[0].mxu0
    %v4367 = vadd.f32 %v4070, %v4366
    %v4368 = vpop.f32.mrb[0].mxu0
    %4369 = vmatprep.mubr.f32.mxu0 0.0
    %v4370 = vand.u32 %v1333, 4294901760
    %4371 = vmatmul.mubr.f32.gmra.mrb[0].mxu0 %v4370
    %v4372 = vpop.f32.mrb[0].mxu0
    %v4373 = vadd.f32 %v4080, %v4372
    %v4374 = vpop.f32.mrb[0].mxu0
    %4375 = vmatprep.mubr.f32.mxu0 0.0
    %v4376 = vand.u32 %v1339, 4294901760
    %4377 = vmatmul.mubr.f32.gmra.mrb[0].mxu0 %v4376
    %v4378 = vpop.f32.mrb[0].mxu0
    %v4379 = vadd.f32 %v4090, %v4378
    %v4380 = vpop.f32.mrb[0].mxu0
    %4381 = vmatprep.mubr.f32.mxu0 0.0
    %v4382 = vand.u32 %v1345, 4294901760
    %4383 = vmatmul.mubr.f32.gmra.mrb[0].mxu0 %v4382
    %v4384 = vpop.f32.mrb[0].mxu0
    %v4385 = vadd.f32 %v4100, %v4384
    %v4386 = vpop.f32.mrb[0].mxu0
    %4387 = vmatprep.mubr.f32.mxu0 0.0
    %v4388 = vand.u32 %v1351, 4294901760
    %4389 = vmatmul.mubr.f32.gmra.mrb[0].mxu0 %v4388
    %v4390 = vpop.f32.mrb[0].mxu0
    %v4391 = vadd.f32 %v4110, %v4390
    %v4392 = vpop.f32.mrb[0].mxu0
    %4393 = vmatprep.mubr.f32.mxu0 0.0
    %v4394 = vand.u32 %v1357, 4294901760
    %4395 = vmatmul.mubr.f32.gmra.mrb[0].mxu0 %v4394
    %v4396 = vpop.f32.mrb[0].mxu0
    %v4397 = vadd.f32 %v4120, %v4396
    %v4398 = vpop.f32.mrb[0].mxu0
    %4399 = vmatprep.mubr.f32.mxu0 0.0
    %v4400 = vand.u32 %v1363, 4294901760
    %4401 = vmatmul.mubr.f32.gmra.mrb[0].mxu0 %v4400
    %v4402 = vpop.f32.mrb[0].mxu0
    %v4403 = vadd.f32 %v4130, %v4402
    %v4404 = vpop.f32.mrb[0].mxu0
    %4405 = vmatprep.mubr.f32.mxu0 0.0
    %v4406 = vand.u32 %v1369, 4294901760
    %4407 = vmatmul.mubr.f32.gmra.mrb[0].mxu0 %v4406
    %v4408 = vpop.f32.mrb[0].mxu0
    %v4409 = vadd.f32 %v4140, %v4408
    %v4410 = vpop.f32.mrb[0].mxu0
    %4411 = vmatprep.mubr.f32.mxu0 0.0
    %v4412 = vand.u32 %v1375, 4294901760
    %4413 = vmatmul.mubr.f32.gmra.mrb[0].mxu0 %v4412
    %v4414 = vpop.f32.mrb[0].mxu0
    %v4415 = vadd.f32 %v4150, %v4414
    %v4416 = vpop.f32.mrb[0].mxu0
    %4417 = vmatprep.mubr.f32.mxu0 0.0
    %v4418 = vand.u32 %v1381, 4294901760
    %4419 = vmatmul.mubr.f32.gmra.mrb[0].mxu0 %v4418
    %v4420 = vpop.f32.mrb[0].mxu0
    %v4421 = vadd.f32 %v4160, %v4420
    %v4422 = vpop.f32.mrb[0].mxu0
    %4423 = vmatprep.mubr.f32.mxu0 0.0
    %v4424 = vand.u32 %v1387, 4294901760
    %4425 = vmatmul.mubr.f32.gmra.mrb[0].mxu0 %v4424
    %v4426 = vpop.f32.mrb[0].mxu0
    %v4427 = vadd.f32 %v4170, %v4426
    %v4428 = vpop.f32.mrb[0].mxu0
    %4429 = vmatprep.mubr.f32.mxu0 0.0
    %v4430 = vand.u32 %v1393, 4294901760
    %4431 = vmatmul.mubr.f32.gmra.mrb[0].mxu0 %v4430
    %v4432 = vpop.f32.mrb[0].mxu0
    %v4433 = vadd.f32 %v4180, %v4432
    %v4434 = vpop.f32.mrb[0].mxu0
    %4435 = vmatprep.mubr.f32.mxu0 0.0
    %v4436 = vand.u32 %v1399, 4294901760
    %4437 = vmatmul.mubr.f32.gmra.mrb[0].mxu0 %v4436
    %v4438 = vpop.f32.mrb[0].mxu0
    %v4439 = vadd.f32 %v4190, %v4438
    %v4440 = vpop.f32.mrb[0].mxu0
    %4441 = vmatprep.mubr.f32.mxu0 0.0
    %v4442 = vand.u32 %v1405, 4294901760
    %4443 = vmatmul.mubr.f32.gmra.mrb[0].mxu0 %v4442
    %v4444 = vpop.f32.mrb[0].mxu0
    %v4445 = vadd.f32 %v4200, %v4444
    %v4446 = vpop.f32.mrb[0].mxu0
    %4447 = vmatprep.mubr.f32.mxu0 0.0
    %v4448 = vand.u32 %v1411, 4294901760
    %4449 = vmatmul.mubr.f32.gmra.mrb[0].mxu0 %v4448
    %v4450 = vpop.f32.mrb[0].mxu0
    %v4451 = vadd.f32 %v4210, %v4450
    %v4452 = vpop.f32.mrb[0].mxu0
    %4453 = vdwg.mxu0
    %4454 = vmatprep.subr.mxu0 0.0
    %v4455 = vand.u32 %v2654, 4294901760
    %v4456 = vsub.f32 %v2654, %v4455
    %4457 = vmatpush1.msra.mxu0 %v4456
    %4458 = vmatprep.subr.mxu0 0.0
    %v4459 = vand.u32 %v2655, 4294901760
    %v4460 = vsub.f32 %v2655, %v4459
    %4461 = vmatpush1.msra.mxu0 %v4460
    %4462 = vmatprep.subr.mxu0 0.0
    %v4463 = vand.u32 %v2656, 4294901760
    %v4464 = vsub.f32 %v2656, %v4463
    %4465 = vmatpush1.msra.mxu0 %v4464
    %4466 = vmatprep.subr.mxu0 0.0
    %v4467 = vand.u32 %v2657, 4294901760
    %v4468 = vsub.f32 %v2657, %v4467
    %4469 = vmatpush1.msra.mxu0 %v4468
    %4470 = vmatprep.subr.mxu0 0.0
    %v4471 = vand.u32 %v2658, 4294901760
    %v4472 = vsub.f32 %v2658, %v4471
    %4473 = vmatpush1.msra.mxu0 %v4472
    %4474 = vmatprep.subr.mxu0 0.0
    %v4475 = vand.u32 %v2659, 4294901760
    %v4476 = vsub.f32 %v2659, %v4475
    %4477 = vmatpush1.msra.mxu0 %v4476
    %4478 = vmatprep.subr.mxu0 0.0
    %v4479 = vand.u32 %v2660, 4294901760
    %v4480 = vsub.f32 %v2660, %v4479
    %4481 = vmatpush1.msra.mxu0 %v4480
    %4482 = vmatprep.subr.mxu0 0.0
    %v4483 = vand.u32 %v2661, 4294901760
    %v4484 = vsub.f32 %v2661, %v4483
    %4485 = vmatpush1.msra.mxu0 %v4484
    %4486 = vmatprep.subr.mxu0 0.0
    %v4487 = vand.u32 %v2662, 4294901760
    %v4488 = vsub.f32 %v2662, %v4487
    %4489 = vmatpush1.msra.mxu0 %v4488
    %4490 = vmatprep.subr.mxu0 0.0
    %v4491 = vand.u32 %v2663, 4294901760
    %v4492 = vsub.f32 %v2663, %v4491
    %4493 = vmatpush1.msra.mxu0 %v4492
    %4494 = vmatprep.subr.mxu0 0.0
    %v4495 = vand.u32 %v2664, 4294901760
    %v4496 = vsub.f32 %v2664, %v4495
    %4497 = vmatpush1.msra.mxu0 %v4496
    %4498 = vmatprep.subr.mxu0 0.0
    %v4499 = vand.u32 %v2665, 4294901760
    %v4500 = vsub.f32 %v2665, %v4499
    %4501 = vmatpush1.msra.mxu0 %v4500
    %4502 = vmatprep.subr.mxu0 0.0
    %v4503 = vand.u32 %v2666, 4294901760
    %v4504 = vsub.f32 %v2666, %v4503
    %4505 = vmatpush1.msra.mxu0 %v4504
    %4506 = vmatprep.subr.mxu0 0.0
    %v4507 = vand.u32 %v2667, 4294901760
    %v4508 = vsub.f32 %v2667, %v4507
    %4509 = vmatpush1.msra.mxu0 %v4508
    %4510 = vmatprep.subr.mxu0 0.0
    %v4511 = vand.u32 %v2668, 4294901760
    %v4512 = vsub.f32 %v2668, %v4511
    %4513 = vmatpush1.msra.mxu0 %v4512
    %4514 = vmatprep.subr.mxu0 0.0
    %v4515 = vand.u32 %v2669, 4294901760
    %v4516 = vsub.f32 %v2669, %v4515
    %4517 = vmatpush1.msra.mxu0 %v4516
    %4518 = vmatprep.subr.mxu0 0.0
    %4519 = vmatpush1.msra.mxu0 0.0
    %4520 = vmatprep.subr.mxu0 0.0
    %4521 = vmatpush1.msra.mxu0 0.0
    %4522 = vmatprep.subr.mxu0 0.0
    %4523 = vmatpush1.msra.mxu0 0.0
    %4524 = vmatprep.subr.mxu0 0.0
    %4525 = vmatpush1.msra.mxu0 0.0
    %4526 = vmatprep.subr.mxu0 0.0
    %4527 = vmatpush1.msra.mxu0 0.0
    %4528 = vmatprep.subr.mxu0 0.0
    %4529 = vmatpush1.msra.mxu0 0.0
    %4530 = vmatprep.subr.mxu0 0.0
    %4531 = vmatpush1.msra.mxu0 0.0
    %4532 = vmatprep.subr.mxu0 0.0
    %4533 = vmatpush1.msra.mxu0 0.0
    %4534 = vmatprep.subr.mxu0 0.0
    %4535 = vmatpush1.msra.mxu0 0.0
    %4536 = vmatprep.subr.mxu0 0.0
    %4537 = vmatpush1.msra.mxu0 0.0
    %4538 = vmatprep.subr.mxu0 0.0
    %4539 = vmatpush1.msra.mxu0 0.0
    %4540 = vmatprep.subr.mxu0 0.0
    %4541 = vmatpush1.msra.mxu0 0.0
    %4542 = vmatprep.subr.mxu0 0.0
    %4543 = vmatpush1.msra.mxu0 0.0
    %4544 = vmatprep.subr.mxu0 0.0
    %4545 = vmatpush1.msra.mxu0 0.0
    %4546 = vmatprep.subr.mxu0 0.0
    %4547 = vmatpush1.msra.mxu0 0.0
    %4548 = vmatprep.subr.mxu0 0.0
    %4549 = vmatpush1.msra.mxu0 0.0
    %4550 = vmatprep.mubr.f32.mxu0 0.0
    %v4551 = vand.u32 %v1321, 4294901760
    %v4552 = vsub.f32 %v1321, %v4551
    %4553 = vmatmul.mubr.f32.gmra.mrb[0].mxu0 %v4552
    %v4554 = vpop.f32.mrb[0].mxu0
    %v4555 = vadd.f32 %v4361, %v4554
    %v4556 = vpop.f32.mrb[0].mxu0
    %4557 = vmatprep.mubr.f32.mxu0 0.0
    %v4558 = vand.u32 %v1327, 4294901760
    %v4559 = vsub.f32 %v1327, %v4558
    %4560 = vmatmul.mubr.f32.gmra.mrb[0].mxu0 %v4559
    %v4561 = vpop.f32.mrb[0].mxu0
    %v4562 = vadd.f32 %v4367, %v4561
    %v4563 = vpop.f32.mrb[0].mxu0
    %4564 = vmatprep.mubr.f32.mxu0 0.0
    %v4565 = vand.u32 %v1333, 4294901760
    %v4566 = vsub.f32 %v1333, %v4565
    %4567 = vmatmul.mubr.f32.gmra.mrb[0].mxu0 %v4566
    %v4568 = vpop.f32.mrb[0].mxu0
    %v4569 = vadd.f32 %v4373, %v4568
    %v4570 = vpop.f32.mrb[0].mxu0
    %4571 = vmatprep.mubr.f32.mxu0 0.0
    %v4572 = vand.u32 %v1339, 4294901760
    %v4573 = vsub.f32 %v1339, %v4572
    %4574 = vmatmul.mubr.f32.gmra.mrb[0].mxu0 %v4573
    %v4575 = vpop.f32.mrb[0].mxu0
    %v4576 = vadd.f32 %v4379, %v4575
    %v4577 = vpop.f32.mrb[0].mxu0
    %4578 = vmatprep.mubr.f32.mxu0 0.0
    %v4579 = vand.u32 %v1345, 4294901760
    %v4580 = vsub.f32 %v1345, %v4579
    %4581 = vmatmul.mubr.f32.gmra.mrb[0].mxu0 %v4580
    %v4582 = vpop.f32.mrb[0].mxu0
    %v4583 = vadd.f32 %v4385, %v4582
    %v4584 = vpop.f32.mrb[0].mxu0
    %4585 = vmatprep.mubr.f32.mxu0 0.0
    %v4586 = vand.u32 %v1351, 4294901760
    %v4587 = vsub.f32 %v1351, %v4586
    %4588 = vmatmul.mubr.f32.gmra.mrb[0].mxu0 %v4587
    %v4589 = vpop.f32.mrb[0].mxu0
    %v4590 = vadd.f32 %v4391, %v4589
    %v4591 = vpop.f32.mrb[0].mxu0
    %4592 = vmatprep.mubr.f32.mxu0 0.0
    %v4593 = vand.u32 %v1357, 4294901760
    %v4594 = vsub.f32 %v1357, %v4593
    %4595 = vmatmul.mubr.f32.gmra.mrb[0].mxu0 %v4594
    %v4596 = vpop.f32.mrb[0].mxu0
    %v4597 = vadd.f32 %v4397, %v4596
    %v4598 = vpop.f32.mrb[0].mxu0
    %4599 = vmatprep.mubr.f32.mxu0 0.0
    %v4600 = vand.u32 %v1363, 4294901760
    %v4601 = vsub.f32 %v1363, %v4600
    %4602 = vmatmul.mubr.f32.gmra.mrb[0].mxu0 %v4601
    %v4603 = vpop.f32.mrb[0].mxu0
    %v4604 = vadd.f32 %v4403, %v4603
    %v4605 = vpop.f32.mrb[0].mxu0
    %4606 = vmatprep.mubr.f32.mxu0 0.0
    %v4607 = vand.u32 %v1369, 4294901760
    %v4608 = vsub.f32 %v1369, %v4607
    %4609 = vmatmul.mubr.f32.gmra.mrb[0].mxu0 %v4608
    %v4610 = vpop.f32.mrb[0].mxu0
    %v4611 = vadd.f32 %v4409, %v4610
    %v4612 = vpop.f32.mrb[0].mxu0
    %4613 = vmatprep.mubr.f32.mxu0 0.0
    %v4614 = vand.u32 %v1375, 4294901760
    %v4615 = vsub.f32 %v1375, %v4614
    %4616 = vmatmul.mubr.f32.gmra.mrb[0].mxu0 %v4615
    %v4617 = vpop.f32.mrb[0].mxu0
    %v4618 = vadd.f32 %v4415, %v4617
    %v4619 = vpop.f32.mrb[0].mxu0
    %4620 = vmatprep.mubr.f32.mxu0 0.0
    %v4621 = vand.u32 %v1381, 4294901760
    %v4622 = vsub.f32 %v1381, %v4621
    %4623 = vmatmul.mubr.f32.gmra.mrb[0].mxu0 %v4622
    %v4624 = vpop.f32.mrb[0].mxu0
    %v4625 = vadd.f32 %v4421, %v4624
    %v4626 = vpop.f32.mrb[0].mxu0
    %4627 = vmatprep.mubr.f32.mxu0 0.0
    %v4628 = vand.u32 %v1387, 4294901760
    %v4629 = vsub.f32 %v1387, %v4628
    %4630 = vmatmul.mubr.f32.gmra.mrb[0].mxu0 %v4629
    %v4631 = vpop.f32.mrb[0].mxu0
    %v4632 = vadd.f32 %v4427, %v4631
    %v4633 = vpop.f32.mrb[0].mxu0
    %4634 = vmatprep.mubr.f32.mxu0 0.0
    %v4635 = vand.u32 %v1393, 4294901760
    %v4636 = vsub.f32 %v1393, %v4635
    %4637 = vmatmul.mubr.f32.gmra.mrb[0].mxu0 %v4636
    %v4638 = vpop.f32.mrb[0].mxu0
    %v4639 = vadd.f32 %v4433, %v4638
    %v4640 = vpop.f32.mrb[0].mxu0
    %4641 = vmatprep.mubr.f32.mxu0 0.0
    %v4642 = vand.u32 %v1399, 4294901760
    %v4643 = vsub.f32 %v1399, %v4642
    %4644 = vmatmul.mubr.f32.gmra.mrb[0].mxu0 %v4643
    %v4645 = vpop.f32.mrb[0].mxu0
    %v4646 = vadd.f32 %v4439, %v4645
    %v4647 = vpop.f32.mrb[0].mxu0
    %4648 = vmatprep.mubr.f32.mxu0 0.0
    %v4649 = vand.u32 %v1405, 4294901760
    %v4650 = vsub.f32 %v1405, %v4649
    %4651 = vmatmul.mubr.f32.gmra.mrb[0].mxu0 %v4650
    %v4652 = vpop.f32.mrb[0].mxu0
    %v4653 = vadd.f32 %v4445, %v4652
    %v4654 = vpop.f32.mrb[0].mxu0
    %4655 = vmatprep.mubr.f32.mxu0 0.0
    %v4656 = vand.u32 %v1411, 4294901760
    %v4657 = vsub.f32 %v1411, %v4656
    %4658 = vmatmul.mubr.f32.gmra.mrb[0].mxu0 %v4657
    %v4659 = vpop.f32.mrb[0].mxu0
    %v4660 = vadd.f32 %v4451, %v4659
    %v4661 = vpop.f32.mrb[0].mxu0
    %4662 = vdwg.mxu0
    %4663 = vmatprep.subr.mxu0 0.0
    %v4664 = vand.u32 %v2654, 4294901760
    %4665 = vmatpush1.msra.mxu0 %v4664
    %4666 = vmatprep.subr.mxu0 0.0
    %v4667 = vand.u32 %v2655, 4294901760
    %4668 = vmatpush1.msra.mxu0 %v4667
    %4669 = vmatprep.subr.mxu0 0.0
    %v4670 = vand.u32 %v2656, 4294901760
    %4671 = vmatpush1.msra.mxu0 %v4670
    %4672 = vmatprep.subr.mxu0 0.0
    %v4673 = vand.u32 %v2657, 4294901760
    %4674 = vmatpush1.msra.mxu0 %v4673
    %4675 = vmatprep.subr.mxu0 0.0
    %v4676 = vand.u32 %v2658, 4294901760
    %4677 = vmatpush1.msra.mxu0 %v4676
    %4678 = vmatprep.subr.mxu0 0.0
    %v4679 = vand.u32 %v2659, 4294901760
    %4680 = vmatpush1.msra.mxu0 %v4679
    %4681 = vmatprep.subr.mxu0 0.0
    %v4682 = vand.u32 %v2660, 4294901760
    %4683 = vmatpush1.msra.mxu0 %v4682
    %4684 = vmatprep.subr.mxu0 0.0
    %v4685 = vand.u32 %v2661, 4294901760
    %4686 = vmatpush1.msra.mxu0 %v4685
    %4687 = vmatprep.subr.mxu0 0.0
    %v4688 = vand.u32 %v2662, 4294901760
    %4689 = vmatpush1.msra.mxu0 %v4688
    %4690 = vmatprep.subr.mxu0 0.0
    %v4691 = vand.u32 %v2663, 4294901760
    %4692 = vmatpush1.msra.mxu0 %v4691
    %4693 = vmatprep.subr.mxu0 0.0
    %v4694 = vand.u32 %v2664, 4294901760
    %4695 = vmatpush1.msra.mxu0 %v4694
    %4696 = vmatprep.subr.mxu0 0.0
    %v4697 = vand.u32 %v2665, 4294901760
    %4698 = vmatpush1.msra.mxu0 %v4697
    %4699 = vmatprep.subr.mxu0 0.0
    %v4700 = vand.u32 %v2666, 4294901760
    %4701 = vmatpush1.msra.mxu0 %v4700
    %4702 = vmatprep.subr.mxu0 0.0
    %v4703 = vand.u32 %v2667, 4294901760
    %4704 = vmatpush1.msra.mxu0 %v4703
    %4705 = vmatprep.subr.mxu0 0.0
    %v4706 = vand.u32 %v2668, 4294901760
    %4707 = vmatpush1.msra.mxu0 %v4706
    %4708 = vmatprep.subr.mxu0 0.0
    %v4709 = vand.u32 %v2669, 4294901760
    %4710 = vmatpush1.msra.mxu0 %v4709
    %4711 = vmatprep.subr.mxu0 0.0
    %4712 = vmatpush1.msra.mxu0 0.0
    %4713 = vmatprep.subr.mxu0 0.0
    %4714 = vmatpush1.msra.mxu0 0.0
    %4715 = vmatprep.subr.mxu0 0.0
    %4716 = vmatpush1.msra.mxu0 0.0
    %4717 = vmatprep.subr.mxu0 0.0
    %4718 = vmatpush1.msra.mxu0 0.0
    %4719 = vmatprep.subr.mxu0 0.0
    %4720 = vmatpush1.msra.mxu0 0.0
    %4721 = vmatprep.subr.mxu0 0.0
    %4722 = vmatpush1.msra.mxu0 0.0
    %4723 = vmatprep.subr.mxu0 0.0
    %4724 = vmatpush1.msra.mxu0 0.0
    %4725 = vmatprep.subr.mxu0 0.0
    %4726 = vmatpush1.msra.mxu0 0.0
    %4727 = vmatprep.subr.mxu0 0.0
    %4728 = vmatpush1.msra.mxu0 0.0
    %4729 = vmatprep.subr.mxu0 0.0
    %4730 = vmatpush1.msra.mxu0 0.0
    %4731 = vmatprep.subr.mxu0 0.0
    %4732 = vmatpush1.msra.mxu0 0.0
    %4733 = vmatprep.subr.mxu0 0.0
    %4734 = vmatpush1.msra.mxu0 0.0
    %4735 = vmatprep.subr.mxu0 0.0
    %4736 = vmatpush1.msra.mxu0 0.0
    %4737 = vmatprep.subr.mxu0 0.0
    %4738 = vmatpush1.msra.mxu0 0.0
    %4739 = vmatprep.subr.mxu0 0.0
    %4740 = vmatpush1.msra.mxu0 0.0
    %4741 = vmatprep.subr.mxu0 0.0
    %4742 = vmatpush1.msra.mxu0 0.0
    %4743 = vmatprep.mubr.f32.mxu0 0.0
    %v4744 = vand.u32 %v1321, 4294901760
    %v4745 = vsub.f32 %v1321, %v4744
    %v4746 = vand.u32 %v4745, 4294901760
    %4747 = vmatmul.mubr.f32.gmra.mrb[0].mxu0 %v4746
    %v4748 = vpop.f32.mrb[0].mxu0
    %v4749 = vadd.f32 %v4555, %v4748
    %v4750 = vpop.f32.mrb[0].mxu0
    %4751 = vmatprep.mubr.f32.mxu0 0.0
    %v4752 = vand.u32 %v1327, 4294901760
    %v4753 = vsub.f32 %v1327, %v4752
    %v4754 = vand.u32 %v4753, 4294901760
    %4755 = vmatmul.mubr.f32.gmra.mrb[0].mxu0 %v4754
    %v4756 = vpop.f32.mrb[0].mxu0
    %v4757 = vadd.f32 %v4562, %v4756
    %v4758 = vpop.f32.mrb[0].mxu0
    %4759 = vmatprep.mubr.f32.mxu0 0.0
    %v4760 = vand.u32 %v1333, 4294901760
    %v4761 = vsub.f32 %v1333, %v4760
    %v4762 = vand.u32 %v4761, 4294901760
    %4763 = vmatmul.mubr.f32.gmra.mrb[0].mxu0 %v4762
    %v4764 = vpop.f32.mrb[0].mxu0
    %v4765 = vadd.f32 %v4569, %v4764
    %v4766 = vpop.f32.mrb[0].mxu0
    %4767 = vmatprep.mubr.f32.mxu0 0.0
    %v4768 = vand.u32 %v1339, 4294901760
    %v4769 = vsub.f32 %v1339, %v4768
    %v4770 = vand.u32 %v4769, 4294901760
    %4771 = vmatmul.mubr.f32.gmra.mrb[0].mxu0 %v4770
    %v4772 = vpop.f32.mrb[0].mxu0
    %v4773 = vadd.f32 %v4576, %v4772
    %v4774 = vpop.f32.mrb[0].mxu0
    %4775 = vmatprep.mubr.f32.mxu0 0.0
    %v4776 = vand.u32 %v1345, 4294901760
    %v4777 = vsub.f32 %v1345, %v4776
    %v4778 = vand.u32 %v4777, 4294901760
    %4779 = vmatmul.mubr.f32.gmra.mrb[0].mxu0 %v4778
    %v4780 = vpop.f32.mrb[0].mxu0
    %v4781 = vadd.f32 %v4583, %v4780
    %v4782 = vpop.f32.mrb[0].mxu0
    %4783 = vmatprep.mubr.f32.mxu0 0.0
    %v4784 = vand.u32 %v1351, 4294901760
    %v4785 = vsub.f32 %v1351, %v4784
    %v4786 = vand.u32 %v4785, 4294901760
    %4787 = vmatmul.mubr.f32.gmra.mrb[0].mxu0 %v4786
    %v4788 = vpop.f32.mrb[0].mxu0
    %v4789 = vadd.f32 %v4590, %v4788
    %v4790 = vpop.f32.mrb[0].mxu0
    %4791 = vmatprep.mubr.f32.mxu0 0.0
    %v4792 = vand.u32 %v1357, 4294901760
    %v4793 = vsub.f32 %v1357, %v4792
    %v4794 = vand.u32 %v4793, 4294901760
    %4795 = vmatmul.mubr.f32.gmra.mrb[0].mxu0 %v4794
    %v4796 = vpop.f32.mrb[0].mxu0
    %v4797 = vadd.f32 %v4597, %v4796
    %v4798 = vpop.f32.mrb[0].mxu0
    %4799 = vmatprep.mubr.f32.mxu0 0.0
    %v4800 = vand.u32 %v1363, 4294901760
    %v4801 = vsub.f32 %v1363, %v4800
    %v4802 = vand.u32 %v4801, 4294901760
    %4803 = vmatmul.mubr.f32.gmra.mrb[0].mxu0 %v4802
    %v4804 = vpop.f32.mrb[0].mxu0
    %v4805 = vadd.f32 %v4604, %v4804
    %v4806 = vpop.f32.mrb[0].mxu0
    %4807 = vmatprep.mubr.f32.mxu0 0.0
    %v4808 = vand.u32 %v1369, 4294901760
    %v4809 = vsub.f32 %v1369, %v4808
    %v4810 = vand.u32 %v4809, 4294901760
    %4811 = vmatmul.mubr.f32.gmra.mrb[0].mxu0 %v4810
    %v4812 = vpop.f32.mrb[0].mxu0
    %v4813 = vadd.f32 %v4611, %v4812
    %v4814 = vpop.f32.mrb[0].mxu0
    %4815 = vmatprep.mubr.f32.mxu0 0.0
    %v4816 = vand.u32 %v1375, 4294901760
    %v4817 = vsub.f32 %v1375, %v4816
    %v4818 = vand.u32 %v4817, 4294901760
    %4819 = vmatmul.mubr.f32.gmra.mrb[0].mxu0 %v4818
    %v4820 = vpop.f32.mrb[0].mxu0
    %v4821 = vadd.f32 %v4618, %v4820
    %v4822 = vpop.f32.mrb[0].mxu0
    %4823 = vmatprep.mubr.f32.mxu0 0.0
    %v4824 = vand.u32 %v1381, 4294901760
    %v4825 = vsub.f32 %v1381, %v4824
    %v4826 = vand.u32 %v4825, 4294901760
    %4827 = vmatmul.mubr.f32.gmra.mrb[0].mxu0 %v4826
    %v4828 = vpop.f32.mrb[0].mxu0
    %v4829 = vadd.f32 %v4625, %v4828
    %v4830 = vpop.f32.mrb[0].mxu0
    %4831 = vmatprep.mubr.f32.mxu0 0.0
    %v4832 = vand.u32 %v1387, 4294901760
    %v4833 = vsub.f32 %v1387, %v4832
    %v4834 = vand.u32 %v4833, 4294901760
    %4835 = vmatmul.mubr.f32.gmra.mrb[0].mxu0 %v4834
    %v4836 = vpop.f32.mrb[0].mxu0
    %v4837 = vadd.f32 %v4632, %v4836
    %v4838 = vpop.f32.mrb[0].mxu0
    %4839 = vmatprep.mubr.f32.mxu0 0.0
    %v4840 = vand.u32 %v1393, 4294901760
    %v4841 = vsub.f32 %v1393, %v4840
    %v4842 = vand.u32 %v4841, 4294901760
    %4843 = vmatmul.mubr.f32.gmra.mrb[0].mxu0 %v4842
    %v4844 = vpop.f32.mrb[0].mxu0
    %v4845 = vadd.f32 %v4639, %v4844
    %v4846 = vpop.f32.mrb[0].mxu0
    %4847 = vmatprep.mubr.f32.mxu0 0.0
    %v4848 = vand.u32 %v1399, 4294901760
    %v4849 = vsub.f32 %v1399, %v4848
    %v4850 = vand.u32 %v4849, 4294901760
    %4851 = vmatmul.mubr.f32.gmra.mrb[0].mxu0 %v4850
    %v4852 = vpop.f32.mrb[0].mxu0
    %v4853 = vadd.f32 %v4646, %v4852
    %v4854 = vpop.f32.mrb[0].mxu0
    %4855 = vmatprep.mubr.f32.mxu0 0.0
    %v4856 = vand.u32 %v1405, 4294901760
    %v4857 = vsub.f32 %v1405, %v4856
    %v4858 = vand.u32 %v4857, 4294901760
    %4859 = vmatmul.mubr.f32.gmra.mrb[0].mxu0 %v4858
    %v4860 = vpop.f32.mrb[0].mxu0
    %v4861 = vadd.f32 %v4653, %v4860
    %v4862 = vpop.f32.mrb[0].mxu0
    %4863 = vmatprep.mubr.f32.mxu0 0.0
    %v4864 = vand.u32 %v1411, 4294901760
    %v4865 = vsub.f32 %v1411, %v4864
    %v4866 = vand.u32 %v4865, 4294901760
    %4867 = vmatmul.mubr.f32.gmra.mrb[0].mxu0 %v4866
    %v4868 = vpop.f32.mrb[0].mxu0
    %v4869 = vadd.f32 %v4660, %v4868
    %v4870 = vpop.f32.mrb[0].mxu0
    %4871 = vdwg.mxu0
    %4872 = vmatprep.subr.mxu0 0.0
    %v4873 = vand.u32 %v2654, 4294901760
    %v4874 = vsub.f32 %v2654, %v4873
    %v4875 = vand.u32 %v4874, 4294901760
    %4876 = vmatpush1.msra.mxu0 %v4875
    %4877 = vmatprep.subr.mxu0 0.0
    %v4878 = vand.u32 %v2655, 4294901760
    %v4879 = vsub.f32 %v2655, %v4878
    %v4880 = vand.u32 %v4879, 4294901760
    %4881 = vmatpush1.msra.mxu0 %v4880
    %4882 = vmatprep.subr.mxu0 0.0
    %v4883 = vand.u32 %v2656, 4294901760
    %v4884 = vsub.f32 %v2656, %v4883
    %v4885 = vand.u32 %v4884, 4294901760
    %4886 = vmatpush1.msra.mxu0 %v4885
    %4887 = vmatprep.subr.mxu0 0.0
    %v4888 = vand.u32 %v2657, 4294901760
    %v4889 = vsub.f32 %v2657, %v4888
    %v4890 = vand.u32 %v4889, 4294901760
    %4891 = vmatpush1.msra.mxu0 %v4890
    %4892 = vmatprep.subr.mxu0 0.0
    %v4893 = vand.u32 %v2658, 4294901760
    %v4894 = vsub.f32 %v2658, %v4893
    %v4895 = vand.u32 %v4894, 4294901760
    %4896 = vmatpush1.msra.mxu0 %v4895
    %4897 = vmatprep.subr.mxu0 0.0
    %v4898 = vand.u32 %v2659, 4294901760
    %v4899 = vsub.f32 %v2659, %v4898
    %v4900 = vand.u32 %v4899, 4294901760
    %4901 = vmatpush1.msra.mxu0 %v4900
    %4902 = vmatprep.subr.mxu0 0.0
    %v4903 = vand.u32 %v2660, 4294901760
    %v4904 = vsub.f32 %v2660, %v4903
    %v4905 = vand.u32 %v4904, 4294901760
    %4906 = vmatpush1.msra.mxu0 %v4905
    %4907 = vmatprep.subr.mxu0 0.0
    %v4908 = vand.u32 %v2661, 4294901760
    %v4909 = vsub.f32 %v2661, %v4908
    %v4910 = vand.u32 %v4909, 4294901760
    %4911 = vmatpush1.msra.mxu0 %v4910
    %4912 = vmatprep.subr.mxu0 0.0
    %v4913 = vand.u32 %v2662, 4294901760
    %v4914 = vsub.f32 %v2662, %v4913
    %v4915 = vand.u32 %v4914, 4294901760
    %4916 = vmatpush1.msra.mxu0 %v4915
    %4917 = vmatprep.subr.mxu0 0.0
    %v4918 = vand.u32 %v2663, 4294901760
    %v4919 = vsub.f32 %v2663, %v4918
    %v4920 = vand.u32 %v4919, 4294901760
    %4921 = vmatpush1.msra.mxu0 %v4920
    %4922 = vmatprep.subr.mxu0 0.0
    %v4923 = vand.u32 %v2664, 4294901760
    %v4924 = vsub.f32 %v2664, %v4923
    %v4925 = vand.u32 %v4924, 4294901760
    %4926 = vmatpush1.msra.mxu0 %v4925
    %4927 = vmatprep.subr.mxu0 0.0
    %v4928 = vand.u32 %v2665, 4294901760
    %v4929 = vsub.f32 %v2665, %v4928
    %v4930 = vand.u32 %v4929, 4294901760
    %4931 = vmatpush1.msra.mxu0 %v4930
    %4932 = vmatprep.subr.mxu0 0.0
    %v4933 = vand.u32 %v2666, 4294901760
    %v4934 = vsub.f32 %v2666, %v4933
    %v4935 = vand.u32 %v4934, 4294901760
    %4936 = vmatpush1.msra.mxu0 %v4935
    %4937 = vmatprep.subr.mxu0 0.0
    %v4938 = vand.u32 %v2667, 4294901760
    %v4939 = vsub.f32 %v2667, %v4938
    %v4940 = vand.u32 %v4939, 4294901760
    %4941 = vmatpush1.msra.mxu0 %v4940
    %4942 = vmatprep.subr.mxu0 0.0
    %v4943 = vand.u32 %v2668, 4294901760
    %v4944 = vsub.f32 %v2668, %v4943
    %v4945 = vand.u32 %v4944, 4294901760
    %4946 = vmatpush1.msra.mxu0 %v4945
    %4947 = vmatprep.subr.mxu0 0.0
    %v4948 = vand.u32 %v2669, 4294901760
    %v4949 = vsub.f32 %v2669, %v4948
    %v4950 = vand.u32 %v4949, 4294901760
    %4951 = vmatpush1.msra.mxu0 %v4950
    %4952 = vmatprep.subr.mxu0 0.0
    %4953 = vmatpush1.msra.mxu0 0.0
    %4954 = vmatprep.subr.mxu0 0.0
    %4955 = vmatpush1.msra.mxu0 0.0
    %4956 = vmatprep.subr.mxu0 0.0
    %4957 = vmatpush1.msra.mxu0 0.0
    %4958 = vmatprep.subr.mxu0 0.0
    %4959 = vmatpush1.msra.mxu0 0.0
    %4960 = vmatprep.subr.mxu0 0.0
    %4961 = vmatpush1.msra.mxu0 0.0
    %4962 = vmatprep.subr.mxu0 0.0
    %4963 = vmatpush1.msra.mxu0 0.0
    %4964 = vmatprep.subr.mxu0 0.0
    %4965 = vmatpush1.msra.mxu0 0.0
    %4966 = vmatprep.subr.mxu0 0.0
    %4967 = vmatpush1.msra.mxu0 0.0
    %4968 = vmatprep.subr.mxu0 0.0
    %4969 = vmatpush1.msra.mxu0 0.0
    %4970 = vmatprep.subr.mxu0 0.0
    %4971 = vmatpush1.msra.mxu0 0.0
    %4972 = vmatprep.subr.mxu0 0.0
    %4973 = vmatpush1.msra.mxu0 0.0
    %4974 = vmatprep.subr.mxu0 0.0
    %4975 = vmatpush1.msra.mxu0 0.0
    %4976 = vmatprep.subr.mxu0 0.0
    %4977 = vmatpush1.msra.mxu0 0.0
    %4978 = vmatprep.subr.mxu0 0.0
    %4979 = vmatpush1.msra.mxu0 0.0
    %4980 = vmatprep.subr.mxu0 0.0
    %4981 = vmatpush1.msra.mxu0 0.0
    %4982 = vmatprep.subr.mxu0 0.0
    %4983 = vmatpush1.msra.mxu0 0.0
    %4984 = vmatprep.mubr.f32.mxu0 0.0
    %v4985 = vand.u32 %v1321, 4294901760
    %4986 = vmatmul.mubr.f32.gmra.mrb[0].mxu0 %v4985
    %v4987 = vpop.f32.mrb[0].mxu0
    %v4988 = vadd.f32 %v4749, %v4987
    %v4989 = vpop.f32.mrb[0].mxu0
    %4990 = vmatprep.mubr.f32.mxu0 0.0
    %v4991 = vand.u32 %v1327, 4294901760
    %4992 = vmatmul.mubr.f32.gmra.mrb[0].mxu0 %v4991
    %v4993 = vpop.f32.mrb[0].mxu0
    %v4994 = vadd.f32 %v4757, %v4993
    %v4995 = vpop.f32.mrb[0].mxu0
    %4996 = vmatprep.mubr.f32.mxu0 0.0
    %v4997 = vand.u32 %v1333, 4294901760
    %4998 = vmatmul.mubr.f32.gmra.mrb[0].mxu0 %v4997
    %v4999 = vpop.f32.mrb[0].mxu0
    %v5000 = vadd.f32 %v4765, %v4999
    %v5001 = vpop.f32.mrb[0].mxu0
    %5002 = vmatprep.mubr.f32.mxu0 0.0
    %v5003 = vand.u32 %v1339, 4294901760
    %5004 = vmatmul.mubr.f32.gmra.mrb[0].mxu0 %v5003
    %v5005 = vpop.f32.mrb[0].mxu0
    %v5006 = vadd.f32 %v4773, %v5005
    %v5007 = vpop.f32.mrb[0].mxu0
    %5008 = vmatprep.mubr.f32.mxu0 0.0
    %v5009 = vand.u32 %v1345, 4294901760
    %5010 = vmatmul.mubr.f32.gmra.mrb[0].mxu0 %v5009
    %v5011 = vpop.f32.mrb[0].mxu0
    %v5012 = vadd.f32 %v4781, %v5011
    %v5013 = vpop.f32.mrb[0].mxu0
    %5014 = vmatprep.mubr.f32.mxu0 0.0
    %v5015 = vand.u32 %v1351, 4294901760
    %5016 = vmatmul.mubr.f32.gmra.mrb[0].mxu0 %v5015
    %v5017 = vpop.f32.mrb[0].mxu0
    %v5018 = vadd.f32 %v4789, %v5017
    %v5019 = vpop.f32.mrb[0].mxu0
    %5020 = vmatprep.mubr.f32.mxu0 0.0
    %v5021 = vand.u32 %v1357, 4294901760
    %5022 = vmatmul.mubr.f32.gmra.mrb[0].mxu0 %v5021
    %v5023 = vpop.f32.mrb[0].mxu0
    %v5024 = vadd.f32 %v4797, %v5023
    %v5025 = vpop.f32.mrb[0].mxu0
    %5026 = vmatprep.mubr.f32.mxu0 0.0
    %v5027 = vand.u32 %v1363, 4294901760
    %5028 = vmatmul.mubr.f32.gmra.mrb[0].mxu0 %v5027
    %v5029 = vpop.f32.mrb[0].mxu0
    %v5030 = vadd.f32 %v4805, %v5029
    %v5031 = vpop.f32.mrb[0].mxu0
    %5032 = vmatprep.mubr.f32.mxu0 0.0
    %v5033 = vand.u32 %v1369, 4294901760
    %5034 = vmatmul.mubr.f32.gmra.mrb[0].mxu0 %v5033
    %v5035 = vpop.f32.mrb[0].mxu0
    %v5036 = vadd.f32 %v4813, %v5035
    %v5037 = vpop.f32.mrb[0].mxu0
    %5038 = vmatprep.mubr.f32.mxu0 0.0
    %v5039 = vand.u32 %v1375, 4294901760
    %5040 = vmatmul.mubr.f32.gmra.mrb[0].mxu0 %v5039
    %v5041 = vpop.f32.mrb[0].mxu0
    %v5042 = vadd.f32 %v4821, %v5041
    %v5043 = vpop.f32.mrb[0].mxu0
    %5044 = vmatprep.mubr.f32.mxu0 0.0
    %v5045 = vand.u32 %v1381, 4294901760
    %5046 = vmatmul.mubr.f32.gmra.mrb[0].mxu0 %v5045
    %v5047 = vpop.f32.mrb[0].mxu0
    %v5048 = vadd.f32 %v4829, %v5047
    %v5049 = vpop.f32.mrb[0].mxu0
    %5050 = vmatprep.mubr.f32.mxu0 0.0
    %v5051 = vand.u32 %v1387, 4294901760
    %5052 = vmatmul.mubr.f32.gmra.mrb[0].mxu0 %v5051
    %v5053 = vpop.f32.mrb[0].mxu0
    %v5054 = vadd.f32 %v4837, %v5053
    %v5055 = vpop.f32.mrb[0].mxu0
    %5056 = vmatprep.mubr.f32.mxu0 0.0
    %v5057 = vand.u32 %v1393, 4294901760
    %5058 = vmatmul.mubr.f32.gmra.mrb[0].mxu0 %v5057
    %v5059 = vpop.f32.mrb[0].mxu0
    %v5060 = vadd.f32 %v4845, %v5059
    %v5061 = vpop.f32.mrb[0].mxu0
    %5062 = vmatprep.mubr.f32.mxu0 0.0
    %v5063 = vand.u32 %v1399, 4294901760
    %5064 = vmatmul.mubr.f32.gmra.mrb[0].mxu0 %v5063
    %v5065 = vpop.f32.mrb[0].mxu0
    %v5066 = vadd.f32 %v4853, %v5065
    %v5067 = vpop.f32.mrb[0].mxu0
    %5068 = vmatprep.mubr.f32.mxu0 0.0
    %v5069 = vand.u32 %v1405, 4294901760
    %5070 = vmatmul.mubr.f32.gmra.mrb[0].mxu0 %v5069
    %v5071 = vpop.f32.mrb[0].mxu0
    %v5072 = vadd.f32 %v4861, %v5071
    %v5073 = vpop.f32.mrb[0].mxu0
    %5074 = vmatprep.mubr.f32.mxu0 0.0
    %v5075 = vand.u32 %v1411, 4294901760
    %5076 = vmatmul.mubr.f32.gmra.mrb[0].mxu0 %v5075
    %v5077 = vpop.f32.mrb[0].mxu0
    %v5078 = vadd.f32 %v4869, %v5077
    %v5079 = vpop.f32.mrb[0].mxu0
    %5080 = vdwg.mxu0
    %5081 = vmatprep.subr.mxu0 0.0
    %v5082 = vand.u32 %v2654, 4294901760
    %5083 = vmatpush1.msra.mxu0 %v5082
    %5084 = vmatprep.subr.mxu0 0.0
    %v5085 = vand.u32 %v2655, 4294901760
    %5086 = vmatpush1.msra.mxu0 %v5085
    %5087 = vmatprep.subr.mxu0 0.0
    %v5088 = vand.u32 %v2656, 4294901760
    %5089 = vmatpush1.msra.mxu0 %v5088
    %5090 = vmatprep.subr.mxu0 0.0
    %v5091 = vand.u32 %v2657, 4294901760
    %5092 = vmatpush1.msra.mxu0 %v5091
    %5093 = vmatprep.subr.mxu0 0.0
    %v5094 = vand.u32 %v2658, 4294901760
    %5095 = vmatpush1.msra.mxu0 %v5094
    %5096 = vmatprep.subr.mxu0 0.0
    %v5097 = vand.u32 %v2659, 4294901760
    %5098 = vmatpush1.msra.mxu0 %v5097
    %5099 = vmatprep.subr.mxu0 0.0
    %v5100 = vand.u32 %v2660, 4294901760
    %5101 = vmatpush1.msra.mxu0 %v5100
    %5102 = vmatprep.subr.mxu0 0.0
    %v5103 = vand.u32 %v2661, 4294901760
    %5104 = vmatpush1.msra.mxu0 %v5103
    %5105 = vmatprep.subr.mxu0 0.0
    %v5106 = vand.u32 %v2662, 4294901760
    %5107 = vmatpush1.msra.mxu0 %v5106
    %5108 = vmatprep.subr.mxu0 0.0
    %v5109 = vand.u32 %v2663, 4294901760
    %5110 = vmatpush1.msra.mxu0 %v5109
    %5111 = vmatprep.subr.mxu0 0.0
    %v5112 = vand.u32 %v2664, 4294901760
    %5113 = vmatpush1.msra.mxu0 %v5112
    %5114 = vmatprep.subr.mxu0 0.0
    %v5115 = vand.u32 %v2665, 4294901760
    %5116 = vmatpush1.msra.mxu0 %v5115
    %5117 = vmatprep.subr.mxu0 0.0
    %v5118 = vand.u32 %v2666, 4294901760
    %5119 = vmatpush1.msra.mxu0 %v5118
    %5120 = vmatprep.subr.mxu0 0.0
    %v5121 = vand.u32 %v2667, 4294901760
    %5122 = vmatpush1.msra.mxu0 %v5121
    %5123 = vmatprep.subr.mxu0 0.0
    %v5124 = vand.u32 %v2668, 4294901760
    %5125 = vmatpush1.msra.mxu0 %v5124
    %5126 = vmatprep.subr.mxu0 0.0
    %v5127 = vand.u32 %v2669, 4294901760
    %5128 = vmatpush1.msra.mxu0 %v5127
    %5129 = vmatprep.subr.mxu0 0.0
    %5130 = vmatpush1.msra.mxu0 0.0
    %5131 = vmatprep.subr.mxu0 0.0
    %5132 = vmatpush1.msra.mxu0 0.0
    %5133 = vmatprep.subr.mxu0 0.0
    %5134 = vmatpush1.msra.mxu0 0.0
    %5135 = vmatprep.subr.mxu0 0.0
    %5136 = vmatpush1.msra.mxu0 0.0
    %5137 = vmatprep.subr.mxu0 0.0
    %5138 = vmatpush1.msra.mxu0 0.0
    %5139 = vmatprep.subr.mxu0 0.0
    %5140 = vmatpush1.msra.mxu0 0.0
    %5141 = vmatprep.subr.mxu0 0.0
    %5142 = vmatpush1.msra.mxu0 0.0
    %5143 = vmatprep.subr.mxu0 0.0
    %5144 = vmatpush1.msra.mxu0 0.0
    %5145 = vmatprep.subr.mxu0 0.0
    %5146 = vmatpush1.msra.mxu0 0.0
    %5147 = vmatprep.subr.mxu0 0.0
    %5148 = vmatpush1.msra.mxu0 0.0
    %5149 = vmatprep.subr.mxu0 0.0
    %5150 = vmatpush1.msra.mxu0 0.0
    %5151 = vmatprep.subr.mxu0 0.0
    %5152 = vmatpush1.msra.mxu0 0.0
    %5153 = vmatprep.subr.mxu0 0.0
    %5154 = vmatpush1.msra.mxu0 0.0
    %5155 = vmatprep.subr.mxu0 0.0
    %5156 = vmatpush1.msra.mxu0 0.0
    %5157 = vmatprep.subr.mxu0 0.0
    %5158 = vmatpush1.msra.mxu0 0.0
    %5159 = vmatprep.subr.mxu0 0.0
    %5160 = vmatpush1.msra.mxu0 0.0
    %5161 = vmatprep.mubr.f32.mxu0 0.0
    %v5162 = vand.u32 %v1321, 4294901760
    %5163 = vmatmul.mubr.f32.gmra.mrb[0].mxu0 %v5162
    %v5164 = vpop.f32.mrb[0].mxu0
    %v5165 = vadd.f32 %v4988, %v5164
    %v5166 = vpop.f32.mrb[0].mxu0
    %5167 = vmatprep.mubr.f32.mxu0 0.0
    %v5168 = vand.u32 %v1327, 4294901760
    %5169 = vmatmul.mubr.f32.gmra.mrb[0].mxu0 %v5168
    %v5170 = vpop.f32.mrb[0].mxu0
    %v5171 = vadd.f32 %v4994, %v5170
    %v5172 = vpop.f32.mrb[0].mxu0
    %5173 = vmatprep.mubr.f32.mxu0 0.0
    %v5174 = vand.u32 %v1333, 4294901760
    %5175 = vmatmul.mubr.f32.gmra.mrb[0].mxu0 %v5174
    %v5176 = vpop.f32.mrb[0].mxu0
    %v5177 = vadd.f32 %v5000, %v5176
    %v5178 = vpop.f32.mrb[0].mxu0
    %5179 = vmatprep.mubr.f32.mxu0 0.0
    %v5180 = vand.u32 %v1339, 4294901760
    %5181 = vmatmul.mubr.f32.gmra.mrb[0].mxu0 %v5180
    %v5182 = vpop.f32.mrb[0].mxu0
    %v5183 = vadd.f32 %v5006, %v5182
    %v5184 = vpop.f32.mrb[0].mxu0
    %5185 = vmatprep.mubr.f32.mxu0 0.0
    %v5186 = vand.u32 %v1345, 4294901760
    %5187 = vmatmul.mubr.f32.gmra.mrb[0].mxu0 %v5186
    %v5188 = vpop.f32.mrb[0].mxu0
    %v5189 = vadd.f32 %v5012, %v5188
    %v5190 = vpop.f32.mrb[0].mxu0
    %5191 = vmatprep.mubr.f32.mxu0 0.0
    %v5192 = vand.u32 %v1351, 4294901760
    %5193 = vmatmul.mubr.f32.gmra.mrb[0].mxu0 %v5192
    %v5194 = vpop.f32.mrb[0].mxu0
    %v5195 = vadd.f32 %v5018, %v5194
    %v5196 = vpop.f32.mrb[0].mxu0
    %5197 = vmatprep.mubr.f32.mxu0 0.0
    %v5198 = vand.u32 %v1357, 4294901760
    %5199 = vmatmul.mubr.f32.gmra.mrb[0].mxu0 %v5198
    %v5200 = vpop.f32.mrb[0].mxu0
    %v5201 = vadd.f32 %v5024, %v5200
    %v5202 = vpop.f32.mrb[0].mxu0
    %5203 = vmatprep.mubr.f32.mxu0 0.0
    %v5204 = vand.u32 %v1363, 4294901760
    %5205 = vmatmul.mubr.f32.gmra.mrb[0].mxu0 %v5204
    %v5206 = vpop.f32.mrb[0].mxu0
    %v5207 = vadd.f32 %v5030, %v5206
    %v5208 = vpop.f32.mrb[0].mxu0
    %5209 = vmatprep.mubr.f32.mxu0 0.0
    %v5210 = vand.u32 %v1369, 4294901760
    %5211 = vmatmul.mubr.f32.gmra.mrb[0].mxu0 %v5210
    %v5212 = vpop.f32.mrb[0].mxu0
    %v5213 = vadd.f32 %v5036, %v5212
    %v5214 = vpop.f32.mrb[0].mxu0
    %5215 = vmatprep.mubr.f32.mxu0 0.0
    %v5216 = vand.u32 %v1375, 4294901760
    %5217 = vmatmul.mubr.f32.gmra.mrb[0].mxu0 %v5216
    %v5218 = vpop.f32.mrb[0].mxu0
    %v5219 = vadd.f32 %v5042, %v5218
    %v5220 = vpop.f32.mrb[0].mxu0
    %5221 = vmatprep.mubr.f32.mxu0 0.0
    %v5222 = vand.u32 %v1381, 4294901760
    %5223 = vmatmul.mubr.f32.gmra.mrb[0].mxu0 %v5222
    %v5224 = vpop.f32.mrb[0].mxu0
    %v5225 = vadd.f32 %v5048, %v5224
    %v5226 = vpop.f32.mrb[0].mxu0
    %5227 = vmatprep.mubr.f32.mxu0 0.0
    %v5228 = vand.u32 %v1387, 4294901760
    %5229 = vmatmul.mubr.f32.gmra.mrb[0].mxu0 %v5228
    %v5230 = vpop.f32.mrb[0].mxu0
    %v5231 = vadd.f32 %v5054, %v5230
    %v5232 = vpop.f32.mrb[0].mxu0
    %5233 = vmatprep.mubr.f32.mxu0 0.0
    %v5234 = vand.u32 %v1393, 4294901760
    %5235 = vmatmul.mubr.f32.gmra.mrb[0].mxu0 %v5234
    %v5236 = vpop.f32.mrb[0].mxu0
    %v5237 = vadd.f32 %v5060, %v5236
    %v5238 = vpop.f32.mrb[0].mxu0
    %5239 = vmatprep.mubr.f32.mxu0 0.0
    %v5240 = vand.u32 %v1399, 4294901760
    %5241 = vmatmul.mubr.f32.gmra.mrb[0].mxu0 %v5240
    %v5242 = vpop.f32.mrb[0].mxu0
    %v5243 = vadd.f32 %v5066, %v5242
    %v5244 = vpop.f32.mrb[0].mxu0
    %5245 = vmatprep.mubr.f32.mxu0 0.0
    %v5246 = vand.u32 %v1405, 4294901760
    %5247 = vmatmul.mubr.f32.gmra.mrb[0].mxu0 %v5246
    %v5248 = vpop.f32.mrb[0].mxu0
    %v5249 = vadd.f32 %v5072, %v5248
    %v5250 = vpop.f32.mrb[0].mxu0
    %5251 = vmatprep.mubr.f32.mxu0 0.0
    %v5252 = vand.u32 %v1411, 4294901760
    %5253 = vmatmul.mubr.f32.gmra.mrb[0].mxu0 %v5252
    %v5254 = vpop.f32.mrb[0].mxu0
    %v5255 = vadd.f32 %v5078, %v5254
    %v5256 = vpop.f32.mrb[0].mxu0
    %5257 = vdwg.mxu0
    %v5258 = vld [vmem:[%s6] sm:$0x1]
    %v5260 = vlaneseq
    %v5261 = vshrl.u32 %v5260, 7
    %v5262 = vsub.s32 0, %v5261
    %v5263 = vrot.slane %v5258, %v5262
    %v5265 = vadd.f32 %v5165, %v5263
    %v5266 = vadd.f32 %v5171, %v5263
    %v5267 = vadd.f32 %v5177, %v5263
    %v5268 = vadd.f32 %v5183, %v5263
    %v5269 = vadd.f32 %v5189, %v5263
    %v5270 = vadd.f32 %v5195, %v5263
    %v5271 = vadd.f32 %v5201, %v5263
    %v5272 = vadd.f32 %v5207, %v5263
    %v5273 = vadd.f32 %v5213, %v5263
    %v5274 = vadd.f32 %v5219, %v5263
    %v5275 = vadd.f32 %v5225, %v5263
    %v5276 = vadd.f32 %v5231, %v5263
    %v5277 = vadd.f32 %v5237, %v5263
    %v5278 = vadd.f32 %v5243, %v5263
    %v5279 = vadd.f32 %v5249, %v5263
    %v5280 = vadd.f32 %v5255, %v5263
    %v5281 = vmax.f32 %v5265, 0.0
    %v5282 = vmax.f32 %v5266, 0.0
    %v5283 = vmax.f32 %v5267, 0.0
    %v5284 = vmax.f32 %v5268, 0.0
    %v5285 = vmax.f32 %v5269, 0.0
    %v5286 = vmax.f32 %v5270, 0.0
    %v5287 = vmax.f32 %v5271, 0.0
    %v5288 = vmax.f32 %v5272, 0.0
    %v5289 = vmax.f32 %v5273, 0.0
    %v5290 = vmax.f32 %v5274, 0.0
    %v5291 = vmax.f32 %v5275, 0.0
    %v5292 = vmax.f32 %v5276, 0.0
    %v5293 = vmax.f32 %v5277, 0.0
    %v5294 = vmax.f32 %v5278, 0.0
    %v5295 = vmax.f32 %v5279, 0.0
    %v5296 = vmax.f32 %v5280, 0.0
    %v5297 = vld [vmem:[%s8] sm:$0x1]
    %v5299 = vlaneseq
    %v5300 = vshrl.u32 %v5299, 7
    %v5301 = vsub.s32 0, %v5300
    %v5302 = vrot.slane %v5297, %v5301
    %v5304 = vmul.f32 %v5281, %v5302
    %v5305 = vmul.f32 %v5282, %v5302
    %v5306 = vmul.f32 %v5283, %v5302
    %v5307 = vmul.f32 %v5284, %v5302
    %v5308 = vmul.f32 %v5285, %v5302
    %v5309 = vmul.f32 %v5286, %v5302
    %v5310 = vmul.f32 %v5287, %v5302
    %v5311 = vmul.f32 %v5288, %v5302
    %v5312 = vmul.f32 %v5289, %v5302
    %v5313 = vmul.f32 %v5290, %v5302
    %v5314 = vmul.f32 %v5291, %v5302
    %v5315 = vmul.f32 %v5292, %v5302
    %v5316 = vmul.f32 %v5293, %v5302
    %v5317 = vmul.f32 %v5294, %v5302
    %v5318 = vmul.f32 %v5295, %v5302
    %v5319 = vmul.f32 %v5296, %v5302
    %vm5320 = vcmask 523264
    %v5321 = vsel %vm5320, %v5304, 0.0
    %5322 = vadd.xlane.f32.xlu0 %v5321
    %v5323 = vpop.xlane.xlu0 %5322
    %v5324 = vsel %vm5320, %v5305, 0.0
    %5325 = vadd.xlane.f32.xlu0 %v5324
    %v5326 = vpop.xlane.xlu0 %5325
    %v5327 = vsel %vm5320, %v5306, 0.0
    %5328 = vadd.xlane.f32.xlu0 %v5327
    %v5329 = vpop.xlane.xlu0 %5328
    %v5330 = vsel %vm5320, %v5307, 0.0
    %5331 = vadd.xlane.f32.xlu0 %v5330
    %v5332 = vpop.xlane.xlu0 %5331
    %v5333 = vsel %vm5320, %v5308, 0.0
    %5334 = vadd.xlane.f32.xlu0 %v5333
    %v5335 = vpop.xlane.xlu0 %5334
    %v5336 = vsel %vm5320, %v5309, 0.0
    %5337 = vadd.xlane.f32.xlu0 %v5336
    %v5338 = vpop.xlane.xlu0 %5337
    %v5339 = vsel %vm5320, %v5310, 0.0
    %5340 = vadd.xlane.f32.xlu0 %v5339
    %v5341 = vpop.xlane.xlu0 %5340
    %v5342 = vsel %vm5320, %v5311, 0.0
    %5343 = vadd.xlane.f32.xlu0 %v5342
    %v5344 = vpop.xlane.xlu0 %5343
    %v5345 = vsel %vm5320, %v5312, 0.0
    %5346 = vadd.xlane.f32.xlu0 %v5345
    %v5347 = vpop.xlane.xlu0 %5346
    %v5348 = vsel %vm5320, %v5313, 0.0
    %5349 = vadd.xlane.f32.xlu0 %v5348
    %v5350 = vpop.xlane.xlu0 %5349
    %v5351 = vsel %vm5320, %v5314, 0.0
    %5352 = vadd.xlane.f32.xlu0 %v5351
    %v5353 = vpop.xlane.xlu0 %5352
    %v5354 = vsel %vm5320, %v5315, 0.0
    %5355 = vadd.xlane.f32.xlu0 %v5354
    %v5356 = vpop.xlane.xlu0 %5355
    %v5357 = vsel %vm5320, %v5316, 0.0
    %5358 = vadd.xlane.f32.xlu0 %v5357
    %v5359 = vpop.xlane.xlu0 %5358
    %v5360 = vsel %vm5320, %v5317, 0.0
    %5361 = vadd.xlane.f32.xlu0 %v5360
    %v5362 = vpop.xlane.xlu0 %5361
    %v5363 = vsel %vm5320, %v5318, 0.0
    %5364 = vadd.xlane.f32.xlu0 %v5363
    %v5365 = vpop.xlane.xlu0 %5364
    %v5366 = vsel %vm5320, %v5319, 0.0
    %5367 = vadd.xlane.f32.xlu0 %v5366
    %v5368 = vpop.xlane.xlu0 %5367
    %v5369 = vadd.f32 %v2623, %v5323
    %v5370 = vadd.f32 %v2625, %v5326
    %v5371 = vadd.f32 %v2627, %v5329
    %v5372 = vadd.f32 %v2629, %v5332
    %v5373 = vadd.f32 %v2631, %v5335
    %v5374 = vadd.f32 %v2633, %v5338
    %v5375 = vadd.f32 %v2635, %v5341
    %v5376 = vadd.f32 %v2637, %v5344
    %v5377 = vadd.f32 %v2639, %v5347
    %v5378 = vadd.f32 %v2641, %v5350
    %v5379 = vadd.f32 %v2643, %v5353
    %v5380 = vadd.f32 %v2645, %v5356
    %v5381 = vadd.f32 %v2647, %v5359
    %v5382 = vadd.f32 %v2649, %v5362
    %v5383 = vadd.f32 %v2651, %v5365
    %v5384 = vadd.f32 %v2653, %v5368
    %v5401 = vlaneseq
    %v5402 = vshrl.u32 %v5401, 7
    %v5403 = vsub.s32 %v50, %v5402
    %v5404 = vrot.slane %v5369, %v5403
    %v5405 = vadd.s32 %v50, 4294967288
    %v5406 = vlaneseq
    %v5407 = vshrl.u32 %v5406, 7
    %v5408 = vsub.s32 %v5405, %v5407
    %v5409 = vrot.slane %v5370, %v5408
    %vm5410 = vcmask 130112
    %v5411 = vsel %vm5410, %v5409, %v5404
    %v5412 = vadd.s32 %v50, 4294967280
    %v5413 = vlaneseq
    %v5414 = vshrl.u32 %v5413, 7
    %v5415 = vsub.s32 %v5412, %v5414
    %v5416 = vrot.slane %v5371, %v5415
    %vm5417 = vcmask 195712
    %v5418 = vsel %vm5417, %v5416, %v5411
    %v5419 = vadd.s32 %v50, 4294967272
    %v5420 = vlaneseq
    %v5421 = vshrl.u32 %v5420, 7
    %v5422 = vsub.s32 %v5419, %v5421
    %v5423 = vrot.slane %v5372, %v5422
    %vm5424 = vcmask 261312
    %v5425 = vsel %vm5424, %v5423, %v5418
    %v5426 = vadd.s32 %v50, 4294967264
    %v5427 = vlaneseq
    %v5428 = vshrl.u32 %v5427, 7
    %v5429 = vsub.s32 %v5426, %v5428
    %v5430 = vrot.slane %v5373, %v5429
    %vm5431 = vcmask 326912
    %v5432 = vsel %vm5431, %v5430, %v5425
    %v5433 = vadd.s32 %v50, 4294967256
    %v5434 = vlaneseq
    %v5435 = vshrl.u32 %v5434, 7
    %v5436 = vsub.s32 %v5433, %v5435
    %v5437 = vrot.slane %v5374, %v5436
    %vm5438 = vcmask 392512
    %v5439 = vsel %vm5438, %v5437, %v5432
    %v5440 = vadd.s32 %v50, 4294967248
    %v5441 = vlaneseq
    %v5442 = vshrl.u32 %v5441, 7
    %v5443 = vsub.s32 %v5440, %v5442
    %v5444 = vrot.slane %v5375, %v5443
    %vm5445 = vcmask 458112
    %v5446 = vsel %vm5445, %v5444, %v5439
    %v5447 = vadd.s32 %v50, 4294967240
    %v5448 = vlaneseq
    %v5449 = vshrl.u32 %v5448, 7
    %v5450 = vsub.s32 %v5447, %v5449
    %v5451 = vrot.slane %v5376, %v5450
    %vm5452 = vcmask 523712
    %v5453 = vsel %vm5452, %v5451, %v5446
    %v5454 = vadd.s32 %v50, 4294967232
    %v5455 = vlaneseq
    %v5456 = vshrl.u32 %v5455, 7
    %v5457 = vsub.s32 %v5454, %v5456
    %v5458 = vrot.slane %v5377, %v5457
    %vm5459 = vcmask 589312
    %v5460 = vsel %vm5459, %v5458, %v5453
    %v5461 = vadd.s32 %v50, 4294967224
    %v5462 = vlaneseq
    %v5463 = vshrl.u32 %v5462, 7
    %v5464 = vsub.s32 %v5461, %v5463
    %v5465 = vrot.slane %v5378, %v5464
    %vm5466 = vcmask 654912
    %v5467 = vsel %vm5466, %v5465, %v5460
    %v5468 = vadd.s32 %v50, 4294967216
    %v5469 = vlaneseq
    %v5470 = vshrl.u32 %v5469, 7
    %v5471 = vsub.s32 %v5468, %v5470
    %v5472 = vrot.slane %v5379, %v5471
    %vm5473 = vcmask 720512
    %v5474 = vsel %vm5473, %v5472, %v5467
    %v5475 = vadd.s32 %v50, 4294967208
    %v5476 = vlaneseq
    %v5477 = vshrl.u32 %v5476, 7
    %v5478 = vsub.s32 %v5475, %v5477
    %v5479 = vrot.slane %v5380, %v5478
    %vm5480 = vcmask 786112
    %v5481 = vsel %vm5480, %v5479, %v5474
    %v5482 = vadd.s32 %v50, 4294967200
    %v5483 = vlaneseq
    %v5484 = vshrl.u32 %v5483, 7
    %v5485 = vsub.s32 %v5482, %v5484
    %v5486 = vrot.slane %v5381, %v5485
    %vm5487 = vcmask 851712
    %v5488 = vsel %vm5487, %v5486, %v5481
    %v5489 = vadd.s32 %v50, 4294967192
    %v5490 = vlaneseq
    %v5491 = vshrl.u32 %v5490, 7
    %v5492 = vsub.s32 %v5489, %v5491
    %v5493 = vrot.slane %v5382, %v5492
    %vm5494 = vcmask 917312
    %v5495 = vsel %vm5494, %v5493, %v5488
    %v5496 = vadd.s32 %v50, 4294967184
    %v5497 = vlaneseq
    %v5498 = vshrl.u32 %v5497, 7
    %v5499 = vsub.s32 %v5496, %v5498
    %v5500 = vrot.slane %v5383, %v5499
    %vm5501 = vcmask 982912
    %v5502 = vsel %vm5501, %v5500, %v5495
    %v5503 = vadd.s32 %v50, 4294967176
    %v5504 = vlaneseq
    %v5505 = vshrl.u32 %v5504, 7
    %v5506 = vsub.s32 %v5503, %v5505
    %v5507 = vrot.slane %v5384, %v5506
    %vm5508 = vcmask 1048512
    %v5509 = vsel %vm5508, %v5507, %v5502
    %5511 = vst [vmem:[#allocation2] sm:$0x1] %v5509
    // Predicated region
    $region38: #{tpu_custom_call.1} parent=1 // pred_check
      _
    $region39: #{tpu_custom_call.1} parent=1 // pred_check_branch
      %5513 = sbr.rel (0) target = $region41
    $region40: #{tpu_custom_call.1} parent=1 // pred_region
      %s5515 = ssub.s32 16, 16
      %5516 = vsyncadd [#allocation3], %s5515
      %s5518 = sshll.u32 [#allocation2], 4
      %s5519 = int_to_ptr.vmem [resolvable:$true] %s5518
      %5521 = dma.vmem_to_hbm [thread:$0]  %s5519, 16, %s9, [#allocation3]
    $region41: #{tpu_custom_call.1} parent=1 // pred_fallthru
      _
    // Predicated region
    $region42: #{tpu_custom_call.1} parent=1 // pred_check
      _
    $region43: #{tpu_custom_call.1} parent=1 // pred_check_branch
      %5523 = sbr.rel (0) target = $region45
    $region44: #{tpu_custom_call.1} parent=1 // pred_region
      %5524 = dma.done [#allocation3], 16
    $region45: #{tpu_custom_call.1} parent=1 // pred_fallthru
      _
    %5525 = vsyncpa [#allocation3], 1

</llo_original>
